<compile_context>
chip_gen: v6e
topology: v6e:2x2x1
jax: 0.10.0
libtpu: 0.0.40
codegen_flags: <defaults>
</compile_context>

<pallas_src>
import math

import jax
import jax.numpy as jnp
from jax.experimental import pallas as pl
from jax.experimental.pallas import tpu as pltpu

# ----------------------------- config (small) -----------------------------
VOCAB = 100
MAX_POS = 16
TYPE_VOCAB = 2
HIDDEN = 32
NUM_HEADS = 4
HEAD_DIM = HIDDEN // NUM_HEADS
INTERMEDIATE = 64
NUM_LAYERS = 2
NUM_LABELS = 2
LN_EPS = 1e-12
BATCH = 2
SEQ = 8


# ------------------------- fused forward-pass kernel -----------------------
def _bert_fused_kernel(
    emb_ref, emb_ln_g_ref, emb_ln_b_ref,            # embeddings + emb LayerNorm
    q_w_ref, q_b_ref, k_w_ref, k_b_ref,              # per-layer attention weights
    v_w_ref, v_b_ref, o_w_ref, o_b_ref,              # (stacked on leading L axis)
    attn_ln_g_ref, attn_ln_b_ref,
    i_w_ref, i_b_ref, f_w_ref, f_b_ref,              # per-layer FFN weights
    ffn_ln_g_ref, ffn_ln_b_ref,
    pool_w_ref, pool_b_ref, cls_w_ref, cls_b_ref,    # pooler + classifier head
    onehot_ref,                                      # (B, NUM_LABELS) f32 one-hot labels
    loss_ref,                                        # (1, 1) f32 output
):
    f32 = jnp.float32
    bf16 = jnp.bfloat16

    def layernorm(x, g, b):
        mu = jnp.mean(x, axis=-1, keepdims=True)
        var = jnp.mean((x - mu) * (x - mu), axis=-1, keepdims=True)
        return (x - mu) * jax.lax.rsqrt(var + f32(LN_EPS)) * g + b

    def gelu_tanh(x):
        # tanh-approx GELU -> EUP slot. Small numeric drift vs HF's exact erf GELU.
        c = f32(math.sqrt(2.0 / math.pi))
        return 0.5 * x * (1.0 + jnp.tanh(c * (x + f32(0.044715) * x * x * x)))

    scale = f32(1.0 / math.sqrt(HEAD_DIM))

    # ---- embedding LayerNorm ------------------------------------------------
    x = layernorm(emb_ref[...], emb_ln_g_ref[...], emb_ln_b_ref[...])  # (B*S, H) f32

    # ---- encoder layers: fully unrolled, all activations stay in registers --
    for l in range(NUM_LAYERS):
        x_bf = x.astype(bf16)  # hoisted: one cast reused by the Q/K/V matmuls

        q = jnp.dot(x_bf, q_w_ref[l], preferred_element_type=f32) + q_b_ref[l]
        k = jnp.dot(x_bf, k_w_ref[l], preferred_element_type=f32) + k_b_ref[l]
        v = jnp.dot(x_bf, v_w_ref[l], preferred_element_type=f32) + v_b_ref[l]

        # Per-head attention, batched over B with 3-D contractions; per-head
        # contexts collected in-register and concatenated lane-dense.
        ctx_heads = []
        for h in range(NUM_HEADS):
            cols = slice(h * HEAD_DIM, (h + 1) * HEAD_DIM)
            qh = q[:, cols].reshape(BATCH, SEQ, HEAD_DIM).astype(bf16)
            kh = k[:, cols].reshape(BATCH, SEQ, HEAD_DIM).astype(bf16)
            vh = v[:, cols].reshape(BATCH, SEQ, HEAD_DIM).astype(bf16)
            s = jnp.einsum('bqd,bkd->bqk', qh, kh,
                           preferred_element_type=f32) * scale        # (B, S, S) f32
            s = s - jnp.max(s, axis=-1, keepdims=True)
            p = jnp.exp(s)
            p = p * pl.reciprocal(jnp.sum(p, axis=-1, keepdims=True), approx=True)
            ctx_h = jnp.einsum('bqk,bkd->bqd', p.astype(bf16), vh,
                               preferred_element_type=f32)            # (B, S, HD)
            ctx_heads.append(ctx_h.reshape(BATCH * SEQ, HEAD_DIM))
        ctx = jnp.concatenate(ctx_heads, axis=-1)                      # (B*S, H) f32

        attn_out = (jnp.dot(ctx.astype(bf16), o_w_ref[l],
                            preferred_element_type=f32) + o_b_ref[l])
        x = layernorm(attn_out + x, attn_ln_g_ref[l], attn_ln_b_ref[l])

        x_bf2 = x.astype(bf16)
        inter = jnp.dot(x_bf2, i_w_ref[l], preferred_element_type=f32) + i_b_ref[l]
        inter = gelu_tanh(inter)
        ffn_out = (jnp.dot(inter.astype(bf16), f_w_ref[l],
                           preferred_element_type=f32) + f_b_ref[l])
        x = layernorm(ffn_out + x, ffn_ln_g_ref[l], ffn_ln_b_ref[l])

    # ---- pooler + classifier + mean cross-entropy (vectorized over batch) ---
    cls = x.reshape(BATCH, SEQ, HIDDEN)[:, 0, :]                       # (B, H) [CLS] rows
    pooled = jnp.tanh(jnp.dot(cls.astype(bf16), pool_w_ref[...],
                              preferred_element_type=f32) + pool_b_ref[...])
    logits = (jnp.dot(pooled.astype(bf16), cls_w_ref[...],
                      preferred_element_type=f32) + cls_b_ref[...])    # (B, NUM_LABELS)
    m = jnp.max(logits, axis=-1, keepdims=True)
    lse = jnp.log(jnp.sum(jnp.exp(logits - m), axis=-1, keepdims=True)) + m
    picked = jnp.sum(onehot_ref[...] * logits, axis=-1, keepdims=True)
    loss_ref[...] = jnp.sum(lse - picked, axis=0, keepdims=True) * f32(1.0 / BATCH)


# --------------------------- parameter creation ----------------------------
def _normal(key, shape, std=0.02):
    return std * jax.random.normal(key, shape, dtype=jnp.float32)


def init_params(seed=0):
    key = jax.random.PRNGKey(seed)
    kid = iter(jax.random.split(key, 32))
    L, H, I = NUM_LAYERS, HIDDEN, INTERMEDIATE
    return {
        "word_emb": _normal(next(kid), (VOCAB, H)),
        "pos_emb": _normal(next(kid), (MAX_POS, H)),
        "type_emb": _normal(next(kid), (TYPE_VOCAB, H)),
        "emb_ln_g": jnp.ones((1, H), jnp.float32),
        "emb_ln_b": jnp.zeros((1, H), jnp.float32),
        # Per-layer weights stacked on a leading NUM_LAYERS axis; Q/K/V separate
        # (avoids non-128-aligned lane slicing of a fused QKV at this toy H).
        "q_w": _normal(next(kid), (L, H, H)),
        "q_b": jnp.zeros((L, 1, H), jnp.float32),
        "k_w": _normal(next(kid), (L, H, H)),
        "k_b": jnp.zeros((L, 1, H), jnp.float32),
        "v_w": _normal(next(kid), (L, H, H)),
        "v_b": jnp.zeros((L, 1, H), jnp.float32),
        "o_w": _normal(next(kid), (L, H, H)),
        "o_b": jnp.zeros((L, 1, H), jnp.float32),
        "attn_ln_g": jnp.ones((L, 1, H), jnp.float32),
        "attn_ln_b": jnp.zeros((L, 1, H), jnp.float32),
        "i_w": _normal(next(kid), (L, H, I)),
        "i_b": jnp.zeros((L, 1, I), jnp.float32),
        "f_w": _normal(next(kid), (L, I, H)),
        "f_b": jnp.zeros((L, 1, H), jnp.float32),
        "ffn_ln_g": jnp.ones((L, 1, H), jnp.float32),
        "ffn_ln_b": jnp.zeros((L, 1, H), jnp.float32),
        "pool_w": _normal(next(kid), (H, H)),
        "pool_b": jnp.zeros((1, H), jnp.float32),
        "cls_w": _normal(next(kid), (H, NUM_LABELS)),
        "cls_b": jnp.zeros((1, NUM_LABELS), jnp.float32),
    }


# ------------------------------ forward pass -------------------------------
def bert_forward(params, text, labels):
    """Returns the scalar cross-entropy loss, like BERT(text, label)."""
    B, S = text.shape
    H = HIDDEN

    # Embedding gathers are data-dependent glue in the wrapper; everything
    # after runs inside ONE fused Pallas kernel.  token_type_ids == 0.
    emb = (
        params["word_emb"][text]
        + params["pos_emb"][:S][None, :, :]
        + params["type_emb"][0][None, None, :]
    )
    emb2d = emb.reshape(B * S, H).astype(jnp.float32)
    onehot = jax.nn.one_hot(labels.astype(jnp.int32).reshape(B), NUM_LABELS,
                            dtype=jnp.float32)                    # (B, NUM_LABELS)

    bf16 = jnp.bfloat16  # MXU-operand dtype; master weights stay f32 outside.

    # No grid: single kernel invocation, all operands as whole-array VMEM blocks
    # (total working set << 1 MiB at this configuration).
    loss = pl.pallas_call(
        _bert_fused_kernel,
        out_shape=jax.ShapeDtypeStruct((1, 1), jnp.float32),
        compiler_params=pltpu.CompilerParams(),
    )(
        emb2d, params["emb_ln_g"], params["emb_ln_b"],
        params["q_w"].astype(bf16), params["q_b"],
        params["k_w"].astype(bf16), params["k_b"],
        params["v_w"].astype(bf16), params["v_b"],
        params["o_w"].astype(bf16), params["o_b"],
        params["attn_ln_g"], params["attn_ln_b"],
        params["i_w"].astype(bf16), params["i_b"],
        params["f_w"].astype(bf16), params["f_b"],
        params["ffn_ln_g"], params["ffn_ln_b"],
        params["pool_w"].astype(bf16), params["pool_b"],
        params["cls_w"].astype(bf16), params["cls_b"],
        onehot,
    )
    return loss[0, 0]


# ---------------------------------- main -----------------------------------
if __name__ == "__main__":
    key = jax.random.PRNGKey(0)
    k_text, k_label = jax.random.split(key)
    text = jax.random.randint(k_text, (BATCH, SEQ), 0, VOCAB, dtype=jnp.int32)
    label = jax.random.randint(k_label, (BATCH,), 0, NUM_LABELS, dtype=jnp.int32)

    params = init_params(seed=0)
    loss = jax.jit(bert_forward)(params, text, label)
    jax.block_until_ready(loss)
    assert loss.shape == () and jnp.isfinite(loss)
    print("KERNEL_OK")
</pallas_src>

<mosaic_0001>
module attributes {stable_mosaic.version = 11 : i64} {
  func.func @_bert_fused_kernel(%arg0: memref<16x32xf32, #tpu.memory_space<vmem>>, %arg1: memref<1x32xf32, #tpu.memory_space<vmem>>, %arg2: memref<1x32xf32, #tpu.memory_space<vmem>>, %arg3: memref<2x32x32xbf16, #tpu.memory_space<vmem>>, %arg4: memref<2x1x32xf32, #tpu.memory_space<vmem>>, %arg5: memref<2x32x32xbf16, #tpu.memory_space<vmem>>, %arg6: memref<2x1x32xf32, #tpu.memory_space<vmem>>, %arg7: memref<2x32x32xbf16, #tpu.memory_space<vmem>>, %arg8: memref<2x1x32xf32, #tpu.memory_space<vmem>>, %arg9: memref<2x32x32xbf16, #tpu.memory_space<vmem>>, %arg10: memref<2x1x32xf32, #tpu.memory_space<vmem>>, %arg11: memref<2x1x32xf32, #tpu.memory_space<vmem>>, %arg12: memref<2x1x32xf32, #tpu.memory_space<vmem>>, %arg13: memref<2x32x64xbf16, #tpu.memory_space<vmem>>, %arg14: memref<2x1x64xf32, #tpu.memory_space<vmem>>, %arg15: memref<2x64x32xbf16, #tpu.memory_space<vmem>>, %arg16: memref<2x1x32xf32, #tpu.memory_space<vmem>>, %arg17: memref<2x1x32xf32, #tpu.memory_space<vmem>>, %arg18: memref<2x1x32xf32, #tpu.memory_space<vmem>>, %arg19: memref<32x32xbf16, #tpu.memory_space<vmem>>, %arg20: memref<1x32xf32, #tpu.memory_space<vmem>>, %arg21: memref<32x2xbf16, #tpu.memory_space<vmem>>, %arg22: memref<1x2xf32, #tpu.memory_space<vmem>>, %arg23: memref<2x2xf32, #tpu.memory_space<vmem>>, %arg24: memref<1x1xf32, #tpu.memory_space<vmem>>) attributes {dimension_semantics = [], scalar_prefetch = 0 : i64, scratch_operands = 0 : i64, tpu.core_type = #tpu.core_type<tc>} {
    %c0 = arith.constant 0 : index
    %c0_0 = arith.constant 0 : index
    %0 = vector.load %arg0[%c0, %c0_0] : memref<16x32xf32, #tpu.memory_space<vmem>>, vector<16x32xf32>
    %c0_1 = arith.constant 0 : index
    %c0_2 = arith.constant 0 : index
    %1 = vector.load %arg1[%c0_1, %c0_2] : memref<1x32xf32, #tpu.memory_space<vmem>>, vector<1x32xf32>
    %c0_3 = arith.constant 0 : index
    %c0_4 = arith.constant 0 : index
    %2 = vector.load %arg2[%c0_3, %c0_4] : memref<1x32xf32, #tpu.memory_space<vmem>>, vector<1x32xf32>
    %cst = arith.constant dense<0.000000e+00> : vector<16xf32>
    %3 = vector.multi_reduction <add>, %0, %cst [1] : vector<16x32xf32> to vector<16xf32>
    %4 = vector.shape_cast %3 : vector<16xf32> to vector<16x1xf32>
    %cst_5 = arith.constant 3.200000e+01 : f32
    %5 = vector.broadcast %cst_5 : f32 to vector<16x1xf32>
    %6 = arith.divf %4, %5 : vector<16x1xf32>
    %7 = vector.broadcast %6 : vector<16x1xf32> to vector<16x32xf32>
    %8 = arith.subf %0, %7 : vector<16x32xf32>
    %9 = vector.broadcast %6 : vector<16x1xf32> to vector<16x32xf32>
    %10 = arith.subf %0, %9 : vector<16x32xf32>
    %11 = arith.mulf %8, %10 : vector<16x32xf32>
    %cst_6 = arith.constant dense<0.000000e+00> : vector<16xf32>
    %12 = vector.multi_reduction <add>, %11, %cst_6 [1] : vector<16x32xf32> to vector<16xf32>
    %13 = vector.shape_cast %12 : vector<16xf32> to vector<16x1xf32>
    %cst_7 = arith.constant 3.200000e+01 : f32
    %14 = vector.broadcast %cst_7 : f32 to vector<16x1xf32>
    %15 = arith.divf %13, %14 : vector<16x1xf32>
    %16 = vector.broadcast %6 : vector<16x1xf32> to vector<16x32xf32>
    %17 = arith.subf %0, %16 : vector<16x32xf32>
    %cst_8 = arith.constant 9.99999996E-13 : f32
    %18 = vector.broadcast %cst_8 : f32 to vector<16x1xf32>
    %19 = arith.addf %15, %18 : vector<16x1xf32>
    %20 = math.rsqrt %19 : vector<16x1xf32>
    %21 = vector.broadcast %20 : vector<16x1xf32> to vector<16x32xf32>
    %22 = arith.mulf %17, %21 : vector<16x32xf32>
    %23 = vector.broadcast %1 : vector<1x32xf32> to vector<16x32xf32>
    %24 = arith.mulf %22, %23 : vector<16x32xf32>
    %25 = vector.broadcast %2 : vector<1x32xf32> to vector<16x32xf32>
    %26 = arith.addf %24, %25 : vector<16x32xf32>
    %27 = arith.truncf %26 : vector<16x32xf32> to vector<16x32xbf16>
    %c0_9 = arith.constant 0 : index
    %c0_10 = arith.constant 0 : index
    %c0_11 = arith.constant 0 : index
    %28 = vector.load %arg3[%c0_9, %c0_10, %c0_11] : memref<2x32x32xbf16, #tpu.memory_space<vmem>>, vector<1x32x32xbf16>
    %29 = vector.shape_cast %28 : vector<1x32x32xbf16> to vector<32x32xbf16>
    %cst_12 = arith.constant dense<0.000000e+00> : vector<16x32xf32>
    %30 = tpu.matmul %27, %29, %cst_12 {dimension_numbers = #tpu.dot_dimension_numbers<[1], [0], [0], [1], [0, 0, 1, 1], [], []>} : vector<16x32xbf16>, vector<32x32xbf16>, vector<16x32xf32> -> vector<16x32xf32>
    %c0_13 = arith.constant 0 : index
    %c0_14 = arith.constant 0 : index
    %c0_15 = arith.constant 0 : index
    %31 = vector.load %arg4[%c0_13, %c0_14, %c0_15] : memref<2x1x32xf32, #tpu.memory_space<vmem>>, vector<1x1x32xf32>
    %32 = vector.shape_cast %31 : vector<1x1x32xf32> to vector<1x32xf32>
    %33 = vector.broadcast %32 : vector<1x32xf32> to vector<16x32xf32>
    %34 = arith.addf %30, %33 : vector<16x32xf32>
    %c0_16 = arith.constant 0 : index
    %c0_17 = arith.constant 0 : index
    %c0_18 = arith.constant 0 : index
    %35 = vector.load %arg5[%c0_16, %c0_17, %c0_18] : memref<2x32x32xbf16, #tpu.memory_space<vmem>>, vector<1x32x32xbf16>
    %36 = vector.shape_cast %35 : vector<1x32x32xbf16> to vector<32x32xbf16>
    %cst_19 = arith.constant dense<0.000000e+00> : vector<16x32xf32>
    %37 = tpu.matmul %27, %36, %cst_19 {dimension_numbers = #tpu.dot_dimension_numbers<[1], [0], [0], [1], [0, 0, 1, 1], [], []>} : vector<16x32xbf16>, vector<32x32xbf16>, vector<16x32xf32> -> vector<16x32xf32>
    %c0_20 = arith.constant 0 : index
    %c0_21 = arith.constant 0 : index
    %c0_22 = arith.constant 0 : index
    %38 = vector.load %arg6[%c0_20, %c0_21, %c0_22] : memref<2x1x32xf32, #tpu.memory_space<vmem>>, vector<1x1x32xf32>
    %39 = vector.shape_cast %38 : vector<1x1x32xf32> to vector<1x32xf32>
    %40 = vector.broadcast %39 : vector<1x32xf32> to vector<16x32xf32>
    %41 = arith.addf %37, %40 : vector<16x32xf32>
    %c0_23 = arith.constant 0 : index
    %c0_24 = arith.constant 0 : index
    %c0_25 = arith.constant 0 : index
    %42 = vector.load %arg7[%c0_23, %c0_24, %c0_25] : memref<2x32x32xbf16, #tpu.memory_space<vmem>>, vector<1x32x32xbf16>
    %43 = vector.shape_cast %42 : vector<1x32x32xbf16> to vector<32x32xbf16>
    %cst_26 = arith.constant dense<0.000000e+00> : vector<16x32xf32>
    %44 = tpu.matmul %27, %43, %cst_26 {dimension_numbers = #tpu.dot_dimension_numbers<[1], [0], [0], [1], [0, 0, 1, 1], [], []>} : vector<16x32xbf16>, vector<32x32xbf16>, vector<16x32xf32> -> vector<16x32xf32>
    %c0_27 = arith.constant 0 : index
    %c0_28 = arith.constant 0 : index
    %c0_29 = arith.constant 0 : index
    %45 = vector.load %arg8[%c0_27, %c0_28, %c0_29] : memref<2x1x32xf32, #tpu.memory_space<vmem>>, vector<1x1x32xf32>
    %46 = vector.shape_cast %45 : vector<1x1x32xf32> to vector<1x32xf32>
    %47 = vector.broadcast %46 : vector<1x32xf32> to vector<16x32xf32>
    %48 = arith.addf %44, %47 : vector<16x32xf32>
    %49 = vector.extract_strided_slice %34 {offsets = [0, 0], sizes = [16, 8], strides = [1, 1]} : vector<16x32xf32> to vector<16x8xf32>
    %50 = vector.shape_cast %49 : vector<16x8xf32> to vector<2x8x8xf32>
    %51 = arith.truncf %50 : vector<2x8x8xf32> to vector<2x8x8xbf16>
    %52 = vector.extract_strided_slice %41 {offsets = [0, 0], sizes = [16, 8], strides = [1, 1]} : vector<16x32xf32> to vector<16x8xf32>
    %53 = vector.shape_cast %52 : vector<16x8xf32> to vector<2x8x8xf32>
    %54 = arith.truncf %53 : vector<2x8x8xf32> to vector<2x8x8xbf16>
    %55 = vector.extract_strided_slice %48 {offsets = [0, 0], sizes = [16, 8], strides = [1, 1]} : vector<16x32xf32> to vector<16x8xf32>
    %56 = vector.shape_cast %55 : vector<16x8xf32> to vector<2x8x8xf32>
    %57 = arith.truncf %56 : vector<2x8x8xf32> to vector<2x8x8xbf16>
    "tpu.trace_start"() <{level = 10 : i32, message = "bqd,bkd->bqk"}> : () -> ()
    %cst_30 = arith.constant dense<0.000000e+00> : vector<2x8x8xf32>
    %58 = tpu.matmul %51, %54, %cst_30 {dimension_numbers = #tpu.dot_dimension_numbers<[2], [2], [1], [1], [0, 0, 0, 1, 1, 1], [0], [0]>} : vector<2x8x8xbf16>, vector<2x8x8xbf16>, vector<2x8x8xf32> -> vector<2x8x8xf32>
    "tpu.trace_stop"() : () -> ()
    %cst_31 = arith.constant 0.353553385 : f32
    %59 = vector.broadcast %cst_31 : f32 to vector<2x8x8xf32>
    %60 = arith.mulf %58, %59 : vector<2x8x8xf32>
    %cst_32 = arith.constant dense<0xFF800000> : vector<2x8xf32>
    %61 = vector.multi_reduction <maximumf>, %60, %cst_32 [2] : vector<2x8x8xf32> to vector<2x8xf32>
    %62 = vector.shape_cast %61 : vector<2x8xf32> to vector<2x8x1xf32>
    %63 = vector.broadcast %62 : vector<2x8x1xf32> to vector<2x8x8xf32>
    %64 = arith.subf %60, %63 : vector<2x8x8xf32>
    %65 = math.exp %64 : vector<2x8x8xf32>
    %cst_33 = arith.constant dense<0.000000e+00> : vector<2x8xf32>
    %66 = vector.multi_reduction <add>, %65, %cst_33 [2] : vector<2x8x8xf32> to vector<2x8xf32>
    %67 = vector.shape_cast %66 : vector<2x8xf32> to vector<2x8x1xf32>
    %68 = tpu.reciprocal %67 {approx = true} : vector<2x8x1xf32> -> vector<2x8x1xf32>
    %69 = vector.broadcast %68 : vector<2x8x1xf32> to vector<2x8x8xf32>
    %70 = arith.mulf %65, %69 : vector<2x8x8xf32>
    %71 = arith.truncf %70 : vector<2x8x8xf32> to vector<2x8x8xbf16>
    "tpu.trace_start"() <{level = 10 : i32, message = "bqk,bkd->bqd"}> : () -> ()
    %cst_34 = arith.constant dense<0.000000e+00> : vector<2x8x8xf32>
    %72 = tpu.matmul %71, %57, %cst_34 {dimension_numbers = #tpu.dot_dimension_numbers<[2], [1], [1], [2], [0, 0, 0, 1, 1, 2], [0], [0]>} : vector<2x8x8xbf16>, vector<2x8x8xbf16>, vector<2x8x8xf32> -> vector<2x8x8xf32>
    "tpu.trace_stop"() : () -> ()
    %73 = vector.shape_cast %72 : vector<2x8x8xf32> to vector<16x8xf32>
    %74 = vector.extract_strided_slice %34 {offsets = [0, 8], sizes = [16, 8], strides = [1, 1]} : vector<16x32xf32> to vector<16x8xf32>
    %75 = vector.shape_cast %74 : vector<16x8xf32> to vector<2x8x8xf32>
    %76 = arith.truncf %75 : vector<2x8x8xf32> to vector<2x8x8xbf16>
    %77 = vector.extract_strided_slice %41 {offsets = [0, 8], sizes = [16, 8], strides = [1, 1]} : vector<16x32xf32> to vector<16x8xf32>
    %78 = vector.shape_cast %77 : vector<16x8xf32> to vector<2x8x8xf32>
    %79 = arith.truncf %78 : vector<2x8x8xf32> to vector<2x8x8xbf16>
    %80 = vector.extract_strided_slice %48 {offsets = [0, 8], sizes = [16, 8], strides = [1, 1]} : vector<16x32xf32> to vector<16x8xf32>
    %81 = vector.shape_cast %80 : vector<16x8xf32> to vector<2x8x8xf32>
    %82 = arith.truncf %81 : vector<2x8x8xf32> to vector<2x8x8xbf16>
    "tpu.trace_start"() <{level = 10 : i32, message = "bqd,bkd->bqk"}> : () -> ()
    %cst_35 = arith.constant dense<0.000000e+00> : vector<2x8x8xf32>
    %83 = tpu.matmul %76, %79, %cst_35 {dimension_numbers = #tpu.dot_dimension_numbers<[2], [2], [1], [1], [0, 0, 0, 1, 1, 1], [0], [0]>} : vector<2x8x8xbf16>, vector<2x8x8xbf16>, vector<2x8x8xf32> -> vector<2x8x8xf32>
    "tpu.trace_stop"() : () -> ()
    %cst_36 = arith.constant 0.353553385 : f32
    %84 = vector.broadcast %cst_36 : f32 to vector<2x8x8xf32>
    %85 = arith.mulf %83, %84 : vector<2x8x8xf32>
    %cst_37 = arith.constant dense<0xFF800000> : vector<2x8xf32>
    %86 = vector.multi_reduction <maximumf>, %85, %cst_37 [2] : vector<2x8x8xf32> to vector<2x8xf32>
    %87 = vector.shape_cast %86 : vector<2x8xf32> to vector<2x8x1xf32>
    %88 = vector.broadcast %87 : vector<2x8x1xf32> to vector<2x8x8xf32>
    %89 = arith.subf %85, %88 : vector<2x8x8xf32>
    %90 = math.exp %89 : vector<2x8x8xf32>
    %cst_38 = arith.constant dense<0.000000e+00> : vector<2x8xf32>
    %91 = vector.multi_reduction <add>, %90, %cst_38 [2] : vector<2x8x8xf32> to vector<2x8xf32>
    %92 = vector.shape_cast %91 : vector<2x8xf32> to vector<2x8x1xf32>
    %93 = tpu.reciprocal %92 {approx = true} : vector<2x8x1xf32> -> vector<2x8x1xf32>
    %94 = vector.broadcast %93 : vector<2x8x1xf32> to vector<2x8x8xf32>
    %95 = arith.mulf %90, %94 : vector<2x8x8xf32>
    %96 = arith.truncf %95 : vector<2x8x8xf32> to vector<2x8x8xbf16>
    "tpu.trace_start"() <{level = 10 : i32, message = "bqk,bkd->bqd"}> : () -> ()
    %cst_39 = arith.constant dense<0.000000e+00> : vector<2x8x8xf32>
    %97 = tpu.matmul %96, %82, %cst_39 {dimension_numbers = #tpu.dot_dimension_numbers<[2], [1], [1], [2], [0, 0, 0, 1, 1, 2], [0], [0]>} : vector<2x8x8xbf16>, vector<2x8x8xbf16>, vector<2x8x8xf32> -> vector<2x8x8xf32>
    "tpu.trace_stop"() : () -> ()
    %98 = vector.shape_cast %97 : vector<2x8x8xf32> to vector<16x8xf32>
    %99 = vector.extract_strided_slice %34 {offsets = [0, 16], sizes = [16, 8], strides = [1, 1]} : vector<16x32xf32> to vector<16x8xf32>
    %100 = vector.shape_cast %99 : vector<16x8xf32> to vector<2x8x8xf32>
    %101 = arith.truncf %100 : vector<2x8x8xf32> to vector<2x8x8xbf16>
    %102 = vector.extract_strided_slice %41 {offsets = [0, 16], sizes = [16, 8], strides = [1, 1]} : vector<16x32xf32> to vector<16x8xf32>
    %103 = vector.shape_cast %102 : vector<16x8xf32> to vector<2x8x8xf32>
    %104 = arith.truncf %103 : vector<2x8x8xf32> to vector<2x8x8xbf16>
    %105 = vector.extract_strided_slice %48 {offsets = [0, 16], sizes = [16, 8], strides = [1, 1]} : vector<16x32xf32> to vector<16x8xf32>
    %106 = vector.shape_cast %105 : vector<16x8xf32> to vector<2x8x8xf32>
    %107 = arith.truncf %106 : vector<2x8x8xf32> to vector<2x8x8xbf16>
    "tpu.trace_start"() <{level = 10 : i32, message = "bqd,bkd->bqk"}> : () -> ()
    %cst_40 = arith.constant dense<0.000000e+00> : vector<2x8x8xf32>
    %108 = tpu.matmul %101, %104, %cst_40 {dimension_numbers = #tpu.dot_dimension_numbers<[2], [2], [1], [1], [0, 0, 0, 1, 1, 1], [0], [0]>} : vector<2x8x8xbf16>, vector<2x8x8xbf16>, vector<2x8x8xf32> -> vector<2x8x8xf32>
    "tpu.trace_stop"() : () -> ()
    %cst_41 = arith.constant 0.353553385 : f32
    %109 = vector.broadcast %cst_41 : f32 to vector<2x8x8xf32>
    %110 = arith.mulf %108, %109 : vector<2x8x8xf32>
    %cst_42 = arith.constant dense<0xFF800000> : vector<2x8xf32>
    %111 = vector.multi_reduction <maximumf>, %110, %cst_42 [2] : vector<2x8x8xf32> to vector<2x8xf32>
    %112 = vector.shape_cast %111 : vector<2x8xf32> to vector<2x8x1xf32>
    %113 = vector.broadcast %112 : vector<2x8x1xf32> to vector<2x8x8xf32>
    %114 = arith.subf %110, %113 : vector<2x8x8xf32>
    %115 = math.exp %114 : vector<2x8x8xf32>
    %cst_43 = arith.constant dense<0.000000e+00> : vector<2x8xf32>
    %116 = vector.multi_reduction <add>, %115, %cst_43 [2] : vector<2x8x8xf32> to vector<2x8xf32>
    %117 = vector.shape_cast %116 : vector<2x8xf32> to vector<2x8x1xf32>
    %118 = tpu.reciprocal %117 {approx = true} : vector<2x8x1xf32> -> vector<2x8x1xf32>
    %119 = vector.broadcast %118 : vector<2x8x1xf32> to vector<2x8x8xf32>
    %120 = arith.mulf %115, %119 : vector<2x8x8xf32>
    %121 = arith.truncf %120 : vector<2x8x8xf32> to vector<2x8x8xbf16>
    "tpu.trace_start"() <{level = 10 : i32, message = "bqk,bkd->bqd"}> : () -> ()
    %cst_44 = arith.constant dense<0.000000e+00> : vector<2x8x8xf32>
    %122 = tpu.matmul %121, %107, %cst_44 {dimension_numbers = #tpu.dot_dimension_numbers<[2], [1], [1], [2], [0, 0, 0, 1, 1, 2], [0], [0]>} : vector<2x8x8xbf16>, vector<2x8x8xbf16>, vector<2x8x8xf32> -> vector<2x8x8xf32>
    "tpu.trace_stop"() : () -> ()
    %123 = vector.shape_cast %122 : vector<2x8x8xf32> to vector<16x8xf32>
    %124 = vector.extract_strided_slice %34 {offsets = [0, 24], sizes = [16, 8], strides = [1, 1]} : vector<16x32xf32> to vector<16x8xf32>
    %125 = vector.shape_cast %124 : vector<16x8xf32> to vector<2x8x8xf32>
    %126 = arith.truncf %125 : vector<2x8x8xf32> to vector<2x8x8xbf16>
    %127 = vector.extract_strided_slice %41 {offsets = [0, 24], sizes = [16, 8], strides = [1, 1]} : vector<16x32xf32> to vector<16x8xf32>
    %128 = vector.shape_cast %127 : vector<16x8xf32> to vector<2x8x8xf32>
    %129 = arith.truncf %128 : vector<2x8x8xf32> to vector<2x8x8xbf16>
    %130 = vector.extract_strided_slice %48 {offsets = [0, 24], sizes = [16, 8], strides = [1, 1]} : vector<16x32xf32> to vector<16x8xf32>
    %131 = vector.shape_cast %130 : vector<16x8xf32> to vector<2x8x8xf32>
    %132 = arith.truncf %131 : vector<2x8x8xf32> to vector<2x8x8xbf16>
    "tpu.trace_start"() <{level = 10 : i32, message = "bqd,bkd->bqk"}> : () -> ()
    %cst_45 = arith.constant dense<0.000000e+00> : vector<2x8x8xf32>
    %133 = tpu.matmul %126, %129, %cst_45 {dimension_numbers = #tpu.dot_dimension_numbers<[2], [2], [1], [1], [0, 0, 0, 1, 1, 1], [0], [0]>} : vector<2x8x8xbf16>, vector<2x8x8xbf16>, vector<2x8x8xf32> -> vector<2x8x8xf32>
    "tpu.trace_stop"() : () -> ()
    %cst_46 = arith.constant 0.353553385 : f32
    %134 = vector.broadcast %cst_46 : f32 to vector<2x8x8xf32>
    %135 = arith.mulf %133, %134 : vector<2x8x8xf32>
    %cst_47 = arith.constant dense<0xFF800000> : vector<2x8xf32>
    %136 = vector.multi_reduction <maximumf>, %135, %cst_47 [2] : vector<2x8x8xf32> to vector<2x8xf32>
    %137 = vector.shape_cast %136 : vector<2x8xf32> to vector<2x8x1xf32>
    %138 = vector.broadcast %137 : vector<2x8x1xf32> to vector<2x8x8xf32>
    %139 = arith.subf %135, %138 : vector<2x8x8xf32>
    %140 = math.exp %139 : vector<2x8x8xf32>
    %cst_48 = arith.constant dense<0.000000e+00> : vector<2x8xf32>
    %141 = vector.multi_reduction <add>, %140, %cst_48 [2] : vector<2x8x8xf32> to vector<2x8xf32>
    %142 = vector.shape_cast %141 : vector<2x8xf32> to vector<2x8x1xf32>
    %143 = tpu.reciprocal %142 {approx = true} : vector<2x8x1xf32> -> vector<2x8x1xf32>
    %144 = vector.broadcast %143 : vector<2x8x1xf32> to vector<2x8x8xf32>
    %145 = arith.mulf %140, %144 : vector<2x8x8xf32>
    %146 = arith.truncf %145 : vector<2x8x8xf32> to vector<2x8x8xbf16>
    "tpu.trace_start"() <{level = 10 : i32, message = "bqk,bkd->bqd"}> : () -> ()
    %cst_49 = arith.constant dense<0.000000e+00> : vector<2x8x8xf32>
    %147 = tpu.matmul %146, %132, %cst_49 {dimension_numbers = #tpu.dot_dimension_numbers<[2], [1], [1], [2], [0, 0, 0, 1, 1, 2], [0], [0]>} : vector<2x8x8xbf16>, vector<2x8x8xbf16>, vector<2x8x8xf32> -> vector<2x8x8xf32>
    "tpu.trace_stop"() : () -> ()
    %148 = vector.shape_cast %147 : vector<2x8x8xf32> to vector<16x8xf32>
    %149 = tpu.concatenate %73, %98, %123, %148 in 1 : vector<16x8xf32>, vector<16x8xf32>, vector<16x8xf32>, vector<16x8xf32> -> vector<16x32xf32>
    %150 = arith.truncf %149 : vector<16x32xf32> to vector<16x32xbf16>
    %c0_50 = arith.constant 0 : index
    %c0_51 = arith.constant 0 : index
    %c0_52 = arith.constant 0 : index
    %151 = vector.load %arg9[%c0_50, %c0_51, %c0_52] : memref<2x32x32xbf16, #tpu.memory_space<vmem>>, vector<1x32x32xbf16>
    %152 = vector.shape_cast %151 : vector<1x32x32xbf16> to vector<32x32xbf16>
    %cst_53 = arith.constant dense<0.000000e+00> : vector<16x32xf32>
    %153 = tpu.matmul %150, %152, %cst_53 {dimension_numbers = #tpu.dot_dimension_numbers<[1], [0], [0], [1], [0, 0, 1, 1], [], []>} : vector<16x32xbf16>, vector<32x32xbf16>, vector<16x32xf32> -> vector<16x32xf32>
    %c0_54 = arith.constant 0 : index
    %c0_55 = arith.constant 0 : index
    %c0_56 = arith.constant 0 : index
    %154 = vector.load %arg10[%c0_54, %c0_55, %c0_56] : memref<2x1x32xf32, #tpu.memory_space<vmem>>, vector<1x1x32xf32>
    %155 = vector.shape_cast %154 : vector<1x1x32xf32> to vector<1x32xf32>
    %156 = vector.broadcast %155 : vector<1x32xf32> to vector<16x32xf32>
    %157 = arith.addf %153, %156 : vector<16x32xf32>
    %158 = arith.addf %157, %26 : vector<16x32xf32>
    %c0_57 = arith.constant 0 : index
    %c0_58 = arith.constant 0 : index
    %c0_59 = arith.constant 0 : index
    %159 = vector.load %arg11[%c0_57, %c0_58, %c0_59] : memref<2x1x32xf32, #tpu.memory_space<vmem>>, vector<1x1x32xf32>
    %160 = vector.shape_cast %159 : vector<1x1x32xf32> to vector<1x32xf32>
    %c0_60 = arith.constant 0 : index
    %c0_61 = arith.constant 0 : index
    %c0_62 = arith.constant 0 : index
    %161 = vector.load %arg12[%c0_60, %c0_61, %c0_62] : memref<2x1x32xf32, #tpu.memory_space<vmem>>, vector<1x1x32xf32>
    %162 = vector.shape_cast %161 : vector<1x1x32xf32> to vector<1x32xf32>
    %cst_63 = arith.constant dense<0.000000e+00> : vector<16xf32>
    %163 = vector.multi_reduction <add>, %158, %cst_63 [1] : vector<16x32xf32> to vector<16xf32>
    %164 = vector.shape_cast %163 : vector<16xf32> to vector<16x1xf32>
    %cst_64 = arith.constant 3.200000e+01 : f32
    %165 = vector.broadcast %cst_64 : f32 to vector<16x1xf32>
    %166 = arith.divf %164, %165 : vector<16x1xf32>
    %167 = vector.broadcast %166 : vector<16x1xf32> to vector<16x32xf32>
    %168 = arith.subf %158, %167 : vector<16x32xf32>
    %169 = vector.broadcast %166 : vector<16x1xf32> to vector<16x32xf32>
    %170 = arith.subf %158, %169 : vector<16x32xf32>
    %171 = arith.mulf %168, %170 : vector<16x32xf32>
    %cst_65 = arith.constant dense<0.000000e+00> : vector<16xf32>
    %172 = vector.multi_reduction <add>, %171, %cst_65 [1] : vector<16x32xf32> to vector<16xf32>
    %173 = vector.shape_cast %172 : vector<16xf32> to vector<16x1xf32>
    %cst_66 = arith.constant 3.200000e+01 : f32
    %174 = vector.broadcast %cst_66 : f32 to vector<16x1xf32>
    %175 = arith.divf %173, %174 : vector<16x1xf32>
    %176 = vector.broadcast %166 : vector<16x1xf32> to vector<16x32xf32>
    %177 = arith.subf %158, %176 : vector<16x32xf32>
    %cst_67 = arith.constant 9.99999996E-13 : f32
    %178 = vector.broadcast %cst_67 : f32 to vector<16x1xf32>
    %179 = arith.addf %175, %178 : vector<16x1xf32>
    %180 = math.rsqrt %179 : vector<16x1xf32>
    %181 = vector.broadcast %180 : vector<16x1xf32> to vector<16x32xf32>
    %182 = arith.mulf %177, %181 : vector<16x32xf32>
    %183 = vector.broadcast %160 : vector<1x32xf32> to vector<16x32xf32>
    %184 = arith.mulf %182, %183 : vector<16x32xf32>
    %185 = vector.broadcast %162 : vector<1x32xf32> to vector<16x32xf32>
    %186 = arith.addf %184, %185 : vector<16x32xf32>
    %187 = arith.truncf %186 : vector<16x32xf32> to vector<16x32xbf16>
    %c0_68 = arith.constant 0 : index
    %c0_69 = arith.constant 0 : index
    %c0_70 = arith.constant 0 : index
    %188 = vector.load %arg13[%c0_68, %c0_69, %c0_70] : memref<2x32x64xbf16, #tpu.memory_space<vmem>>, vector<1x32x64xbf16>
    %189 = vector.shape_cast %188 : vector<1x32x64xbf16> to vector<32x64xbf16>
    %cst_71 = arith.constant dense<0.000000e+00> : vector<16x64xf32>
    %190 = tpu.matmul %187, %189, %cst_71 {dimension_numbers = #tpu.dot_dimension_numbers<[1], [0], [0], [1], [0, 0, 1, 1], [], []>} : vector<16x32xbf16>, vector<32x64xbf16>, vector<16x64xf32> -> vector<16x64xf32>
    %c0_72 = arith.constant 0 : index
    %c0_73 = arith.constant 0 : index
    %c0_74 = arith.constant 0 : index
    %191 = vector.load %arg14[%c0_72, %c0_73, %c0_74] : memref<2x1x64xf32, #tpu.memory_space<vmem>>, vector<1x1x64xf32>
    %192 = vector.shape_cast %191 : vector<1x1x64xf32> to vector<1x64xf32>
    %193 = vector.broadcast %192 : vector<1x64xf32> to vector<16x64xf32>
    %194 = arith.addf %190, %193 : vector<16x64xf32>
    %cst_75 = arith.constant 5.000000e-01 : f32
    %195 = vector.broadcast %cst_75 : f32 to vector<16x64xf32>
    %196 = arith.mulf %195, %194 : vector<16x64xf32>
    %cst_76 = arith.constant 4.471500e-02 : f32
    %197 = vector.broadcast %cst_76 : f32 to vector<16x64xf32>
    %198 = arith.mulf %197, %194 : vector<16x64xf32>
    %199 = arith.mulf %198, %194 : vector<16x64xf32>
    %200 = arith.mulf %199, %194 : vector<16x64xf32>
    %201 = arith.addf %194, %200 : vector<16x64xf32>
    %cst_77 = arith.constant 0.797884583 : f32
    %202 = vector.broadcast %cst_77 : f32 to vector<16x64xf32>
    %203 = arith.mulf %202, %201 : vector<16x64xf32>
    %204 = math.tanh %203 : vector<16x64xf32>
    %cst_78 = arith.constant 1.000000e+00 : f32
    %205 = vector.broadcast %cst_78 : f32 to vector<16x64xf32>
    %206 = arith.addf %205, %204 : vector<16x64xf32>
    %207 = arith.mulf %196, %206 : vector<16x64xf32>
    %208 = arith.truncf %207 : vector<16x64xf32> to vector<16x64xbf16>
    %c0_79 = arith.constant 0 : index
    %c0_80 = arith.constant 0 : index
    %c0_81 = arith.constant 0 : index
    %209 = vector.load %arg15[%c0_79, %c0_80, %c0_81] : memref<2x64x32xbf16, #tpu.memory_space<vmem>>, vector<1x64x32xbf16>
    %210 = vector.shape_cast %209 : vector<1x64x32xbf16> to vector<64x32xbf16>
    %cst_82 = arith.constant dense<0.000000e+00> : vector<16x32xf32>
    %211 = tpu.matmul %208, %210, %cst_82 {dimension_numbers = #tpu.dot_dimension_numbers<[1], [0], [0], [1], [0, 0, 1, 1], [], []>} : vector<16x64xbf16>, vector<64x32xbf16>, vector<16x32xf32> -> vector<16x32xf32>
    %c0_83 = arith.constant 0 : index
    %c0_84 = arith.constant 0 : index
    %c0_85 = arith.constant 0 : index
    %212 = vector.load %arg16[%c0_83, %c0_84, %c0_85] : memref<2x1x32xf32, #tpu.memory_space<vmem>>, vector<1x1x32xf32>
    %213 = vector.shape_cast %212 : vector<1x1x32xf32> to vector<1x32xf32>
    %214 = vector.broadcast %213 : vector<1x32xf32> to vector<16x32xf32>
    %215 = arith.addf %211, %214 : vector<16x32xf32>
    %216 = arith.addf %215, %186 : vector<16x32xf32>
    %c0_86 = arith.constant 0 : index
    %c0_87 = arith.constant 0 : index
    %c0_88 = arith.constant 0 : index
    %217 = vector.load %arg17[%c0_86, %c0_87, %c0_88] : memref<2x1x32xf32, #tpu.memory_space<vmem>>, vector<1x1x32xf32>
    %218 = vector.shape_cast %217 : vector<1x1x32xf32> to vector<1x32xf32>
    %c0_89 = arith.constant 0 : index
    %c0_90 = arith.constant 0 : index
    %c0_91 = arith.constant 0 : index
    %219 = vector.load %arg18[%c0_89, %c0_90, %c0_91] : memref<2x1x32xf32, #tpu.memory_space<vmem>>, vector<1x1x32xf32>
    %220 = vector.shape_cast %219 : vector<1x1x32xf32> to vector<1x32xf32>
    %cst_92 = arith.constant dense<0.000000e+00> : vector<16xf32>
    %221 = vector.multi_reduction <add>, %216, %cst_92 [1] : vector<16x32xf32> to vector<16xf32>
    %222 = vector.shape_cast %221 : vector<16xf32> to vector<16x1xf32>
    %cst_93 = arith.constant 3.200000e+01 : f32
    %223 = vector.broadcast %cst_93 : f32 to vector<16x1xf32>
    %224 = arith.divf %222, %223 : vector<16x1xf32>
    %225 = vector.broadcast %224 : vector<16x1xf32> to vector<16x32xf32>
    %226 = arith.subf %216, %225 : vector<16x32xf32>
    %227 = vector.broadcast %224 : vector<16x1xf32> to vector<16x32xf32>
    %228 = arith.subf %216, %227 : vector<16x32xf32>
    %229 = arith.mulf %226, %228 : vector<16x32xf32>
    %cst_94 = arith.constant dense<0.000000e+00> : vector<16xf32>
    %230 = vector.multi_reduction <add>, %229, %cst_94 [1] : vector<16x32xf32> to vector<16xf32>
    %231 = vector.shape_cast %230 : vector<16xf32> to vector<16x1xf32>
    %cst_95 = arith.constant 3.200000e+01 : f32
    %232 = vector.broadcast %cst_95 : f32 to vector<16x1xf32>
    %233 = arith.divf %231, %232 : vector<16x1xf32>
    %234 = vector.broadcast %224 : vector<16x1xf32> to vector<16x32xf32>
    %235 = arith.subf %216, %234 : vector<16x32xf32>
    %cst_96 = arith.constant 9.99999996E-13 : f32
    %236 = vector.broadcast %cst_96 : f32 to vector<16x1xf32>
    %237 = arith.addf %233, %236 : vector<16x1xf32>
    %238 = math.rsqrt %237 : vector<16x1xf32>
    %239 = vector.broadcast %238 : vector<16x1xf32> to vector<16x32xf32>
    %240 = arith.mulf %235, %239 : vector<16x32xf32>
    %241 = vector.broadcast %218 : vector<1x32xf32> to vector<16x32xf32>
    %242 = arith.mulf %240, %241 : vector<16x32xf32>
    %243 = vector.broadcast %220 : vector<1x32xf32> to vector<16x32xf32>
    %244 = arith.addf %242, %243 : vector<16x32xf32>
    %245 = arith.truncf %244 : vector<16x32xf32> to vector<16x32xbf16>
    %c1 = arith.constant 1 : index
    %c0_97 = arith.constant 0 : index
    %c0_98 = arith.constant 0 : index
    %246 = vector.load %arg3[%c1, %c0_97, %c0_98] : memref<2x32x32xbf16, #tpu.memory_space<vmem>>, vector<1x32x32xbf16>
    %247 = vector.shape_cast %246 : vector<1x32x32xbf16> to vector<32x32xbf16>
    %cst_99 = arith.constant dense<0.000000e+00> : vector<16x32xf32>
    %248 = tpu.matmul %245, %247, %cst_99 {dimension_numbers = #tpu.dot_dimension_numbers<[1], [0], [0], [1], [0, 0, 1, 1], [], []>} : vector<16x32xbf16>, vector<32x32xbf16>, vector<16x32xf32> -> vector<16x32xf32>
    %c1_100 = arith.constant 1 : index
    %c0_101 = arith.constant 0 : index
    %c0_102 = arith.constant 0 : index
    %249 = vector.load %arg4[%c1_100, %c0_101, %c0_102] : memref<2x1x32xf32, #tpu.memory_space<vmem>>, vector<1x1x32xf32>
    %250 = vector.shape_cast %249 : vector<1x1x32xf32> to vector<1x32xf32>
    %251 = vector.broadcast %250 : vector<1x32xf32> to vector<16x32xf32>
    %252 = arith.addf %248, %251 : vector<16x32xf32>
    %c1_103 = arith.constant 1 : index
    %c0_104 = arith.constant 0 : index
    %c0_105 = arith.constant 0 : index
    %253 = vector.load %arg5[%c1_103, %c0_104, %c0_105] : memref<2x32x32xbf16, #tpu.memory_space<vmem>>, vector<1x32x32xbf16>
    %254 = vector.shape_cast %253 : vector<1x32x32xbf16> to vector<32x32xbf16>
    %cst_106 = arith.constant dense<0.000000e+00> : vector<16x32xf32>
    %255 = tpu.matmul %245, %254, %cst_106 {dimension_numbers = #tpu.dot_dimension_numbers<[1], [0], [0], [1], [0, 0, 1, 1], [], []>} : vector<16x32xbf16>, vector<32x32xbf16>, vector<16x32xf32> -> vector<16x32xf32>
    %c1_107 = arith.constant 1 : index
    %c0_108 = arith.constant 0 : index
    %c0_109 = arith.constant 0 : index
    %256 = vector.load %arg6[%c1_107, %c0_108, %c0_109] : memref<2x1x32xf32, #tpu.memory_space<vmem>>, vector<1x1x32xf32>
    %257 = vector.shape_cast %256 : vector<1x1x32xf32> to vector<1x32xf32>
    %258 = vector.broadcast %257 : vector<1x32xf32> to vector<16x32xf32>
    %259 = arith.addf %255, %258 : vector<16x32xf32>
    %c1_110 = arith.constant 1 : index
    %c0_111 = arith.constant 0 : index
    %c0_112 = arith.constant 0 : index
    %260 = vector.load %arg7[%c1_110, %c0_111, %c0_112] : memref<2x32x32xbf16, #tpu.memory_space<vmem>>, vector<1x32x32xbf16>
    %261 = vector.shape_cast %260 : vector<1x32x32xbf16> to vector<32x32xbf16>
    %cst_113 = arith.constant dense<0.000000e+00> : vector<16x32xf32>
    %262 = tpu.matmul %245, %261, %cst_113 {dimension_numbers = #tpu.dot_dimension_numbers<[1], [0], [0], [1], [0, 0, 1, 1], [], []>} : vector<16x32xbf16>, vector<32x32xbf16>, vector<16x32xf32> -> vector<16x32xf32>
    %c1_114 = arith.constant 1 : index
    %c0_115 = arith.constant 0 : index
    %c0_116 = arith.constant 0 : index
    %263 = vector.load %arg8[%c1_114, %c0_115, %c0_116] : memref<2x1x32xf32, #tpu.memory_space<vmem>>, vector<1x1x32xf32>
    %264 = vector.shape_cast %263 : vector<1x1x32xf32> to vector<1x32xf32>
    %265 = vector.broadcast %264 : vector<1x32xf32> to vector<16x32xf32>
    %266 = arith.addf %262, %265 : vector<16x32xf32>
    %267 = vector.extract_strided_slice %252 {offsets = [0, 0], sizes = [16, 8], strides = [1, 1]} : vector<16x32xf32> to vector<16x8xf32>
    %268 = vector.shape_cast %267 : vector<16x8xf32> to vector<2x8x8xf32>
    %269 = arith.truncf %268 : vector<2x8x8xf32> to vector<2x8x8xbf16>
    %270 = vector.extract_strided_slice %259 {offsets = [0, 0], sizes = [16, 8], strides = [1, 1]} : vector<16x32xf32> to vector<16x8xf32>
    %271 = vector.shape_cast %270 : vector<16x8xf32> to vector<2x8x8xf32>
    %272 = arith.truncf %271 : vector<2x8x8xf32> to vector<2x8x8xbf16>
    %273 = vector.extract_strided_slice %266 {offsets = [0, 0], sizes = [16, 8], strides = [1, 1]} : vector<16x32xf32> to vector<16x8xf32>
    %274 = vector.shape_cast %273 : vector<16x8xf32> to vector<2x8x8xf32>
    %275 = arith.truncf %274 : vector<2x8x8xf32> to vector<2x8x8xbf16>
    "tpu.trace_start"() <{level = 10 : i32, message = "bqd,bkd->bqk"}> : () -> ()
    %cst_117 = arith.constant dense<0.000000e+00> : vector<2x8x8xf32>
    %276 = tpu.matmul %269, %272, %cst_117 {dimension_numbers = #tpu.dot_dimension_numbers<[2], [2], [1], [1], [0, 0, 0, 1, 1, 1], [0], [0]>} : vector<2x8x8xbf16>, vector<2x8x8xbf16>, vector<2x8x8xf32> -> vector<2x8x8xf32>
    "tpu.trace_stop"() : () -> ()
    %cst_118 = arith.constant 0.353553385 : f32
    %277 = vector.broadcast %cst_118 : f32 to vector<2x8x8xf32>
    %278 = arith.mulf %276, %277 : vector<2x8x8xf32>
    %cst_119 = arith.constant dense<0xFF800000> : vector<2x8xf32>
    %279 = vector.multi_reduction <maximumf>, %278, %cst_119 [2] : vector<2x8x8xf32> to vector<2x8xf32>
    %280 = vector.shape_cast %279 : vector<2x8xf32> to vector<2x8x1xf32>
    %281 = vector.broadcast %280 : vector<2x8x1xf32> to vector<2x8x8xf32>
    %282 = arith.subf %278, %281 : vector<2x8x8xf32>
    %283 = math.exp %282 : vector<2x8x8xf32>
    %cst_120 = arith.constant dense<0.000000e+00> : vector<2x8xf32>
    %284 = vector.multi_reduction <add>, %283, %cst_120 [2] : vector<2x8x8xf32> to vector<2x8xf32>
    %285 = vector.shape_cast %284 : vector<2x8xf32> to vector<2x8x1xf32>
    %286 = tpu.reciprocal %285 {approx = true} : vector<2x8x1xf32> -> vector<2x8x1xf32>
    %287 = vector.broadcast %286 : vector<2x8x1xf32> to vector<2x8x8xf32>
    %288 = arith.mulf %283, %287 : vector<2x8x8xf32>
    %289 = arith.truncf %288 : vector<2x8x8xf32> to vector<2x8x8xbf16>
    "tpu.trace_start"() <{level = 10 : i32, message = "bqk,bkd->bqd"}> : () -> ()
    %cst_121 = arith.constant dense<0.000000e+00> : vector<2x8x8xf32>
    %290 = tpu.matmul %289, %275, %cst_121 {dimension_numbers = #tpu.dot_dimension_numbers<[2], [1], [1], [2], [0, 0, 0, 1, 1, 2], [0], [0]>} : vector<2x8x8xbf16>, vector<2x8x8xbf16>, vector<2x8x8xf32> -> vector<2x8x8xf32>
    "tpu.trace_stop"() : () -> ()
    %291 = vector.shape_cast %290 : vector<2x8x8xf32> to vector<16x8xf32>
    %292 = vector.extract_strided_slice %252 {offsets = [0, 8], sizes = [16, 8], strides = [1, 1]} : vector<16x32xf32> to vector<16x8xf32>
    %293 = vector.shape_cast %292 : vector<16x8xf32> to vector<2x8x8xf32>
    %294 = arith.truncf %293 : vector<2x8x8xf32> to vector<2x8x8xbf16>
    %295 = vector.extract_strided_slice %259 {offsets = [0, 8], sizes = [16, 8], strides = [1, 1]} : vector<16x32xf32> to vector<16x8xf32>
    %296 = vector.shape_cast %295 : vector<16x8xf32> to vector<2x8x8xf32>
    %297 = arith.truncf %296 : vector<2x8x8xf32> to vector<2x8x8xbf16>
    %298 = vector.extract_strided_slice %266 {offsets = [0, 8], sizes = [16, 8], strides = [1, 1]} : vector<16x32xf32> to vector<16x8xf32>
    %299 = vector.shape_cast %298 : vector<16x8xf32> to vector<2x8x8xf32>
    %300 = arith.truncf %299 : vector<2x8x8xf32> to vector<2x8x8xbf16>
    "tpu.trace_start"() <{level = 10 : i32, message = "bqd,bkd->bqk"}> : () -> ()
    %cst_122 = arith.constant dense<0.000000e+00> : vector<2x8x8xf32>
    %301 = tpu.matmul %294, %297, %cst_122 {dimension_numbers = #tpu.dot_dimension_numbers<[2], [2], [1], [1], [0, 0, 0, 1, 1, 1], [0], [0]>} : vector<2x8x8xbf16>, vector<2x8x8xbf16>, vector<2x8x8xf32> -> vector<2x8x8xf32>
    "tpu.trace_stop"() : () -> ()
    %cst_123 = arith.constant 0.353553385 : f32
    %302 = vector.broadcast %cst_123 : f32 to vector<2x8x8xf32>
    %303 = arith.mulf %301, %302 : vector<2x8x8xf32>
    %cst_124 = arith.constant dense<0xFF800000> : vector<2x8xf32>
    %304 = vector.multi_reduction <maximumf>, %303, %cst_124 [2] : vector<2x8x8xf32> to vector<2x8xf32>
    %305 = vector.shape_cast %304 : vector<2x8xf32> to vector<2x8x1xf32>
    %306 = vector.broadcast %305 : vector<2x8x1xf32> to vector<2x8x8xf32>
    %307 = arith.subf %303, %306 : vector<2x8x8xf32>
    %308 = math.exp %307 : vector<2x8x8xf32>
    %cst_125 = arith.constant dense<0.000000e+00> : vector<2x8xf32>
    %309 = vector.multi_reduction <add>, %308, %cst_125 [2] : vector<2x8x8xf32> to vector<2x8xf32>
    %310 = vector.shape_cast %309 : vector<2x8xf32> to vector<2x8x1xf32>
    %311 = tpu.reciprocal %310 {approx = true} : vector<2x8x1xf32> -> vector<2x8x1xf32>
    %312 = vector.broadcast %311 : vector<2x8x1xf32> to vector<2x8x8xf32>
    %313 = arith.mulf %308, %312 : vector<2x8x8xf32>
    %314 = arith.truncf %313 : vector<2x8x8xf32> to vector<2x8x8xbf16>
    "tpu.trace_start"() <{level = 10 : i32, message = "bqk,bkd->bqd"}> : () -> ()
    %cst_126 = arith.constant dense<0.000000e+00> : vector<2x8x8xf32>
    %315 = tpu.matmul %314, %300, %cst_126 {dimension_numbers = #tpu.dot_dimension_numbers<[2], [1], [1], [2], [0, 0, 0, 1, 1, 2], [0], [0]>} : vector<2x8x8xbf16>, vector<2x8x8xbf16>, vector<2x8x8xf32> -> vector<2x8x8xf32>
    "tpu.trace_stop"() : () -> ()
    %316 = vector.shape_cast %315 : vector<2x8x8xf32> to vector<16x8xf32>
    %317 = vector.extract_strided_slice %252 {offsets = [0, 16], sizes = [16, 8], strides = [1, 1]} : vector<16x32xf32> to vector<16x8xf32>
    %318 = vector.shape_cast %317 : vector<16x8xf32> to vector<2x8x8xf32>
    %319 = arith.truncf %318 : vector<2x8x8xf32> to vector<2x8x8xbf16>
    %320 = vector.extract_strided_slice %259 {offsets = [0, 16], sizes = [16, 8], strides = [1, 1]} : vector<16x32xf32> to vector<16x8xf32>
    %321 = vector.shape_cast %320 : vector<16x8xf32> to vector<2x8x8xf32>
    %322 = arith.truncf %321 : vector<2x8x8xf32> to vector<2x8x8xbf16>
    %323 = vector.extract_strided_slice %266 {offsets = [0, 16], sizes = [16, 8], strides = [1, 1]} : vector<16x32xf32> to vector<16x8xf32>
    %324 = vector.shape_cast %323 : vector<16x8xf32> to vector<2x8x8xf32>
    %325 = arith.truncf %324 : vector<2x8x8xf32> to vector<2x8x8xbf16>
    "tpu.trace_start"() <{level = 10 : i32, message = "bqd,bkd->bqk"}> : () -> ()
    %cst_127 = arith.constant dense<0.000000e+00> : vector<2x8x8xf32>
    %326 = tpu.matmul %319, %322, %cst_127 {dimension_numbers = #tpu.dot_dimension_numbers<[2], [2], [1], [1], [0, 0, 0, 1, 1, 1], [0], [0]>} : vector<2x8x8xbf16>, vector<2x8x8xbf16>, vector<2x8x8xf32> -> vector<2x8x8xf32>
    "tpu.trace_stop"() : () -> ()
    %cst_128 = arith.constant 0.353553385 : f32
    %327 = vector.broadcast %cst_128 : f32 to vector<2x8x8xf32>
    %328 = arith.mulf %326, %327 : vector<2x8x8xf32>
    %cst_129 = arith.constant dense<0xFF800000> : vector<2x8xf32>
    %329 = vector.multi_reduction <maximumf>, %328, %cst_129 [2] : vector<2x8x8xf32> to vector<2x8xf32>
    %330 = vector.shape_cast %329 : vector<2x8xf32> to vector<2x8x1xf32>
    %331 = vector.broadcast %330 : vector<2x8x1xf32> to vector<2x8x8xf32>
    %332 = arith.subf %328, %331 : vector<2x8x8xf32>
    %333 = math.exp %332 : vector<2x8x8xf32>
    %cst_130 = arith.constant dense<0.000000e+00> : vector<2x8xf32>
    %334 = vector.multi_reduction <add>, %333, %cst_130 [2] : vector<2x8x8xf32> to vector<2x8xf32>
    %335 = vector.shape_cast %334 : vector<2x8xf32> to vector<2x8x1xf32>
    %336 = tpu.reciprocal %335 {approx = true} : vector<2x8x1xf32> -> vector<2x8x1xf32>
    %337 = vector.broadcast %336 : vector<2x8x1xf32> to vector<2x8x8xf32>
    %338 = arith.mulf %333, %337 : vector<2x8x8xf32>
    %339 = arith.truncf %338 : vector<2x8x8xf32> to vector<2x8x8xbf16>
    "tpu.trace_start"() <{level = 10 : i32, message = "bqk,bkd->bqd"}> : () -> ()
    %cst_131 = arith.constant dense<0.000000e+00> : vector<2x8x8xf32>
    %340 = tpu.matmul %339, %325, %cst_131 {dimension_numbers = #tpu.dot_dimension_numbers<[2], [1], [1], [2], [0, 0, 0, 1, 1, 2], [0], [0]>} : vector<2x8x8xbf16>, vector<2x8x8xbf16>, vector<2x8x8xf32> -> vector<2x8x8xf32>
    "tpu.trace_stop"() : () -> ()
    %341 = vector.shape_cast %340 : vector<2x8x8xf32> to vector<16x8xf32>
    %342 = vector.extract_strided_slice %252 {offsets = [0, 24], sizes = [16, 8], strides = [1, 1]} : vector<16x32xf32> to vector<16x8xf32>
    %343 = vector.shape_cast %342 : vector<16x8xf32> to vector<2x8x8xf32>
    %344 = arith.truncf %343 : vector<2x8x8xf32> to vector<2x8x8xbf16>
    %345 = vector.extract_strided_slice %259 {offsets = [0, 24], sizes = [16, 8], strides = [1, 1]} : vector<16x32xf32> to vector<16x8xf32>
    %346 = vector.shape_cast %345 : vector<16x8xf32> to vector<2x8x8xf32>
    %347 = arith.truncf %346 : vector<2x8x8xf32> to vector<2x8x8xbf16>
    %348 = vector.extract_strided_slice %266 {offsets = [0, 24], sizes = [16, 8], strides = [1, 1]} : vector<16x32xf32> to vector<16x8xf32>
    %349 = vector.shape_cast %348 : vector<16x8xf32> to vector<2x8x8xf32>
    %350 = arith.truncf %349 : vector<2x8x8xf32> to vector<2x8x8xbf16>
    "tpu.trace_start"() <{level = 10 : i32, message = "bqd,bkd->bqk"}> : () -> ()
    %cst_132 = arith.constant dense<0.000000e+00> : vector<2x8x8xf32>
    %351 = tpu.matmul %344, %347, %cst_132 {dimension_numbers = #tpu.dot_dimension_numbers<[2], [2], [1], [1], [0, 0, 0, 1, 1, 1], [0], [0]>} : vector<2x8x8xbf16>, vector<2x8x8xbf16>, vector<2x8x8xf32> -> vector<2x8x8xf32>
    "tpu.trace_stop"() : () -> ()
    %cst_133 = arith.constant 0.353553385 : f32
    %352 = vector.broadcast %cst_133 : f32 to vector<2x8x8xf32>
    %353 = arith.mulf %351, %352 : vector<2x8x8xf32>
    %cst_134 = arith.constant dense<0xFF800000> : vector<2x8xf32>
    %354 = vector.multi_reduction <maximumf>, %353, %cst_134 [2] : vector<2x8x8xf32> to vector<2x8xf32>
    %355 = vector.shape_cast %354 : vector<2x8xf32> to vector<2x8x1xf32>
    %356 = vector.broadcast %355 : vector<2x8x1xf32> to vector<2x8x8xf32>
    %357 = arith.subf %353, %356 : vector<2x8x8xf32>
    %358 = math.exp %357 : vector<2x8x8xf32>
    %cst_135 = arith.constant dense<0.000000e+00> : vector<2x8xf32>
    %359 = vector.multi_reduction <add>, %358, %cst_135 [2] : vector<2x8x8xf32> to vector<2x8xf32>
    %360 = vector.shape_cast %359 : vector<2x8xf32> to vector<2x8x1xf32>
    %361 = tpu.reciprocal %360 {approx = true} : vector<2x8x1xf32> -> vector<2x8x1xf32>
    %362 = vector.broadcast %361 : vector<2x8x1xf32> to vector<2x8x8xf32>
    %363 = arith.mulf %358, %362 : vector<2x8x8xf32>
    %364 = arith.truncf %363 : vector<2x8x8xf32> to vector<2x8x8xbf16>
    "tpu.trace_start"() <{level = 10 : i32, message = "bqk,bkd->bqd"}> : () -> ()
    %cst_136 = arith.constant dense<0.000000e+00> : vector<2x8x8xf32>
    %365 = tpu.matmul %364, %350, %cst_136 {dimension_numbers = #tpu.dot_dimension_numbers<[2], [1], [1], [2], [0, 0, 0, 1, 1, 2], [0], [0]>} : vector<2x8x8xbf16>, vector<2x8x8xbf16>, vector<2x8x8xf32> -> vector<2x8x8xf32>
    "tpu.trace_stop"() : () -> ()
    %366 = vector.shape_cast %365 : vector<2x8x8xf32> to vector<16x8xf32>
    %367 = tpu.concatenate %291, %316, %341, %366 in 1 : vector<16x8xf32>, vector<16x8xf32>, vector<16x8xf32>, vector<16x8xf32> -> vector<16x32xf32>
    %368 = arith.truncf %367 : vector<16x32xf32> to vector<16x32xbf16>
    %c1_137 = arith.constant 1 : index
    %c0_138 = arith.constant 0 : index
    %c0_139 = arith.constant 0 : index
    %369 = vector.load %arg9[%c1_137, %c0_138, %c0_139] : memref<2x32x32xbf16, #tpu.memory_space<vmem>>, vector<1x32x32xbf16>
    %370 = vector.shape_cast %369 : vector<1x32x32xbf16> to vector<32x32xbf16>
    %cst_140 = arith.constant dense<0.000000e+00> : vector<16x32xf32>
    %371 = tpu.matmul %368, %370, %cst_140 {dimension_numbers = #tpu.dot_dimension_numbers<[1], [0], [0], [1], [0, 0, 1, 1], [], []>} : vector<16x32xbf16>, vector<32x32xbf16>, vector<16x32xf32> -> vector<16x32xf32>
    %c1_141 = arith.constant 1 : index
    %c0_142 = arith.constant 0 : index
    %c0_143 = arith.constant 0 : index
    %372 = vector.load %arg10[%c1_141, %c0_142, %c0_143] : memref<2x1x32xf32, #tpu.memory_space<vmem>>, vector<1x1x32xf32>
    %373 = vector.shape_cast %372 : vector<1x1x32xf32> to vector<1x32xf32>
    %374 = vector.broadcast %373 : vector<1x32xf32> to vector<16x32xf32>
    %375 = arith.addf %371, %374 : vector<16x32xf32>
    %376 = arith.addf %375, %244 : vector<16x32xf32>
    %c1_144 = arith.constant 1 : index
    %c0_145 = arith.constant 0 : index
    %c0_146 = arith.constant 0 : index
    %377 = vector.load %arg11[%c1_144, %c0_145, %c0_146] : memref<2x1x32xf32, #tpu.memory_space<vmem>>, vector<1x1x32xf32>
    %378 = vector.shape_cast %377 : vector<1x1x32xf32> to vector<1x32xf32>
    %c1_147 = arith.constant 1 : index
    %c0_148 = arith.constant 0 : index
    %c0_149 = arith.constant 0 : index
    %379 = vector.load %arg12[%c1_147, %c0_148, %c0_149] : memref<2x1x32xf32, #tpu.memory_space<vmem>>, vector<1x1x32xf32>
    %380 = vector.shape_cast %379 : vector<1x1x32xf32> to vector<1x32xf32>
    %cst_150 = arith.constant dense<0.000000e+00> : vector<16xf32>
    %381 = vector.multi_reduction <add>, %376, %cst_150 [1] : vector<16x32xf32> to vector<16xf32>
    %382 = vector.shape_cast %381 : vector<16xf32> to vector<16x1xf32>
    %cst_151 = arith.constant 3.200000e+01 : f32
    %383 = vector.broadcast %cst_151 : f32 to vector<16x1xf32>
    %384 = arith.divf %382, %383 : vector<16x1xf32>
    %385 = vector.broadcast %384 : vector<16x1xf32> to vector<16x32xf32>
    %386 = arith.subf %376, %385 : vector<16x32xf32>
    %387 = vector.broadcast %384 : vector<16x1xf32> to vector<16x32xf32>
    %388 = arith.subf %376, %387 : vector<16x32xf32>
    %389 = arith.mulf %386, %388 : vector<16x32xf32>
    %cst_152 = arith.constant dense<0.000000e+00> : vector<16xf32>
    %390 = vector.multi_reduction <add>, %389, %cst_152 [1] : vector<16x32xf32> to vector<16xf32>
    %391 = vector.shape_cast %390 : vector<16xf32> to vector<16x1xf32>
    %cst_153 = arith.constant 3.200000e+01 : f32
    %392 = vector.broadcast %cst_153 : f32 to vector<16x1xf32>
    %393 = arith.divf %391, %392 : vector<16x1xf32>
    %394 = vector.broadcast %384 : vector<16x1xf32> to vector<16x32xf32>
    %395 = arith.subf %376, %394 : vector<16x32xf32>
    %cst_154 = arith.constant 9.99999996E-13 : f32
    %396 = vector.broadcast %cst_154 : f32 to vector<16x1xf32>
    %397 = arith.addf %393, %396 : vector<16x1xf32>
    %398 = math.rsqrt %397 : vector<16x1xf32>
    %399 = vector.broadcast %398 : vector<16x1xf32> to vector<16x32xf32>
    %400 = arith.mulf %395, %399 : vector<16x32xf32>
    %401 = vector.broadcast %378 : vector<1x32xf32> to vector<16x32xf32>
    %402 = arith.mulf %400, %401 : vector<16x32xf32>
    %403 = vector.broadcast %380 : vector<1x32xf32> to vector<16x32xf32>
    %404 = arith.addf %402, %403 : vector<16x32xf32>
    %405 = arith.truncf %404 : vector<16x32xf32> to vector<16x32xbf16>
    %c1_155 = arith.constant 1 : index
    %c0_156 = arith.constant 0 : index
    %c0_157 = arith.constant 0 : index
    %406 = vector.load %arg13[%c1_155, %c0_156, %c0_157] : memref<2x32x64xbf16, #tpu.memory_space<vmem>>, vector<1x32x64xbf16>
    %407 = vector.shape_cast %406 : vector<1x32x64xbf16> to vector<32x64xbf16>
    %cst_158 = arith.constant dense<0.000000e+00> : vector<16x64xf32>
    %408 = tpu.matmul %405, %407, %cst_158 {dimension_numbers = #tpu.dot_dimension_numbers<[1], [0], [0], [1], [0, 0, 1, 1], [], []>} : vector<16x32xbf16>, vector<32x64xbf16>, vector<16x64xf32> -> vector<16x64xf32>
    %c1_159 = arith.constant 1 : index
    %c0_160 = arith.constant 0 : index
    %c0_161 = arith.constant 0 : index
    %409 = vector.load %arg14[%c1_159, %c0_160, %c0_161] : memref<2x1x64xf32, #tpu.memory_space<vmem>>, vector<1x1x64xf32>
    %410 = vector.shape_cast %409 : vector<1x1x64xf32> to vector<1x64xf32>
    %411 = vector.broadcast %410 : vector<1x64xf32> to vector<16x64xf32>
    %412 = arith.addf %408, %411 : vector<16x64xf32>
    %cst_162 = arith.constant 5.000000e-01 : f32
    %413 = vector.broadcast %cst_162 : f32 to vector<16x64xf32>
    %414 = arith.mulf %413, %412 : vector<16x64xf32>
    %cst_163 = arith.constant 4.471500e-02 : f32
    %415 = vector.broadcast %cst_163 : f32 to vector<16x64xf32>
    %416 = arith.mulf %415, %412 : vector<16x64xf32>
    %417 = arith.mulf %416, %412 : vector<16x64xf32>
    %418 = arith.mulf %417, %412 : vector<16x64xf32>
    %419 = arith.addf %412, %418 : vector<16x64xf32>
    %cst_164 = arith.constant 0.797884583 : f32
    %420 = vector.broadcast %cst_164 : f32 to vector<16x64xf32>
    %421 = arith.mulf %420, %419 : vector<16x64xf32>
    %422 = math.tanh %421 : vector<16x64xf32>
    %cst_165 = arith.constant 1.000000e+00 : f32
    %423 = vector.broadcast %cst_165 : f32 to vector<16x64xf32>
    %424 = arith.addf %423, %422 : vector<16x64xf32>
    %425 = arith.mulf %414, %424 : vector<16x64xf32>
    %426 = arith.truncf %425 : vector<16x64xf32> to vector<16x64xbf16>
    %c1_166 = arith.constant 1 : index
    %c0_167 = arith.constant 0 : index
    %c0_168 = arith.constant 0 : index
    %427 = vector.load %arg15[%c1_166, %c0_167, %c0_168] : memref<2x64x32xbf16, #tpu.memory_space<vmem>>, vector<1x64x32xbf16>
    %428 = vector.shape_cast %427 : vector<1x64x32xbf16> to vector<64x32xbf16>
    %cst_169 = arith.constant dense<0.000000e+00> : vector<16x32xf32>
    %429 = tpu.matmul %426, %428, %cst_169 {dimension_numbers = #tpu.dot_dimension_numbers<[1], [0], [0], [1], [0, 0, 1, 1], [], []>} : vector<16x64xbf16>, vector<64x32xbf16>, vector<16x32xf32> -> vector<16x32xf32>
    %c1_170 = arith.constant 1 : index
    %c0_171 = arith.constant 0 : index
    %c0_172 = arith.constant 0 : index
    %430 = vector.load %arg16[%c1_170, %c0_171, %c0_172] : memref<2x1x32xf32, #tpu.memory_space<vmem>>, vector<1x1x32xf32>
    %431 = vector.shape_cast %430 : vector<1x1x32xf32> to vector<1x32xf32>
    %432 = vector.broadcast %431 : vector<1x32xf32> to vector<16x32xf32>
    %433 = arith.addf %429, %432 : vector<16x32xf32>
    %434 = arith.addf %433, %404 : vector<16x32xf32>
    %c1_173 = arith.constant 1 : index
    %c0_174 = arith.constant 0 : index
    %c0_175 = arith.constant 0 : index
    %435 = vector.load %arg17[%c1_173, %c0_174, %c0_175] : memref<2x1x32xf32, #tpu.memory_space<vmem>>, vector<1x1x32xf32>
    %436 = vector.shape_cast %435 : vector<1x1x32xf32> to vector<1x32xf32>
    %c1_176 = arith.constant 1 : index
    %c0_177 = arith.constant 0 : index
    %c0_178 = arith.constant 0 : index
    %437 = vector.load %arg18[%c1_176, %c0_177, %c0_178] : memref<2x1x32xf32, #tpu.memory_space<vmem>>, vector<1x1x32xf32>
    %438 = vector.shape_cast %437 : vector<1x1x32xf32> to vector<1x32xf32>
    %cst_179 = arith.constant dense<0.000000e+00> : vector<16xf32>
    %439 = vector.multi_reduction <add>, %434, %cst_179 [1] : vector<16x32xf32> to vector<16xf32>
    %440 = vector.shape_cast %439 : vector<16xf32> to vector<16x1xf32>
    %cst_180 = arith.constant 3.200000e+01 : f32
    %441 = vector.broadcast %cst_180 : f32 to vector<16x1xf32>
    %442 = arith.divf %440, %441 : vector<16x1xf32>
    %443 = vector.broadcast %442 : vector<16x1xf32> to vector<16x32xf32>
    %444 = arith.subf %434, %443 : vector<16x32xf32>
    %445 = vector.broadcast %442 : vector<16x1xf32> to vector<16x32xf32>
    %446 = arith.subf %434, %445 : vector<16x32xf32>
    %447 = arith.mulf %444, %446 : vector<16x32xf32>
    %cst_181 = arith.constant dense<0.000000e+00> : vector<16xf32>
    %448 = vector.multi_reduction <add>, %447, %cst_181 [1] : vector<16x32xf32> to vector<16xf32>
    %449 = vector.shape_cast %448 : vector<16xf32> to vector<16x1xf32>
    %cst_182 = arith.constant 3.200000e+01 : f32
    %450 = vector.broadcast %cst_182 : f32 to vector<16x1xf32>
    %451 = arith.divf %449, %450 : vector<16x1xf32>
    %452 = vector.broadcast %442 : vector<16x1xf32> to vector<16x32xf32>
    %453 = arith.subf %434, %452 : vector<16x32xf32>
    %cst_183 = arith.constant 9.99999996E-13 : f32
    %454 = vector.broadcast %cst_183 : f32 to vector<16x1xf32>
    %455 = arith.addf %451, %454 : vector<16x1xf32>
    %456 = math.rsqrt %455 : vector<16x1xf32>
    %457 = vector.broadcast %456 : vector<16x1xf32> to vector<16x32xf32>
    %458 = arith.mulf %453, %457 : vector<16x32xf32>
    %459 = vector.broadcast %436 : vector<1x32xf32> to vector<16x32xf32>
    %460 = arith.mulf %458, %459 : vector<16x32xf32>
    %461 = vector.broadcast %438 : vector<1x32xf32> to vector<16x32xf32>
    %462 = arith.addf %460, %461 : vector<16x32xf32>
    %463 = vector.shape_cast %462 : vector<16x32xf32> to vector<2x8x32xf32>
    %464 = vector.extract_strided_slice %463 {offsets = [0, 0, 0], sizes = [2, 1, 32], strides = [1, 1, 1]} : vector<2x8x32xf32> to vector<2x1x32xf32>
    %465 = vector.shape_cast %464 : vector<2x1x32xf32> to vector<2x32xf32>
    %466 = arith.truncf %465 : vector<2x32xf32> to vector<2x32xbf16>
    %c0_184 = arith.constant 0 : index
    %c0_185 = arith.constant 0 : index
    %467 = vector.load %arg19[%c0_184, %c0_185] : memref<32x32xbf16, #tpu.memory_space<vmem>>, vector<32x32xbf16>
    %cst_186 = arith.constant dense<0.000000e+00> : vector<2x32xf32>
    %468 = tpu.matmul %466, %467, %cst_186 {dimension_numbers = #tpu.dot_dimension_numbers<[1], [0], [0], [1], [0, 0, 1, 1], [], []>} : vector<2x32xbf16>, vector<32x32xbf16>, vector<2x32xf32> -> vector<2x32xf32>
    %c0_187 = arith.constant 0 : index
    %c0_188 = arith.constant 0 : index
    %469 = vector.load %arg20[%c0_187, %c0_188] : memref<1x32xf32, #tpu.memory_space<vmem>>, vector<1x32xf32>
    %470 = vector.broadcast %469 : vector<1x32xf32> to vector<2x32xf32>
    %471 = arith.addf %468, %470 : vector<2x32xf32>
    %472 = math.tanh %471 : vector<2x32xf32>
    %473 = arith.truncf %472 : vector<2x32xf32> to vector<2x32xbf16>
    %c0_189 = arith.constant 0 : index
    %c0_190 = arith.constant 0 : index
    %474 = vector.load %arg21[%c0_189, %c0_190] : memref<32x2xbf16, #tpu.memory_space<vmem>>, vector<32x2xbf16>
    %cst_191 = arith.constant dense<0.000000e+00> : vector<2x2xf32>
    %475 = tpu.matmul %473, %474, %cst_191 {dimension_numbers = #tpu.dot_dimension_numbers<[1], [0], [0], [1], [0, 0, 1, 1], [], []>} : vector<2x32xbf16>, vector<32x2xbf16>, vector<2x2xf32> -> vector<2x2xf32>
    %c0_192 = arith.constant 0 : index
    %c0_193 = arith.constant 0 : index
    %476 = vector.load %arg22[%c0_192, %c0_193] : memref<1x2xf32, #tpu.memory_space<vmem>>, vector<1x2xf32>
    %477 = vector.broadcast %476 : vector<1x2xf32> to vector<2x2xf32>
    %478 = arith.addf %475, %477 : vector<2x2xf32>
    %cst_194 = arith.constant dense<0xFF800000> : vector<2xf32>
    %479 = vector.multi_reduction <maximumf>, %478, %cst_194 [1] : vector<2x2xf32> to vector<2xf32>
    %480 = vector.shape_cast %479 : vector<2xf32> to vector<2x1xf32>
    %481 = vector.broadcast %480 : vector<2x1xf32> to vector<2x2xf32>
    %482 = arith.subf %478, %481 : vector<2x2xf32>
    %483 = math.exp %482 : vector<2x2xf32>
    %cst_195 = arith.constant dense<0.000000e+00> : vector<2xf32>
    %484 = vector.multi_reduction <add>, %483, %cst_195 [1] : vector<2x2xf32> to vector<2xf32>
    %485 = vector.shape_cast %484 : vector<2xf32> to vector<2x1xf32>
    %486 = math.log %485 : vector<2x1xf32>
    %487 = arith.addf %486, %480 : vector<2x1xf32>
    %c0_196 = arith.constant 0 : index
    %c0_197 = arith.constant 0 : index
    %488 = vector.load %arg23[%c0_196, %c0_197] : memref<2x2xf32, #tpu.memory_space<vmem>>, vector<2x2xf32>
    %489 = arith.mulf %488, %478 : vector<2x2xf32>
    %cst_198 = arith.constant dense<0.000000e+00> : vector<2xf32>
    %490 = vector.multi_reduction <add>, %489, %cst_198 [1] : vector<2x2xf32> to vector<2xf32>
    %491 = vector.shape_cast %490 : vector<2xf32> to vector<2x1xf32>
    %492 = arith.subf %487, %491 : vector<2x1xf32>
    %cst_199 = arith.constant dense<0.000000e+00> : vector<1xf32>
    %493 = vector.multi_reduction <add>, %492, %cst_199 [0] : vector<2x1xf32> to vector<1xf32>
    %494 = vector.shape_cast %493 : vector<1xf32> to vector<1x1xf32>
    %cst_200 = arith.constant 5.000000e-01 : f32
    %495 = vector.broadcast %cst_200 : f32 to vector<1x1xf32>
    %496 = arith.mulf %494, %495 : vector<1x1xf32>
    %c0_201 = arith.constant 0 : index
    %c0_202 = arith.constant 0 : index
    %497 = vector.load %arg24[%c0_201, %c0_202] : memref<1x1xf32, #tpu.memory_space<vmem>>, vector<1x1xf32>
    tpu.vector_store %arg24[%c0_201, %c0_202], %496 {strides = array<i32>} : memref<1x1xf32, #tpu.memory_space<vmem>>, vector<1x1xf32>,
    return
  }
}

</mosaic_0001>

<llo_original>
// kernel: bert_forward.1
$region0: #{bert_forward.1}
  #allocation0 [shape = 'u32[]', space=smem, size = 0x4, offset = 0x4, fixed_abs, tag = 'smem constant byte address 0x4 - core index']
  #allocation1 [shape = 'u32[144,128]{1,0:T(1,128)}', space=vmem, size = 0x12000, scoped, tag = 'internal scratch']
  %s0 = inlined_call_operand.vmem [shape: f32[16,32], index: 0, kind: input, shape index: {}]
  %s1 = inlined_call_operand.vmem [shape: f32[1,32], index: 1, kind: input, shape index: {}]
  %s2 = inlined_call_operand.vmem [shape: f32[1,32], index: 2, kind: input, shape index: {}]
  %s3 = inlined_call_operand.vmem [shape: bf16[2,32,32], index: 3, kind: input, shape index: {}]
  %s4 = inlined_call_operand.vmem [shape: f32[2,1,32], index: 4, kind: input, shape index: {}]
  %s5 = inlined_call_operand.vmem [shape: bf16[2,32,32], index: 5, kind: input, shape index: {}]
  %s6 = inlined_call_operand.vmem [shape: f32[2,1,32], index: 6, kind: input, shape index: {}]
  %s7 = inlined_call_operand.vmem [shape: bf16[2,32,32], index: 7, kind: input, shape index: {}]
  %s8 = inlined_call_operand.vmem [shape: f32[2,1,32], index: 8, kind: input, shape index: {}]
  %s9 = inlined_call_operand.vmem [shape: bf16[2,32,32], index: 9, kind: input, shape index: {}]
  %s10 = inlined_call_operand.vmem [shape: f32[2,1,32], index: 10, kind: input, shape index: {}]
  %s11 = inlined_call_operand.vmem [shape: f32[2,1,32], index: 11, kind: input, shape index: {}]
  %s12 = inlined_call_operand.vmem [shape: f32[2,1,32], index: 12, kind: input, shape index: {}]
  %s13 = inlined_call_operand.vmem [shape: bf16[2,32,64], index: 13, kind: input, shape index: {}]
  %s14 = inlined_call_operand.vmem [shape: f32[2,1,64], index: 14, kind: input, shape index: {}]
  %s15 = inlined_call_operand.vmem [shape: bf16[2,64,32], index: 15, kind: input, shape index: {}]
  %s16 = inlined_call_operand.vmem [shape: f32[2,1,32], index: 16, kind: input, shape index: {}]
  %s17 = inlined_call_operand.vmem [shape: f32[2,1,32], index: 17, kind: input, shape index: {}]
  %s18 = inlined_call_operand.vmem [shape: f32[2,1,32], index: 18, kind: input, shape index: {}]
  %s19 = inlined_call_operand.vmem [shape: bf16[32,32], index: 19, kind: input, shape index: {}]
  %s20 = inlined_call_operand.vmem [shape: f32[1,32], index: 20, kind: input, shape index: {}]
  %s21 = inlined_call_operand.vmem [shape: bf16[32,2], index: 21, kind: input, shape index: {}]
  %s22 = inlined_call_operand.vmem [shape: f32[1,2], index: 22, kind: input, shape index: {}]
  %s23 = inlined_call_operand.vmem [shape: f32[2,2], index: 23, kind: input, shape index: {}]
  %s24 = inlined_call_operand.hbm [shape: f32[1,1], index: 24, kind: output, shape index: {}]
  %s25 = sld [smem:[#allocation0]]
  $region106: #{bert_forward.1} parent=0
    _
  %s27 = ssub.s32 1, %s25
  %s28 = scalar_select 0, %s27, %s25
  $region1: #{bert_forward.1} parent=0
    #allocation2 [shape = 'u8[512]{0}', space=vmem, size = 0x400, scoped, tag = 'output window, operand 0, single buffered']
    #allocation3 [shape = 's32[1]{0}', space=sflag, size = 0x4, scoped, tag = 'scoped memory for bert_forward.1']
    %29 = vsyncpa [#allocation3], 0
    // Predicated region
    $region2: #{bert_forward.1} parent=1 // pred_check
      _
    $region3: #{bert_forward.1} parent=1 // pred_check_branch
      %31 = sbr.rel (0) target = $region5
    $region4: #{bert_forward.1} parent=1 // pred_region
      _
    $region5: #{bert_forward.1} parent=1 // pred_fallthru
      _
    // Predicated region
    $region6: #{bert_forward.1} parent=1 // pred_check
      _
    $region7: #{bert_forward.1} parent=1 // pred_check_branch
      %33 = sbr.rel (0) target = $region9
    $region8: #{bert_forward.1} parent=1 // pred_region
      _
    $region9: #{bert_forward.1} parent=1 // pred_fallthru
      _
    // Predicated region
    $region10: #{bert_forward.1} parent=1 // pred_check
      _
    $region11: #{bert_forward.1} parent=1 // pred_check_branch
      %35 = sbr.rel (0) target = $region13
    $region12: #{bert_forward.1} parent=1 // pred_region
      _
    $region13: #{bert_forward.1} parent=1 // pred_fallthru
      _
    // Predicated region
    $region14: #{bert_forward.1} parent=1 // pred_check
      _
    $region15: #{bert_forward.1} parent=1 // pred_check_branch
      %37 = sbr.rel (0) target = $region17
    $region16: #{bert_forward.1} parent=1 // pred_region
      _
    $region17: #{bert_forward.1} parent=1 // pred_fallthru
      _
    // Predicated region
    $region18: #{bert_forward.1} parent=1 // pred_check
      _
    $region19: #{bert_forward.1} parent=1 // pred_check_branch
      %39 = sbr.rel (0) target = $region21
    $region20: #{bert_forward.1} parent=1 // pred_region
      _
    $region21: #{bert_forward.1} parent=1 // pred_fallthru
      _
    // Predicated region
    $region22: #{bert_forward.1} parent=1 // pred_check
      _
    $region23: #{bert_forward.1} parent=1 // pred_check_branch
      %41 = sbr.rel (0) target = $region25
    $region24: #{bert_forward.1} parent=1 // pred_region
      _
    $region25: #{bert_forward.1} parent=1 // pred_fallthru
      _
    // Predicated region
    $region26: #{bert_forward.1} parent=1 // pred_check
      _
    $region27: #{bert_forward.1} parent=1 // pred_check_branch
      %43 = sbr.rel (0) target = $region29
    $region28: #{bert_forward.1} parent=1 // pred_region
      _
    $region29: #{bert_forward.1} parent=1 // pred_fallthru
      _
    // Predicated region
    $region30: #{bert_forward.1} parent=1 // pred_check
      _
    $region31: #{bert_forward.1} parent=1 // pred_check_branch
      %45 = sbr.rel (0) target = $region33
    $region32: #{bert_forward.1} parent=1 // pred_region
      _
    $region33: #{bert_forward.1} parent=1 // pred_fallthru
      _
    // Predicated region
    $region34: #{bert_forward.1} parent=1 // pred_check
      _
    $region35: #{bert_forward.1} parent=1 // pred_check_branch
      %47 = sbr.rel (0) target = $region37
    $region36: #{bert_forward.1} parent=1 // pred_region
      _
    $region37: #{bert_forward.1} parent=1 // pred_fallthru
      _
    // Predicated region
    $region38: #{bert_forward.1} parent=1 // pred_check
      _
    $region39: #{bert_forward.1} parent=1 // pred_check_branch
      %49 = sbr.rel (0) target = $region41
    $region40: #{bert_forward.1} parent=1 // pred_region
      _
    $region41: #{bert_forward.1} parent=1 // pred_fallthru
      _
    // Predicated region
    $region42: #{bert_forward.1} parent=1 // pred_check
      _
    $region43: #{bert_forward.1} parent=1 // pred_check_branch
      %51 = sbr.rel (0) target = $region45
    $region44: #{bert_forward.1} parent=1 // pred_region
      _
    $region45: #{bert_forward.1} parent=1 // pred_fallthru
      _
    // Predicated region
    $region46: #{bert_forward.1} parent=1 // pred_check
      _
    $region47: #{bert_forward.1} parent=1 // pred_check_branch
      %53 = sbr.rel (0) target = $region49
    $region48: #{bert_forward.1} parent=1 // pred_region
      _
    $region49: #{bert_forward.1} parent=1 // pred_fallthru
      _
    // Predicated region
    $region50: #{bert_forward.1} parent=1 // pred_check
      _
    $region51: #{bert_forward.1} parent=1 // pred_check_branch
      %55 = sbr.rel (0) target = $region53
    $region52: #{bert_forward.1} parent=1 // pred_region
      _
    $region53: #{bert_forward.1} parent=1 // pred_fallthru
      _
    // Predicated region
    $region54: #{bert_forward.1} parent=1 // pred_check
      _
    $region55: #{bert_forward.1} parent=1 // pred_check_branch
      %57 = sbr.rel (0) target = $region57
    $region56: #{bert_forward.1} parent=1 // pred_region
      _
    $region57: #{bert_forward.1} parent=1 // pred_fallthru
      _
    // Predicated region
    $region58: #{bert_forward.1} parent=1 // pred_check
      _
    $region59: #{bert_forward.1} parent=1 // pred_check_branch
      %59 = sbr.rel (0) target = $region61
    $region60: #{bert_forward.1} parent=1 // pred_region
      _
    $region61: #{bert_forward.1} parent=1 // pred_fallthru
      _
    // Predicated region
    $region62: #{bert_forward.1} parent=1 // pred_check
      _
    $region63: #{bert_forward.1} parent=1 // pred_check_branch
      %61 = sbr.rel (0) target = $region65
    $region64: #{bert_forward.1} parent=1 // pred_region
      _
    $region65: #{bert_forward.1} parent=1 // pred_fallthru
      _
    // Predicated region
    $region66: #{bert_forward.1} parent=1 // pred_check
      _
    $region67: #{bert_forward.1} parent=1 // pred_check_branch
      %63 = sbr.rel (0) target = $region69
    $region68: #{bert_forward.1} parent=1 // pred_region
      _
    $region69: #{bert_forward.1} parent=1 // pred_fallthru
      _
    // Predicated region
    $region70: #{bert_forward.1} parent=1 // pred_check
      _
    $region71: #{bert_forward.1} parent=1 // pred_check_branch
      %65 = sbr.rel (0) target = $region73
    $region72: #{bert_forward.1} parent=1 // pred_region
      _
    $region73: #{bert_forward.1} parent=1 // pred_fallthru
      _
    // Predicated region
    $region74: #{bert_forward.1} parent=1 // pred_check
      _
    $region75: #{bert_forward.1} parent=1 // pred_check_branch
      %67 = sbr.rel (0) target = $region77
    $region76: #{bert_forward.1} parent=1 // pred_region
      _
    $region77: #{bert_forward.1} parent=1 // pred_fallthru
      _
    // Predicated region
    $region78: #{bert_forward.1} parent=1 // pred_check
      _
    $region79: #{bert_forward.1} parent=1 // pred_check_branch
      %69 = sbr.rel (0) target = $region81
    $region80: #{bert_forward.1} parent=1 // pred_region
      _
    $region81: #{bert_forward.1} parent=1 // pred_fallthru
      _
    // Predicated region
    $region82: #{bert_forward.1} parent=1 // pred_check
      _
    $region83: #{bert_forward.1} parent=1 // pred_check_branch
      %71 = sbr.rel (0) target = $region85
    $region84: #{bert_forward.1} parent=1 // pred_region
      _
    $region85: #{bert_forward.1} parent=1 // pred_fallthru
      _
    // Predicated region
    $region86: #{bert_forward.1} parent=1 // pred_check
      _
    $region87: #{bert_forward.1} parent=1 // pred_check_branch
      %73 = sbr.rel (0) target = $region89
    $region88: #{bert_forward.1} parent=1 // pred_region
      _
    $region89: #{bert_forward.1} parent=1 // pred_fallthru
      _
    // Predicated region
    $region90: #{bert_forward.1} parent=1 // pred_check
      _
    $region91: #{bert_forward.1} parent=1 // pred_check_branch
      %75 = sbr.rel (0) target = $region93
    $region92: #{bert_forward.1} parent=1 // pred_region
      _
    $region93: #{bert_forward.1} parent=1 // pred_fallthru
      _
    // Predicated region
    $region94: #{bert_forward.1} parent=1 // pred_check
      _
    $region95: #{bert_forward.1} parent=1 // pred_check_branch
      %77 = sbr.rel (0) target = $region97
    $region96: #{bert_forward.1} parent=1 // pred_region
      _
    $region97: #{bert_forward.1} parent=1 // pred_fallthru
      _
    %v79 = vld [vmem:[%s0] sm:$0xff]
    %v80 = vld [vmem:[%s0 + $0x8] sm:$0xff]
    %v81 = vld [vmem:[%s1] sm:$0x1]
    %v82 = vld [vmem:[%s2] sm:$0x1]
    %vm83 = vcmask 261120
    %v84 = vsel %vm83, %v79, 0.0
    %85 = vadd.xlane.f32.xlu0 %v84
    %v86 = vpop.xlane.xlu0 %85
    %v87 = vsel %vm83, %v80, 0.0
    %88 = vadd.xlane.f32.xlu0 %v87
    %v89 = vpop.xlane.xlu0 %88
    %v90 = vrcp.pop 32.0
    %v91 = vmul.f32 %v86, %v90
    %v92 = vmul.f32 %v89, %v90
    %v93 = vsub.f32 %v79, %v91
    %v94 = vsub.f32 %v80, %v92
    %v95 = vmul.f32 %v93, %v93
    %v96 = vmul.f32 %v94, %v94
    %v97 = vsel %vm83, %v95, 0.0
    %98 = vadd.xlane.f32.xlu0 %v97
    %v99 = vpop.xlane.xlu0 %98
    %v100 = vsel %vm83, %v96, 0.0
    %101 = vadd.xlane.f32.xlu0 %v100
    %v102 = vpop.xlane.xlu0 %101
    %v103 = vmul.f32 %v99, %v90
    %v104 = vmul.f32 %v102, %v90
    %v105 = vadd.f32 %v103, 1e-12
    %v106 = vadd.f32 %v104, 1e-12
    %v107 = vrsqrt.pop %v105
    %v108 = vrsqrt.pop %v106
    %v109 = vmul.f32 %v93, %v107
    %v110 = vmul.f32 %v94, %v108
    %v112 = vlaneseq
    %v113 = vshrl.u32 %v112, 7
    %v114 = vsub.s32 0, %v113
    %v115 = vrot.slane %v81, %v114
    %v117 = vmul.f32 %v109, %v115
    %v118 = vmul.f32 %v110, %v115
    %v120 = vlaneseq
    %v121 = vshrl.u32 %v120, 7
    %v122 = vsub.s32 0, %v121
    %v123 = vrot.slane %v82, %v122
    %v125 = vadd.f32 %v117, %v123
    %v126 = vadd.f32 %v118, %v123
    %v127 = vpack.c.bf16 %v126, %v125
    %v128 = vld [vmem:[%s3] sm:$0xf]
    %v129 = vld [vmem:[%s3 + $0x4] sm:$0xf]
    %v130 = vld [vmem:[%s3 + $0x8] sm:$0xf]
    %v131 = vld [vmem:[%s3 + $0xc] sm:$0xf]
    %v132 = vld [vmem:[%s4] sm:$0x1]
    %v134 = vlaneseq
    %v135 = vshrl.u32 %v134, 7
    %v136 = vsub.s32 0, %v135
    %v137 = vrot.slane %v132, %v136
    %v143 = vunpack.c.l.b16 %v128
    %v144 = vunpack.c.l.b16 %v129
    %v145 = vunpack.c.l.b16 %v130
    %v146 = vunpack.c.l.b16 %v131
    %v147 = vpack.c.b16 %v144, %v143
    %v148 = vpack.c.b16 %v146, %v145
    %v152 = vsel %vm83, %v127, 0
    %154 = vmatprep.subr.bf16.mxu0 0
    %155 = vmatpush1.bf16.msra.mxu0 0
    %156 = vmatprep.subr.bf16.mxu0 0
    %157 = vmatpush1.bf16.msra.mxu0 0
    %158 = vmatprep.subr.bf16.mxu0 0
    %159 = vmatpush1.bf16.msra.mxu0 0
    %160 = vmatprep.subr.bf16.mxu0 0
    %161 = vmatpush1.bf16.msra.mxu0 0
    %162 = vmatprep.subr.bf16.mxu0 0
    %163 = vmatpush1.bf16.msra.mxu0 0
    %164 = vmatprep.subr.bf16.mxu0 0
    %165 = vmatpush1.bf16.msra.mxu0 0
    %166 = vmatprep.subr.bf16.mxu0 0
    %167 = vmatpush1.bf16.msra.mxu0 %v148
    %168 = vmatprep.subr.bf16.mxu0 0
    %169 = vmatpush1.bf16.msra.mxu0 %v147
    %170 = vmatprep.subr.bf16.mxu0 0
    %171 = vmatpush2.bf16.msra.mxu0 0
    %172 = vmatprep.subr.bf16.mxu0 0
    %173 = vmatpush2.bf16.msra.mxu0 0
    %174 = vmatprep.subr.bf16.mxu0 0
    %175 = vmatpush2.bf16.msra.mxu0 0
    %176 = vmatprep.subr.bf16.mxu0 0
    %177 = vmatpush2.bf16.msra.mxu0 0
    %178 = vmatprep.subr.bf16.mxu0 0
    %179 = vmatpush2.bf16.msra.mxu0 0
    %180 = vmatprep.subr.bf16.mxu0 0
    %181 = vmatpush2.bf16.msra.mxu0 0
    %182 = vmatprep.subr.bf16.mxu0 0
    %183 = vmatpush2.bf16.msra.mxu0 0
    %184 = vmatprep.subr.bf16.mxu0 0
    %185 = vmatpush2.bf16.msra.mxu0 0
    %186 = vmatprep.mubr.bf16.mxu0 0
    %187 = vmatmul.mubr.bf16.gmra.mxu0 %v152
    %v188 = vpop.f32.mrf.mxu0
    %v189 = vadd.f32 %v137, %v188
    %v190 = vpop.f32.mrf.mxu0
    %v191 = vpop.f32.mrf.mxu0
    %v192 = vadd.f32 %v137, %v191
    %v193 = vpop.f32.mrf.mxu0
    %194 = vdwg.mxu0
    %v195 = vld [vmem:[%s5] sm:$0xf]
    %v196 = vld [vmem:[%s5 + $0x4] sm:$0xf]
    %v197 = vld [vmem:[%s5 + $0x8] sm:$0xf]
    %v198 = vld [vmem:[%s5 + $0xc] sm:$0xf]
    %v199 = vld [vmem:[%s6] sm:$0x1]
    %v201 = vlaneseq
    %v202 = vshrl.u32 %v201, 7
    %v203 = vsub.s32 0, %v202
    %v204 = vrot.slane %v199, %v203
    %v210 = vunpack.c.l.b16 %v195
    %v211 = vunpack.c.l.b16 %v196
    %v212 = vunpack.c.l.b16 %v197
    %v213 = vunpack.c.l.b16 %v198
    %v214 = vpack.c.b16 %v211, %v210
    %v215 = vpack.c.b16 %v213, %v212
    %218 = vmatprep.subr.bf16.mxu0 0
    %219 = vmatpush1.bf16.msra.mxu0 0
    %220 = vmatprep.subr.bf16.mxu0 0
    %221 = vmatpush1.bf16.msra.mxu0 0
    %222 = vmatprep.subr.bf16.mxu0 0
    %223 = vmatpush1.bf16.msra.mxu0 0
    %224 = vmatprep.subr.bf16.mxu0 0
    %225 = vmatpush1.bf16.msra.mxu0 0
    %226 = vmatprep.subr.bf16.mxu0 0
    %227 = vmatpush1.bf16.msra.mxu0 0
    %228 = vmatprep.subr.bf16.mxu0 0
    %229 = vmatpush1.bf16.msra.mxu0 0
    %230 = vmatprep.subr.bf16.mxu0 0
    %231 = vmatpush1.bf16.msra.mxu0 %v215
    %232 = vmatprep.subr.bf16.mxu0 0
    %233 = vmatpush1.bf16.msra.mxu0 %v214
    %234 = vmatprep.subr.bf16.mxu0 0
    %235 = vmatpush2.bf16.msra.mxu0 0
    %236 = vmatprep.subr.bf16.mxu0 0
    %237 = vmatpush2.bf16.msra.mxu0 0
    %238 = vmatprep.subr.bf16.mxu0 0
    %239 = vmatpush2.bf16.msra.mxu0 0
    %240 = vmatprep.subr.bf16.mxu0 0
    %241 = vmatpush2.bf16.msra.mxu0 0
    %242 = vmatprep.subr.bf16.mxu0 0
    %243 = vmatpush2.bf16.msra.mxu0 0
    %244 = vmatprep.subr.bf16.mxu0 0
    %245 = vmatpush2.bf16.msra.mxu0 0
    %246 = vmatprep.subr.bf16.mxu0 0
    %247 = vmatpush2.bf16.msra.mxu0 0
    %248 = vmatprep.subr.bf16.mxu0 0
    %249 = vmatpush2.bf16.msra.mxu0 0
    %250 = vmatprep.mubr.bf16.mxu0 0
    %251 = vmatmul.mubr.bf16.gmra.mxu0 %v152
    %v252 = vpop.f32.mrf.mxu0
    %v253 = vadd.f32 %v204, %v252
    %v254 = vpop.f32.mrf.mxu0
    %v255 = vpop.f32.mrf.mxu0
    %v256 = vadd.f32 %v204, %v255
    %v257 = vpop.f32.mrf.mxu0
    %258 = vdwg.mxu0
    %v259 = vld [vmem:[%s7] sm:$0xf]
    %v260 = vld [vmem:[%s7 + $0x4] sm:$0xf]
    %v261 = vld [vmem:[%s7 + $0x8] sm:$0xf]
    %v262 = vld [vmem:[%s7 + $0xc] sm:$0xf]
    %v263 = vld [vmem:[%s8] sm:$0x1]
    %v265 = vlaneseq
    %v266 = vshrl.u32 %v265, 7
    %v267 = vsub.s32 0, %v266
    %v268 = vrot.slane %v263, %v267
    %v274 = vunpack.c.l.b16 %v259
    %v275 = vunpack.c.l.b16 %v260
    %v276 = vunpack.c.l.b16 %v261
    %v277 = vunpack.c.l.b16 %v262
    %v278 = vpack.c.b16 %v275, %v274
    %v279 = vpack.c.b16 %v277, %v276
    %282 = vmatprep.subr.bf16.mxu0 0
    %283 = vmatpush1.bf16.msra.mxu0 0
    %284 = vmatprep.subr.bf16.mxu0 0
    %285 = vmatpush1.bf16.msra.mxu0 0
    %286 = vmatprep.subr.bf16.mxu0 0
    %287 = vmatpush1.bf16.msra.mxu0 0
    %288 = vmatprep.subr.bf16.mxu0 0
    %289 = vmatpush1.bf16.msra.mxu0 0
    %290 = vmatprep.subr.bf16.mxu0 0
    %291 = vmatpush1.bf16.msra.mxu0 0
    %292 = vmatprep.subr.bf16.mxu0 0
    %293 = vmatpush1.bf16.msra.mxu0 0
    %294 = vmatprep.subr.bf16.mxu0 0
    %295 = vmatpush1.bf16.msra.mxu0 %v279
    %296 = vmatprep.subr.bf16.mxu0 0
    %297 = vmatpush1.bf16.msra.mxu0 %v278
    %298 = vmatprep.subr.bf16.mxu0 0
    %299 = vmatpush2.bf16.msra.mxu0 0
    %300 = vmatprep.subr.bf16.mxu0 0
    %301 = vmatpush2.bf16.msra.mxu0 0
    %302 = vmatprep.subr.bf16.mxu0 0
    %303 = vmatpush2.bf16.msra.mxu0 0
    %304 = vmatprep.subr.bf16.mxu0 0
    %305 = vmatpush2.bf16.msra.mxu0 0
    %306 = vmatprep.subr.bf16.mxu0 0
    %307 = vmatpush2.bf16.msra.mxu0 0
    %308 = vmatprep.subr.bf16.mxu0 0
    %309 = vmatpush2.bf16.msra.mxu0 0
    %310 = vmatprep.subr.bf16.mxu0 0
    %311 = vmatpush2.bf16.msra.mxu0 0
    %312 = vmatprep.subr.bf16.mxu0 0
    %313 = vmatpush2.bf16.msra.mxu0 0
    %314 = vmatprep.mubr.bf16.mxu0 0
    %315 = vmatmul.mubr.bf16.gmra.mxu0 %v152
    %v316 = vpop.f32.mrf.mxu0
    %v317 = vadd.f32 %v268, %v316
    %v318 = vpop.f32.mrf.mxu0
    %v319 = vpop.f32.mrf.mxu0
    %v320 = vadd.f32 %v268, %v319
    %v321 = vpop.f32.mrf.mxu0
    %322 = vdwg.mxu0
    %v323 = vpack.c.bf16 %v189, %v189
    %v324 = vpack.c.bf16 %v192, %v192
    %v325 = vpack.c.bf16 %v253, %v253
    %v326 = vpack.c.bf16 %v256, %v256
    %v327 = vpack.c.bf16 %v317, %v317
    %v328 = vpack.c.bf16 %v320, %v320
    %vm329 = vcmask 64512
    %v331 = vsel %vm329, %v323, 0
    %v334 = vsel %vm329, %v325, 0
    %336 = vmatprep.subr.bf16.mxu0 0
    %337 = vmatpush1.bf16.xpose.msra.mxu0 0
    %338 = vmatprep.subr.bf16.mxu0 0
    %339 = vmatpush1.bf16.xpose.msra.mxu0 0
    %340 = vmatprep.subr.bf16.mxu0 0
    %341 = vmatpush1.bf16.xpose.msra.mxu0 0
    %342 = vmatprep.subr.bf16.mxu0 0
    %343 = vmatpush1.bf16.xpose.msra.mxu0 0
    %344 = vmatprep.subr.bf16.mxu0 0
    %345 = vmatpush1.bf16.xpose.msra.mxu0 0
    %346 = vmatprep.subr.bf16.mxu0 0
    %347 = vmatpush1.bf16.xpose.msra.mxu0 0
    %348 = vmatprep.subr.bf16.mxu0 0
    %349 = vmatpush1.bf16.xpose.msra.mxu0 0
    %350 = vmatprep.subr.bf16.mxu0 0
    %351 = vmatpush1.bf16.xpose.msra.mxu0 %v334
    %352 = vmatprep.subr.bf16.mxu0 0
    %353 = vmatpush2.bf16.xpose.msra.mxu0 0
    %354 = vmatprep.subr.bf16.mxu0 0
    %355 = vmatpush2.bf16.xpose.msra.mxu0 0
    %356 = vmatprep.subr.bf16.mxu0 0
    %357 = vmatpush2.bf16.xpose.msra.mxu0 0
    %358 = vmatprep.subr.bf16.mxu0 0
    %359 = vmatpush2.bf16.xpose.msra.mxu0 0
    %360 = vmatprep.subr.bf16.mxu0 0
    %361 = vmatpush2.bf16.xpose.msra.mxu0 0
    %362 = vmatprep.subr.bf16.mxu0 0
    %363 = vmatpush2.bf16.xpose.msra.mxu0 0
    %364 = vmatprep.subr.bf16.mxu0 0
    %365 = vmatpush2.bf16.xpose.msra.mxu0 0
    %366 = vmatprep.subr.bf16.mxu0 0
    %367 = vmatpush2.bf16.xpose.msra.mxu0 0
    %368 = vmatprep.mubr.bf16.mxu0 0
    %369 = vmatmul.mubr.bf16.gmra.mxu0 %v331
    %v370 = vpop.f32.mrf.mxu0
    %v371 = vadd.f32 0.0, %v370
    %v372 = vpop.f32.mrf.mxu0
    %v373 = vpop.f32.mrf.mxu0
    %v374 = vpop.f32.mrf.mxu0
    %375 = vdwg.mxu0
    %v377 = vsel %vm329, %v324, 0
    %v380 = vsel %vm329, %v326, 0
    %382 = vmatprep.subr.bf16.mxu0 0
    %383 = vmatpush1.bf16.xpose.msra.mxu0 0
    %384 = vmatprep.subr.bf16.mxu0 0
    %385 = vmatpush1.bf16.xpose.msra.mxu0 0
    %386 = vmatprep.subr.bf16.mxu0 0
    %387 = vmatpush1.bf16.xpose.msra.mxu0 0
    %388 = vmatprep.subr.bf16.mxu0 0
    %389 = vmatpush1.bf16.xpose.msra.mxu0 0
    %390 = vmatprep.subr.bf16.mxu0 0
    %391 = vmatpush1.bf16.xpose.msra.mxu0 0
    %392 = vmatprep.subr.bf16.mxu0 0
    %393 = vmatpush1.bf16.xpose.msra.mxu0 0
    %394 = vmatprep.subr.bf16.mxu0 0
    %395 = vmatpush1.bf16.xpose.msra.mxu0 0
    %396 = vmatprep.subr.bf16.mxu0 0
    %397 = vmatpush1.bf16.xpose.msra.mxu0 %v380
    %398 = vmatprep.subr.bf16.mxu0 0
    %399 = vmatpush2.bf16.xpose.msra.mxu0 0
    %400 = vmatprep.subr.bf16.mxu0 0
    %401 = vmatpush2.bf16.xpose.msra.mxu0 0
    %402 = vmatprep.subr.bf16.mxu0 0
    %403 = vmatpush2.bf16.xpose.msra.mxu0 0
    %404 = vmatprep.subr.bf16.mxu0 0
    %405 = vmatpush2.bf16.xpose.msra.mxu0 0
    %406 = vmatprep.subr.bf16.mxu0 0
    %407 = vmatpush2.bf16.xpose.msra.mxu0 0
    %408 = vmatprep.subr.bf16.mxu0 0
    %409 = vmatpush2.bf16.xpose.msra.mxu0 0
    %410 = vmatprep.subr.bf16.mxu0 0
    %411 = vmatpush2.bf16.xpose.msra.mxu0 0
    %412 = vmatprep.subr.bf16.mxu0 0
    %413 = vmatpush2.bf16.xpose.msra.mxu0 0
    %414 = vmatprep.mubr.bf16.mxu0 0
    %415 = vmatmul.mubr.bf16.gmra.mxu0 %v377
    %v416 = vpop.f32.mrf.mxu0
    %v417 = vadd.f32 0.0, %v416
    %v418 = vpop.f32.mrf.mxu0
    %v419 = vpop.f32.mrf.mxu0
    %v420 = vpop.f32.mrf.mxu0
    %421 = vdwg.mxu0
    %v422 = vmul.f32 %v371, 0.35355338
    %v423 = vmul.f32 %v417, 0.35355338
    %v424 = vsel %vm329, %v422, -inf
    %425 = vmax.xlane.f32.xlu0 %v424
    %v426 = vpop.xlane.xlu0 %425
    %v427 = vsel %vm329, %v423, -inf
    %428 = vmax.xlane.f32.xlu0 %v427
    %v429 = vpop.xlane.xlu0 %428
    %v430 = vsub.f32 %v422, %v426
    %v431 = vsub.f32 %v423, %v429
    %v432 = vmul.f32 %v430, 1.442695
    %v433 = vpow.pop %v432
    %v434 = vmul.f32 %v431, 1.442695
    %v435 = vpow.pop %v434
    %v436 = vsel %vm329, %v433, 0.0
    %437 = vadd.xlane.f32.xlu0 %v436
    %v438 = vpop.xlane.xlu0 %437
    %v439 = vsel %vm329, %v435, 0.0
    %440 = vadd.xlane.f32.xlu0 %v439
    %v441 = vpop.xlane.xlu0 %440
    %v442 = vrcp.pop %v438
    %v443 = vrcp.pop %v441
    %v444 = vmul.f32 %v433, %v442
    %v445 = vmul.f32 %v435, %v443
    %v446 = vpack.c.bf16 %v444, %v444
    %v447 = vpack.c.bf16 %v445, %v445
    %v449 = vsel %vm329, %v446, 0
    %vm451 = vcmask 1043456
    %v453 = vsel %vm451, %v327, 0
    %455 = vmatprep.subr.bf16.mxu0 0
    %456 = vmatpush1.bf16.msra.mxu0 0
    %457 = vmatprep.subr.bf16.mxu0 0
    %458 = vmatpush1.bf16.msra.mxu0 0
    %459 = vmatprep.subr.bf16.mxu0 0
    %460 = vmatpush1.bf16.msra.mxu0 0
    %461 = vmatprep.subr.bf16.mxu0 0
    %462 = vmatpush1.bf16.msra.mxu0 0
    %463 = vmatprep.subr.bf16.mxu0 0
    %464 = vmatpush1.bf16.msra.mxu0 0
    %465 = vmatprep.subr.bf16.mxu0 0
    %466 = vmatpush1.bf16.msra.mxu0 0
    %467 = vmatprep.subr.bf16.mxu0 0
    %468 = vmatpush1.bf16.msra.mxu0 0
    %469 = vmatprep.subr.bf16.mxu0 0
    %470 = vmatpush1.bf16.msra.mxu0 %v453
    %471 = vmatprep.subr.bf16.mxu0 0
    %472 = vmatpush2.bf16.msra.mxu0 0
    %473 = vmatprep.subr.bf16.mxu0 0
    %474 = vmatpush2.bf16.msra.mxu0 0
    %475 = vmatprep.subr.bf16.mxu0 0
    %476 = vmatpush2.bf16.msra.mxu0 0
    %477 = vmatprep.subr.bf16.mxu0 0
    %478 = vmatpush2.bf16.msra.mxu0 0
    %479 = vmatprep.subr.bf16.mxu0 0
    %480 = vmatpush2.bf16.msra.mxu0 0
    %481 = vmatprep.subr.bf16.mxu0 0
    %482 = vmatpush2.bf16.msra.mxu0 0
    %483 = vmatprep.subr.bf16.mxu0 0
    %484 = vmatpush2.bf16.msra.mxu0 0
    %485 = vmatprep.subr.bf16.mxu0 0
    %486 = vmatpush2.bf16.msra.mxu0 0
    %487 = vmatprep.mubr.bf16.mxu0 0
    %488 = vmatmul.mubr.bf16.gmra.mxu0 %v449
    %v489 = vpop.f32.mrf.mxu0
    %v490 = vadd.f32 0.0, %v489
    %v491 = vpop.f32.mrf.mxu0
    %v492 = vpop.f32.mrf.mxu0
    %v493 = vpop.f32.mrf.mxu0
    %494 = vdwg.mxu0
    %v496 = vsel %vm329, %v447, 0
    %v499 = vsel %vm451, %v328, 0
    %501 = vmatprep.subr.bf16.mxu0 0
    %502 = vmatpush1.bf16.msra.mxu0 0
    %503 = vmatprep.subr.bf16.mxu0 0
    %504 = vmatpush1.bf16.msra.mxu0 0
    %505 = vmatprep.subr.bf16.mxu0 0
    %506 = vmatpush1.bf16.msra.mxu0 0
    %507 = vmatprep.subr.bf16.mxu0 0
    %508 = vmatpush1.bf16.msra.mxu0 0
    %509 = vmatprep.subr.bf16.mxu0 0
    %510 = vmatpush1.bf16.msra.mxu0 0
    %511 = vmatprep.subr.bf16.mxu0 0
    %512 = vmatpush1.bf16.msra.mxu0 0
    %513 = vmatprep.subr.bf16.mxu0 0
    %514 = vmatpush1.bf16.msra.mxu0 0
    %515 = vmatprep.subr.bf16.mxu0 0
    %516 = vmatpush1.bf16.msra.mxu0 %v499
    %517 = vmatprep.subr.bf16.mxu0 0
    %518 = vmatpush2.bf16.msra.mxu0 0
    %519 = vmatprep.subr.bf16.mxu0 0
    %520 = vmatpush2.bf16.msra.mxu0 0
    %521 = vmatprep.subr.bf16.mxu0 0
    %522 = vmatpush2.bf16.msra.mxu0 0
    %523 = vmatprep.subr.bf16.mxu0 0
    %524 = vmatpush2.bf16.msra.mxu0 0
    %525 = vmatprep.subr.bf16.mxu0 0
    %526 = vmatpush2.bf16.msra.mxu0 0
    %527 = vmatprep.subr.bf16.mxu0 0
    %528 = vmatpush2.bf16.msra.mxu0 0
    %529 = vmatprep.subr.bf16.mxu0 0
    %530 = vmatpush2.bf16.msra.mxu0 0
    %531 = vmatprep.subr.bf16.mxu0 0
    %532 = vmatpush2.bf16.msra.mxu0 0
    %533 = vmatprep.mubr.bf16.mxu0 0
    %534 = vmatmul.mubr.bf16.gmra.mxu0 %v496
    %v535 = vpop.f32.mrf.mxu0
    %v536 = vadd.f32 0.0, %v535
    %v537 = vpop.f32.mrf.mxu0
    %v538 = vpop.f32.mrf.mxu0
    %v539 = vpop.f32.mrf.mxu0
    %540 = vdwg.mxu0
    %542 = vrot.lane.b32.xlu0 %v323, 120
    %v543 = vpop.permute.xlu0 %542
    %545 = vrot.lane.b32.xlu0 %v325, 120
    %v546 = vpop.permute.xlu0 %545
    %v548 = vsel %vm329, %v543, 0
    %v551 = vsel %vm329, %v546, 0
    %553 = vmatprep.subr.bf16.mxu0 0
    %554 = vmatpush1.bf16.xpose.msra.mxu0 0
    %555 = vmatprep.subr.bf16.mxu0 0
    %556 = vmatpush1.bf16.xpose.msra.mxu0 0
    %557 = vmatprep.subr.bf16.mxu0 0
    %558 = vmatpush1.bf16.xpose.msra.mxu0 0
    %559 = vmatprep.subr.bf16.mxu0 0
    %560 = vmatpush1.bf16.xpose.msra.mxu0 0
    %561 = vmatprep.subr.bf16.mxu0 0
    %562 = vmatpush1.bf16.xpose.msra.mxu0 0
    %563 = vmatprep.subr.bf16.mxu0 0
    %564 = vmatpush1.bf16.xpose.msra.mxu0 0
    %565 = vmatprep.subr.bf16.mxu0 0
    %566 = vmatpush1.bf16.xpose.msra.mxu0 0
    %567 = vmatprep.subr.bf16.mxu0 0
    %568 = vmatpush1.bf16.xpose.msra.mxu0 %v551
    %569 = vmatprep.subr.bf16.mxu0 0
    %570 = vmatpush2.bf16.xpose.msra.mxu0 0
    %571 = vmatprep.subr.bf16.mxu0 0
    %572 = vmatpush2.bf16.xpose.msra.mxu0 0
    %573 = vmatprep.subr.bf16.mxu0 0
    %574 = vmatpush2.bf16.xpose.msra.mxu0 0
    %575 = vmatprep.subr.bf16.mxu0 0
    %576 = vmatpush2.bf16.xpose.msra.mxu0 0
    %577 = vmatprep.subr.bf16.mxu0 0
    %578 = vmatpush2.bf16.xpose.msra.mxu0 0
    %579 = vmatprep.subr.bf16.mxu0 0
    %580 = vmatpush2.bf16.xpose.msra.mxu0 0
    %581 = vmatprep.subr.bf16.mxu0 0
    %582 = vmatpush2.bf16.xpose.msra.mxu0 0
    %583 = vmatprep.subr.bf16.mxu0 0
    %584 = vmatpush2.bf16.xpose.msra.mxu0 0
    %585 = vmatprep.mubr.bf16.mxu0 0
    %586 = vmatmul.mubr.bf16.gmra.mxu0 %v548
    %v587 = vpop.f32.mrf.mxu0
    %v588 = vadd.f32 0.0, %v587
    %v589 = vpop.f32.mrf.mxu0
    %v590 = vpop.f32.mrf.mxu0
    %v591 = vpop.f32.mrf.mxu0
    %592 = vdwg.mxu0
    %594 = vrot.lane.b32.xlu0 %v324, 120
    %v595 = vpop.permute.xlu0 %594
    %597 = vrot.lane.b32.xlu0 %v326, 120
    %v598 = vpop.permute.xlu0 %597
    %v600 = vsel %vm329, %v595, 0
    %v603 = vsel %vm329, %v598, 0
    %605 = vmatprep.subr.bf16.mxu0 0
    %606 = vmatpush1.bf16.xpose.msra.mxu0 0
    %607 = vmatprep.subr.bf16.mxu0 0
    %608 = vmatpush1.bf16.xpose.msra.mxu0 0
    %609 = vmatprep.subr.bf16.mxu0 0
    %610 = vmatpush1.bf16.xpose.msra.mxu0 0
    %611 = vmatprep.subr.bf16.mxu0 0
    %612 = vmatpush1.bf16.xpose.msra.mxu0 0
    %613 = vmatprep.subr.bf16.mxu0 0
    %614 = vmatpush1.bf16.xpose.msra.mxu0 0
    %615 = vmatprep.subr.bf16.mxu0 0
    %616 = vmatpush1.bf16.xpose.msra.mxu0 0
    %617 = vmatprep.subr.bf16.mxu0 0
    %618 = vmatpush1.bf16.xpose.msra.mxu0 0
    %619 = vmatprep.subr.bf16.mxu0 0
    %620 = vmatpush1.bf16.xpose.msra.mxu0 %v603
    %621 = vmatprep.subr.bf16.mxu0 0
    %622 = vmatpush2.bf16.xpose.msra.mxu0 0
    %623 = vmatprep.subr.bf16.mxu0 0
    %624 = vmatpush2.bf16.xpose.msra.mxu0 0
    %625 = vmatprep.subr.bf16.mxu0 0
    %626 = vmatpush2.bf16.xpose.msra.mxu0 0
    %627 = vmatprep.subr.bf16.mxu0 0
    %628 = vmatpush2.bf16.xpose.msra.mxu0 0
    %629 = vmatprep.subr.bf16.mxu0 0
    %630 = vmatpush2.bf16.xpose.msra.mxu0 0
    %631 = vmatprep.subr.bf16.mxu0 0
    %632 = vmatpush2.bf16.xpose.msra.mxu0 0
    %633 = vmatprep.subr.bf16.mxu0 0
    %634 = vmatpush2.bf16.xpose.msra.mxu0 0
    %635 = vmatprep.subr.bf16.mxu0 0
    %636 = vmatpush2.bf16.xpose.msra.mxu0 0
    %637 = vmatprep.mubr.bf16.mxu0 0
    %638 = vmatmul.mubr.bf16.gmra.mxu0 %v600
    %v639 = vpop.f32.mrf.mxu0
    %v640 = vadd.f32 0.0, %v639
    %v641 = vpop.f32.mrf.mxu0
    %v642 = vpop.f32.mrf.mxu0
    %v643 = vpop.f32.mrf.mxu0
    %644 = vdwg.mxu0
    %v645 = vmul.f32 %v588, 0.35355338
    %v646 = vmul.f32 %v640, 0.35355338
    %v647 = vsel %vm329, %v645, -inf
    %648 = vmax.xlane.f32.xlu0 %v647
    %v649 = vpop.xlane.xlu0 %648
    %v650 = vsel %vm329, %v646, -inf
    %651 = vmax.xlane.f32.xlu0 %v650
    %v652 = vpop.xlane.xlu0 %651
    %v653 = vsub.f32 %v645, %v649
    %v654 = vsub.f32 %v646, %v652
    %v655 = vmul.f32 %v653, 1.442695
    %v656 = vpow.pop %v655
    %v657 = vmul.f32 %v654, 1.442695
    %v658 = vpow.pop %v657
    %v659 = vsel %vm329, %v656, 0.0
    %660 = vadd.xlane.f32.xlu0 %v659
    %v661 = vpop.xlane.xlu0 %660
    %v662 = vsel %vm329, %v658, 0.0
    %663 = vadd.xlane.f32.xlu0 %v662
    %v664 = vpop.xlane.xlu0 %663
    %v665 = vrcp.pop %v661
    %v666 = vrcp.pop %v664
    %v667 = vmul.f32 %v656, %v665
    %v668 = vmul.f32 %v658, %v666
    %v669 = vpack.c.bf16 %v667, %v667
    %v670 = vpack.c.bf16 %v668, %v668
    %672 = vrot.lane.b32.xlu0 %v327, 120
    %v673 = vpop.permute.xlu0 %672
    %v675 = vsel %vm329, %v669, 0
    %v678 = vsel %vm451, %v673, 0
    %680 = vmatprep.subr.bf16.mxu0 0
    %681 = vmatpush1.bf16.msra.mxu0 0
    %682 = vmatprep.subr.bf16.mxu0 0
    %683 = vmatpush1.bf16.msra.mxu0 0
    %684 = vmatprep.subr.bf16.mxu0 0
    %685 = vmatpush1.bf16.msra.mxu0 0
    %686 = vmatprep.subr.bf16.mxu0 0
    %687 = vmatpush1.bf16.msra.mxu0 0
    %688 = vmatprep.subr.bf16.mxu0 0
    %689 = vmatpush1.bf16.msra.mxu0 0
    %690 = vmatprep.subr.bf16.mxu0 0
    %691 = vmatpush1.bf16.msra.mxu0 0
    %692 = vmatprep.subr.bf16.mxu0 0
    %693 = vmatpush1.bf16.msra.mxu0 0
    %694 = vmatprep.subr.bf16.mxu0 0
    %695 = vmatpush1.bf16.msra.mxu0 %v678
    %696 = vmatprep.subr.bf16.mxu0 0
    %697 = vmatpush2.bf16.msra.mxu0 0
    %698 = vmatprep.subr.bf16.mxu0 0
    %699 = vmatpush2.bf16.msra.mxu0 0
    %700 = vmatprep.subr.bf16.mxu0 0
    %701 = vmatpush2.bf16.msra.mxu0 0
    %702 = vmatprep.subr.bf16.mxu0 0
    %703 = vmatpush2.bf16.msra.mxu0 0
    %704 = vmatprep.subr.bf16.mxu0 0
    %705 = vmatpush2.bf16.msra.mxu0 0
    %706 = vmatprep.subr.bf16.mxu0 0
    %707 = vmatpush2.bf16.msra.mxu0 0
    %708 = vmatprep.subr.bf16.mxu0 0
    %709 = vmatpush2.bf16.msra.mxu0 0
    %710 = vmatprep.subr.bf16.mxu0 0
    %711 = vmatpush2.bf16.msra.mxu0 0
    %712 = vmatprep.mubr.bf16.mxu0 0
    %713 = vmatmul.mubr.bf16.gmra.mxu0 %v675
    %v714 = vpop.f32.mrf.mxu0
    %v715 = vadd.f32 0.0, %v714
    %v716 = vpop.f32.mrf.mxu0
    %v717 = vpop.f32.mrf.mxu0
    %v718 = vpop.f32.mrf.mxu0
    %719 = vdwg.mxu0
    %721 = vrot.lane.b32.xlu0 %v328, 120
    %v722 = vpop.permute.xlu0 %721
    %v724 = vsel %vm329, %v670, 0
    %v727 = vsel %vm451, %v722, 0
    %729 = vmatprep.subr.bf16.mxu0 0
    %730 = vmatpush1.bf16.msra.mxu0 0
    %731 = vmatprep.subr.bf16.mxu0 0
    %732 = vmatpush1.bf16.msra.mxu0 0
    %733 = vmatprep.subr.bf16.mxu0 0
    %734 = vmatpush1.bf16.msra.mxu0 0
    %735 = vmatprep.subr.bf16.mxu0 0
    %736 = vmatpush1.bf16.msra.mxu0 0
    %737 = vmatprep.subr.bf16.mxu0 0
    %738 = vmatpush1.bf16.msra.mxu0 0
    %739 = vmatprep.subr.bf16.mxu0 0
    %740 = vmatpush1.bf16.msra.mxu0 0
    %741 = vmatprep.subr.bf16.mxu0 0
    %742 = vmatpush1.bf16.msra.mxu0 0
    %743 = vmatprep.subr.bf16.mxu0 0
    %744 = vmatpush1.bf16.msra.mxu0 %v727
    %745 = vmatprep.subr.bf16.mxu0 0
    %746 = vmatpush2.bf16.msra.mxu0 0
    %747 = vmatprep.subr.bf16.mxu0 0
    %748 = vmatpush2.bf16.msra.mxu0 0
    %749 = vmatprep.subr.bf16.mxu0 0
    %750 = vmatpush2.bf16.msra.mxu0 0
    %751 = vmatprep.subr.bf16.mxu0 0
    %752 = vmatpush2.bf16.msra.mxu0 0
    %753 = vmatprep.subr.bf16.mxu0 0
    %754 = vmatpush2.bf16.msra.mxu0 0
    %755 = vmatprep.subr.bf16.mxu0 0
    %756 = vmatpush2.bf16.msra.mxu0 0
    %757 = vmatprep.subr.bf16.mxu0 0
    %758 = vmatpush2.bf16.msra.mxu0 0
    %759 = vmatprep.subr.bf16.mxu0 0
    %760 = vmatpush2.bf16.msra.mxu0 0
    %761 = vmatprep.mubr.bf16.mxu0 0
    %762 = vmatmul.mubr.bf16.gmra.mxu0 %v724
    %v763 = vpop.f32.mrf.mxu0
    %v764 = vadd.f32 0.0, %v763
    %v765 = vpop.f32.mrf.mxu0
    %v766 = vpop.f32.mrf.mxu0
    %v767 = vpop.f32.mrf.mxu0
    %768 = vdwg.mxu0
    %769 = vrot.lane.b32.xlu0 %v323, 112
    %v770 = vpop.permute.xlu0 %769
    %771 = vrot.lane.b32.xlu0 %v325, 112
    %v772 = vpop.permute.xlu0 %771
    %v774 = vsel %vm329, %v770, 0
    %v777 = vsel %vm329, %v772, 0
    %779 = vmatprep.subr.bf16.mxu0 0
    %780 = vmatpush1.bf16.xpose.msra.mxu0 0
    %781 = vmatprep.subr.bf16.mxu0 0
    %782 = vmatpush1.bf16.xpose.msra.mxu0 0
    %783 = vmatprep.subr.bf16.mxu0 0
    %784 = vmatpush1.bf16.xpose.msra.mxu0 0
    %785 = vmatprep.subr.bf16.mxu0 0
    %786 = vmatpush1.bf16.xpose.msra.mxu0 0
    %787 = vmatprep.subr.bf16.mxu0 0
    %788 = vmatpush1.bf16.xpose.msra.mxu0 0
    %789 = vmatprep.subr.bf16.mxu0 0
    %790 = vmatpush1.bf16.xpose.msra.mxu0 0
    %791 = vmatprep.subr.bf16.mxu0 0
    %792 = vmatpush1.bf16.xpose.msra.mxu0 0
    %793 = vmatprep.subr.bf16.mxu0 0
    %794 = vmatpush1.bf16.xpose.msra.mxu0 %v777
    %795 = vmatprep.subr.bf16.mxu0 0
    %796 = vmatpush2.bf16.xpose.msra.mxu0 0
    %797 = vmatprep.subr.bf16.mxu0 0
    %798 = vmatpush2.bf16.xpose.msra.mxu0 0
    %799 = vmatprep.subr.bf16.mxu0 0
    %800 = vmatpush2.bf16.xpose.msra.mxu0 0
    %801 = vmatprep.subr.bf16.mxu0 0
    %802 = vmatpush2.bf16.xpose.msra.mxu0 0
    %803 = vmatprep.subr.bf16.mxu0 0
    %804 = vmatpush2.bf16.xpose.msra.mxu0 0
    %805 = vmatprep.subr.bf16.mxu0 0
    %806 = vmatpush2.bf16.xpose.msra.mxu0 0
    %807 = vmatprep.subr.bf16.mxu0 0
    %808 = vmatpush2.bf16.xpose.msra.mxu0 0
    %809 = vmatprep.subr.bf16.mxu0 0
    %810 = vmatpush2.bf16.xpose.msra.mxu0 0
    %811 = vmatprep.mubr.bf16.mxu0 0
    %812 = vmatmul.mubr.bf16.gmra.mxu0 %v774
    %v813 = vpop.f32.mrf.mxu0
    %v814 = vadd.f32 0.0, %v813
    %v815 = vpop.f32.mrf.mxu0
    %v816 = vpop.f32.mrf.mxu0
    %v817 = vpop.f32.mrf.mxu0
    %818 = vdwg.mxu0
    %819 = vrot.lane.b32.xlu0 %v324, 112
    %v820 = vpop.permute.xlu0 %819
    %821 = vrot.lane.b32.xlu0 %v326, 112
    %v822 = vpop.permute.xlu0 %821
    %v824 = vsel %vm329, %v820, 0
    %v827 = vsel %vm329, %v822, 0
    %829 = vmatprep.subr.bf16.mxu0 0
    %830 = vmatpush1.bf16.xpose.msra.mxu0 0
    %831 = vmatprep.subr.bf16.mxu0 0
    %832 = vmatpush1.bf16.xpose.msra.mxu0 0
    %833 = vmatprep.subr.bf16.mxu0 0
    %834 = vmatpush1.bf16.xpose.msra.mxu0 0
    %835 = vmatprep.subr.bf16.mxu0 0
    %836 = vmatpush1.bf16.xpose.msra.mxu0 0
    %837 = vmatprep.subr.bf16.mxu0 0
    %838 = vmatpush1.bf16.xpose.msra.mxu0 0
    %839 = vmatprep.subr.bf16.mxu0 0
    %840 = vmatpush1.bf16.xpose.msra.mxu0 0
    %841 = vmatprep.subr.bf16.mxu0 0
    %842 = vmatpush1.bf16.xpose.msra.mxu0 0
    %843 = vmatprep.subr.bf16.mxu0 0
    %844 = vmatpush1.bf16.xpose.msra.mxu0 %v827
    %845 = vmatprep.subr.bf16.mxu0 0
    %846 = vmatpush2.bf16.xpose.msra.mxu0 0
    %847 = vmatprep.subr.bf16.mxu0 0
    %848 = vmatpush2.bf16.xpose.msra.mxu0 0
    %849 = vmatprep.subr.bf16.mxu0 0
    %850 = vmatpush2.bf16.xpose.msra.mxu0 0
    %851 = vmatprep.subr.bf16.mxu0 0
    %852 = vmatpush2.bf16.xpose.msra.mxu0 0
    %853 = vmatprep.subr.bf16.mxu0 0
    %854 = vmatpush2.bf16.xpose.msra.mxu0 0
    %855 = vmatprep.subr.bf16.mxu0 0
    %856 = vmatpush2.bf16.xpose.msra.mxu0 0
    %857 = vmatprep.subr.bf16.mxu0 0
    %858 = vmatpush2.bf16.xpose.msra.mxu0 0
    %859 = vmatprep.subr.bf16.mxu0 0
    %860 = vmatpush2.bf16.xpose.msra.mxu0 0
    %861 = vmatprep.mubr.bf16.mxu0 0
    %862 = vmatmul.mubr.bf16.gmra.mxu0 %v824
    %v863 = vpop.f32.mrf.mxu0
    %v864 = vadd.f32 0.0, %v863
    %v865 = vpop.f32.mrf.mxu0
    %v866 = vpop.f32.mrf.mxu0
    %v867 = vpop.f32.mrf.mxu0
    %868 = vdwg.mxu0
    %v869 = vmul.f32 %v814, 0.35355338
    %v870 = vmul.f32 %v864, 0.35355338
    %v871 = vsel %vm329, %v869, -inf
    %872 = vmax.xlane.f32.xlu0 %v871
    %v873 = vpop.xlane.xlu0 %872
    %v874 = vsel %vm329, %v870, -inf
    %875 = vmax.xlane.f32.xlu0 %v874
    %v876 = vpop.xlane.xlu0 %875
    %v877 = vsub.f32 %v869, %v873
    %v878 = vsub.f32 %v870, %v876
    %v879 = vmul.f32 %v877, 1.442695
    %v880 = vpow.pop %v879
    %v881 = vmul.f32 %v878, 1.442695
    %v882 = vpow.pop %v881
    %v883 = vsel %vm329, %v880, 0.0
    %884 = vadd.xlane.f32.xlu0 %v883
    %v885 = vpop.xlane.xlu0 %884
    %v886 = vsel %vm329, %v882, 0.0
    %887 = vadd.xlane.f32.xlu0 %v886
    %v888 = vpop.xlane.xlu0 %887
    %v889 = vrcp.pop %v885
    %v890 = vrcp.pop %v888
    %v891 = vmul.f32 %v880, %v889
    %v892 = vmul.f32 %v882, %v890
    %v893 = vpack.c.bf16 %v891, %v891
    %v894 = vpack.c.bf16 %v892, %v892
    %895 = vrot.lane.b32.xlu0 %v327, 112
    %v896 = vpop.permute.xlu0 %895
    %v898 = vsel %vm329, %v893, 0
    %v901 = vsel %vm451, %v896, 0
    %903 = vmatprep.subr.bf16.mxu0 0
    %904 = vmatpush1.bf16.msra.mxu0 0
    %905 = vmatprep.subr.bf16.mxu0 0
    %906 = vmatpush1.bf16.msra.mxu0 0
    %907 = vmatprep.subr.bf16.mxu0 0
    %908 = vmatpush1.bf16.msra.mxu0 0
    %909 = vmatprep.subr.bf16.mxu0 0
    %910 = vmatpush1.bf16.msra.mxu0 0
    %911 = vmatprep.subr.bf16.mxu0 0
    %912 = vmatpush1.bf16.msra.mxu0 0
    %913 = vmatprep.subr.bf16.mxu0 0
    %914 = vmatpush1.bf16.msra.mxu0 0
    %915 = vmatprep.subr.bf16.mxu0 0
    %916 = vmatpush1.bf16.msra.mxu0 0
    %917 = vmatprep.subr.bf16.mxu0 0
    %918 = vmatpush1.bf16.msra.mxu0 %v901
    %919 = vmatprep.subr.bf16.mxu0 0
    %920 = vmatpush2.bf16.msra.mxu0 0
    %921 = vmatprep.subr.bf16.mxu0 0
    %922 = vmatpush2.bf16.msra.mxu0 0
    %923 = vmatprep.subr.bf16.mxu0 0
    %924 = vmatpush2.bf16.msra.mxu0 0
    %925 = vmatprep.subr.bf16.mxu0 0
    %926 = vmatpush2.bf16.msra.mxu0 0
    %927 = vmatprep.subr.bf16.mxu0 0
    %928 = vmatpush2.bf16.msra.mxu0 0
    %929 = vmatprep.subr.bf16.mxu0 0
    %930 = vmatpush2.bf16.msra.mxu0 0
    %931 = vmatprep.subr.bf16.mxu0 0
    %932 = vmatpush2.bf16.msra.mxu0 0
    %933 = vmatprep.subr.bf16.mxu0 0
    %934 = vmatpush2.bf16.msra.mxu0 0
    %935 = vmatprep.mubr.bf16.mxu0 0
    %936 = vmatmul.mubr.bf16.gmra.mxu0 %v898
    %v937 = vpop.f32.mrf.mxu0
    %v938 = vadd.f32 0.0, %v937
    %v939 = vpop.f32.mrf.mxu0
    %v940 = vpop.f32.mrf.mxu0
    %v941 = vpop.f32.mrf.mxu0
    %942 = vdwg.mxu0
    %943 = vrot.lane.b32.xlu0 %v328, 112
    %v944 = vpop.permute.xlu0 %943
    %v946 = vsel %vm329, %v894, 0
    %v949 = vsel %vm451, %v944, 0
    %951 = vmatprep.subr.bf16.mxu0 0
    %952 = vmatpush1.bf16.msra.mxu0 0
    %953 = vmatprep.subr.bf16.mxu0 0
    %954 = vmatpush1.bf16.msra.mxu0 0
    %955 = vmatprep.subr.bf16.mxu0 0
    %956 = vmatpush1.bf16.msra.mxu0 0
    %957 = vmatprep.subr.bf16.mxu0 0
    %958 = vmatpush1.bf16.msra.mxu0 0
    %959 = vmatprep.subr.bf16.mxu0 0
    %960 = vmatpush1.bf16.msra.mxu0 0
    %961 = vmatprep.subr.bf16.mxu0 0
    %962 = vmatpush1.bf16.msra.mxu0 0
    %963 = vmatprep.subr.bf16.mxu0 0
    %964 = vmatpush1.bf16.msra.mxu0 0
    %965 = vmatprep.subr.bf16.mxu0 0
    %966 = vmatpush1.bf16.msra.mxu0 %v949
    %967 = vmatprep.subr.bf16.mxu0 0
    %968 = vmatpush2.bf16.msra.mxu0 0
    %969 = vmatprep.subr.bf16.mxu0 0
    %970 = vmatpush2.bf16.msra.mxu0 0
    %971 = vmatprep.subr.bf16.mxu0 0
    %972 = vmatpush2.bf16.msra.mxu0 0
    %973 = vmatprep.subr.bf16.mxu0 0
    %974 = vmatpush2.bf16.msra.mxu0 0
    %975 = vmatprep.subr.bf16.mxu0 0
    %976 = vmatpush2.bf16.msra.mxu0 0
    %977 = vmatprep.subr.bf16.mxu0 0
    %978 = vmatpush2.bf16.msra.mxu0 0
    %979 = vmatprep.subr.bf16.mxu0 0
    %980 = vmatpush2.bf16.msra.mxu0 0
    %981 = vmatprep.subr.bf16.mxu0 0
    %982 = vmatpush2.bf16.msra.mxu0 0
    %983 = vmatprep.mubr.bf16.mxu0 0
    %984 = vmatmul.mubr.bf16.gmra.mxu0 %v946
    %v985 = vpop.f32.mrf.mxu0
    %v986 = vadd.f32 0.0, %v985
    %v987 = vpop.f32.mrf.mxu0
    %v988 = vpop.f32.mrf.mxu0
    %v989 = vpop.f32.mrf.mxu0
    %990 = vdwg.mxu0
    %991 = vrot.lane.b32.xlu0 %v323, 104
    %v992 = vpop.permute.xlu0 %991
    %993 = vrot.lane.b32.xlu0 %v325, 104
    %v994 = vpop.permute.xlu0 %993
    %v996 = vsel %vm329, %v992, 0
    %v999 = vsel %vm329, %v994, 0
    %1001 = vmatprep.subr.bf16.mxu0 0
    %1002 = vmatpush1.bf16.xpose.msra.mxu0 0
    %1003 = vmatprep.subr.bf16.mxu0 0
    %1004 = vmatpush1.bf16.xpose.msra.mxu0 0
    %1005 = vmatprep.subr.bf16.mxu0 0
    %1006 = vmatpush1.bf16.xpose.msra.mxu0 0
    %1007 = vmatprep.subr.bf16.mxu0 0
    %1008 = vmatpush1.bf16.xpose.msra.mxu0 0
    %1009 = vmatprep.subr.bf16.mxu0 0
    %1010 = vmatpush1.bf16.xpose.msra.mxu0 0
    %1011 = vmatprep.subr.bf16.mxu0 0
    %1012 = vmatpush1.bf16.xpose.msra.mxu0 0
    %1013 = vmatprep.subr.bf16.mxu0 0
    %1014 = vmatpush1.bf16.xpose.msra.mxu0 0
    %1015 = vmatprep.subr.bf16.mxu0 0
    %1016 = vmatpush1.bf16.xpose.msra.mxu0 %v999
    %1017 = vmatprep.subr.bf16.mxu0 0
    %1018 = vmatpush2.bf16.xpose.msra.mxu0 0
    %1019 = vmatprep.subr.bf16.mxu0 0
    %1020 = vmatpush2.bf16.xpose.msra.mxu0 0
    %1021 = vmatprep.subr.bf16.mxu0 0
    %1022 = vmatpush2.bf16.xpose.msra.mxu0 0
    %1023 = vmatprep.subr.bf16.mxu0 0
    %1024 = vmatpush2.bf16.xpose.msra.mxu0 0
    %1025 = vmatprep.subr.bf16.mxu0 0
    %1026 = vmatpush2.bf16.xpose.msra.mxu0 0
    %1027 = vmatprep.subr.bf16.mxu0 0
    %1028 = vmatpush2.bf16.xpose.msra.mxu0 0
    %1029 = vmatprep.subr.bf16.mxu0 0
    %1030 = vmatpush2.bf16.xpose.msra.mxu0 0
    %1031 = vmatprep.subr.bf16.mxu0 0
    %1032 = vmatpush2.bf16.xpose.msra.mxu0 0
    %1033 = vmatprep.mubr.bf16.mxu0 0
    %1034 = vmatmul.mubr.bf16.gmra.mxu0 %v996
    %v1035 = vpop.f32.mrf.mxu0
    %v1036 = vadd.f32 0.0, %v1035
    %v1037 = vpop.f32.mrf.mxu0
    %v1038 = vpop.f32.mrf.mxu0
    %v1039 = vpop.f32.mrf.mxu0
    %1040 = vdwg.mxu0
    %1041 = vrot.lane.b32.xlu0 %v324, 104
    %v1042 = vpop.permute.xlu0 %1041
    %1043 = vrot.lane.b32.xlu0 %v326, 104
    %v1044 = vpop.permute.xlu0 %1043
    %v1046 = vsel %vm329, %v1042, 0
    %v1049 = vsel %vm329, %v1044, 0
    %1051 = vmatprep.subr.bf16.mxu0 0
    %1052 = vmatpush1.bf16.xpose.msra.mxu0 0
    %1053 = vmatprep.subr.bf16.mxu0 0
    %1054 = vmatpush1.bf16.xpose.msra.mxu0 0
    %1055 = vmatprep.subr.bf16.mxu0 0
    %1056 = vmatpush1.bf16.xpose.msra.mxu0 0
    %1057 = vmatprep.subr.bf16.mxu0 0
    %1058 = vmatpush1.bf16.xpose.msra.mxu0 0
    %1059 = vmatprep.subr.bf16.mxu0 0
    %1060 = vmatpush1.bf16.xpose.msra.mxu0 0
    %1061 = vmatprep.subr.bf16.mxu0 0
    %1062 = vmatpush1.bf16.xpose.msra.mxu0 0
    %1063 = vmatprep.subr.bf16.mxu0 0
    %1064 = vmatpush1.bf16.xpose.msra.mxu0 0
    %1065 = vmatprep.subr.bf16.mxu0 0
    %1066 = vmatpush1.bf16.xpose.msra.mxu0 %v1049
    %1067 = vmatprep.subr.bf16.mxu0 0
    %1068 = vmatpush2.bf16.xpose.msra.mxu0 0
    %1069 = vmatprep.subr.bf16.mxu0 0
    %1070 = vmatpush2.bf16.xpose.msra.mxu0 0
    %1071 = vmatprep.subr.bf16.mxu0 0
    %1072 = vmatpush2.bf16.xpose.msra.mxu0 0
    %1073 = vmatprep.subr.bf16.mxu0 0
    %1074 = vmatpush2.bf16.xpose.msra.mxu0 0
    %1075 = vmatprep.subr.bf16.mxu0 0
    %1076 = vmatpush2.bf16.xpose.msra.mxu0 0
    %1077 = vmatprep.subr.bf16.mxu0 0
    %1078 = vmatpush2.bf16.xpose.msra.mxu0 0
    %1079 = vmatprep.subr.bf16.mxu0 0
    %1080 = vmatpush2.bf16.xpose.msra.mxu0 0
    %1081 = vmatprep.subr.bf16.mxu0 0
    %1082 = vmatpush2.bf16.xpose.msra.mxu0 0
    %1083 = vmatprep.mubr.bf16.mxu0 0
    %1084 = vmatmul.mubr.bf16.gmra.mxu0 %v1046
    %v1085 = vpop.f32.mrf.mxu0
    %v1086 = vadd.f32 0.0, %v1085
    %v1087 = vpop.f32.mrf.mxu0
    %v1088 = vpop.f32.mrf.mxu0
    %v1089 = vpop.f32.mrf.mxu0
    %1090 = vdwg.mxu0
    %v1091 = vmul.f32 %v1036, 0.35355338
    %v1092 = vmul.f32 %v1086, 0.35355338
    %v1093 = vsel %vm329, %v1091, -inf
    %1094 = vmax.xlane.f32.xlu0 %v1093
    %v1095 = vpop.xlane.xlu0 %1094
    %v1096 = vsel %vm329, %v1092, -inf
    %1097 = vmax.xlane.f32.xlu0 %v1096
    %v1098 = vpop.xlane.xlu0 %1097
    %v1099 = vsub.f32 %v1091, %v1095
    %v1100 = vsub.f32 %v1092, %v1098
    %v1101 = vmul.f32 %v1099, 1.442695
    %v1102 = vpow.pop %v1101
    %v1103 = vmul.f32 %v1100, 1.442695
    %v1104 = vpow.pop %v1103
    %v1105 = vsel %vm329, %v1102, 0.0
    %1106 = vadd.xlane.f32.xlu0 %v1105
    %v1107 = vpop.xlane.xlu0 %1106
    %v1108 = vsel %vm329, %v1104, 0.0
    %1109 = vadd.xlane.f32.xlu0 %v1108
    %v1110 = vpop.xlane.xlu0 %1109
    %v1111 = vrcp.pop %v1107
    %v1112 = vrcp.pop %v1110
    %v1113 = vmul.f32 %v1102, %v1111
    %v1114 = vmul.f32 %v1104, %v1112
    %v1115 = vpack.c.bf16 %v1113, %v1113
    %v1116 = vpack.c.bf16 %v1114, %v1114
    %1117 = vrot.lane.b32.xlu0 %v327, 104
    %v1118 = vpop.permute.xlu0 %1117
    %v1120 = vsel %vm329, %v1115, 0
    %v1123 = vsel %vm451, %v1118, 0
    %1125 = vmatprep.subr.bf16.mxu0 0
    %1126 = vmatpush1.bf16.msra.mxu0 0
    %1127 = vmatprep.subr.bf16.mxu0 0
    %1128 = vmatpush1.bf16.msra.mxu0 0
    %1129 = vmatprep.subr.bf16.mxu0 0
    %1130 = vmatpush1.bf16.msra.mxu0 0
    %1131 = vmatprep.subr.bf16.mxu0 0
    %1132 = vmatpush1.bf16.msra.mxu0 0
    %1133 = vmatprep.subr.bf16.mxu0 0
    %1134 = vmatpush1.bf16.msra.mxu0 0
    %1135 = vmatprep.subr.bf16.mxu0 0
    %1136 = vmatpush1.bf16.msra.mxu0 0
    %1137 = vmatprep.subr.bf16.mxu0 0
    %1138 = vmatpush1.bf16.msra.mxu0 0
    %1139 = vmatprep.subr.bf16.mxu0 0
    %1140 = vmatpush1.bf16.msra.mxu0 %v1123
    %1141 = vmatprep.subr.bf16.mxu0 0
    %1142 = vmatpush2.bf16.msra.mxu0 0
    %1143 = vmatprep.subr.bf16.mxu0 0
    %1144 = vmatpush2.bf16.msra.mxu0 0
    %1145 = vmatprep.subr.bf16.mxu0 0
    %1146 = vmatpush2.bf16.msra.mxu0 0
    %1147 = vmatprep.subr.bf16.mxu0 0
    %1148 = vmatpush2.bf16.msra.mxu0 0
    %1149 = vmatprep.subr.bf16.mxu0 0
    %1150 = vmatpush2.bf16.msra.mxu0 0
    %1151 = vmatprep.subr.bf16.mxu0 0
    %1152 = vmatpush2.bf16.msra.mxu0 0
    %1153 = vmatprep.subr.bf16.mxu0 0
    %1154 = vmatpush2.bf16.msra.mxu0 0
    %1155 = vmatprep.subr.bf16.mxu0 0
    %1156 = vmatpush2.bf16.msra.mxu0 0
    %1157 = vmatprep.mubr.bf16.mxu0 0
    %1158 = vmatmul.mubr.bf16.gmra.mxu0 %v1120
    %v1159 = vpop.f32.mrf.mxu0
    %v1160 = vadd.f32 0.0, %v1159
    %v1161 = vpop.f32.mrf.mxu0
    %v1162 = vpop.f32.mrf.mxu0
    %v1163 = vpop.f32.mrf.mxu0
    %1164 = vdwg.mxu0
    %1165 = vrot.lane.b32.xlu0 %v328, 104
    %v1166 = vpop.permute.xlu0 %1165
    %v1168 = vsel %vm329, %v1116, 0
    %v1171 = vsel %vm451, %v1166, 0
    %1173 = vmatprep.subr.bf16.mxu0 0
    %1174 = vmatpush1.bf16.msra.mxu0 0
    %1175 = vmatprep.subr.bf16.mxu0 0
    %1176 = vmatpush1.bf16.msra.mxu0 0
    %1177 = vmatprep.subr.bf16.mxu0 0
    %1178 = vmatpush1.bf16.msra.mxu0 0
    %1179 = vmatprep.subr.bf16.mxu0 0
    %1180 = vmatpush1.bf16.msra.mxu0 0
    %1181 = vmatprep.subr.bf16.mxu0 0
    %1182 = vmatpush1.bf16.msra.mxu0 0
    %1183 = vmatprep.subr.bf16.mxu0 0
    %1184 = vmatpush1.bf16.msra.mxu0 0
    %1185 = vmatprep.subr.bf16.mxu0 0
    %1186 = vmatpush1.bf16.msra.mxu0 0
    %1187 = vmatprep.subr.bf16.mxu0 0
    %1188 = vmatpush1.bf16.msra.mxu0 %v1171
    %1189 = vmatprep.subr.bf16.mxu0 0
    %1190 = vmatpush2.bf16.msra.mxu0 0
    %1191 = vmatprep.subr.bf16.mxu0 0
    %1192 = vmatpush2.bf16.msra.mxu0 0
    %1193 = vmatprep.subr.bf16.mxu0 0
    %1194 = vmatpush2.bf16.msra.mxu0 0
    %1195 = vmatprep.subr.bf16.mxu0 0
    %1196 = vmatpush2.bf16.msra.mxu0 0
    %1197 = vmatprep.subr.bf16.mxu0 0
    %1198 = vmatpush2.bf16.msra.mxu0 0
    %1199 = vmatprep.subr.bf16.mxu0 0
    %1200 = vmatpush2.bf16.msra.mxu0 0
    %1201 = vmatprep.subr.bf16.mxu0 0
    %1202 = vmatpush2.bf16.msra.mxu0 0
    %1203 = vmatprep.subr.bf16.mxu0 0
    %1204 = vmatpush2.bf16.msra.mxu0 0
    %1205 = vmatprep.mubr.bf16.mxu0 0
    %1206 = vmatmul.mubr.bf16.gmra.mxu0 %v1168
    %v1207 = vpop.f32.mrf.mxu0
    %v1208 = vadd.f32 0.0, %v1207
    %v1209 = vpop.f32.mrf.mxu0
    %v1210 = vpop.f32.mrf.mxu0
    %v1211 = vpop.f32.mrf.mxu0
    %1212 = vdwg.mxu0
    %1215 = vrot.lane.b32.xlu0 %v715, 8
    %v1216 = vpop.permute.xlu0 %1215
    %1217 = vrot.lane.b32.xlu0 %v764, 8
    %v1218 = vpop.permute.xlu0 %1217
    %1223 = vrot.lane.b32.xlu0 %v938, 16
    %v1224 = vpop.permute.xlu0 %1223
    %1225 = vrot.lane.b32.xlu0 %v986, 16
    %v1226 = vpop.permute.xlu0 %1225
    %1231 = vrot.lane.b32.xlu0 %v1160, 24
    %v1232 = vpop.permute.xlu0 %1231
    %1233 = vrot.lane.b32.xlu0 %v1208, 24
    %v1234 = vpop.permute.xlu0 %1233
    %v1237 = vsel %vm329, %v490, %v1216
    %v1238 = vsel %vm329, %v536, %v1218
    %vm1239 = vcmask 130048
    %v1240 = vsel %vm1239, %v1237, %v1224
    %v1241 = vsel %vm1239, %v1238, %v1226
    %vm1242 = vcmask 195584
    %v1243 = vsel %vm1242, %v1240, %v1232
    %v1244 = vsel %vm1242, %v1241, %v1234
    %v1245 = vpack.c.bf16 %v1244, %v1243
    %v1246 = vld [vmem:[%s9] sm:$0xf]
    %v1247 = vld [vmem:[%s9 + $0x4] sm:$0xf]
    %v1248 = vld [vmem:[%s9 + $0x8] sm:$0xf]
    %v1249 = vld [vmem:[%s9 + $0xc] sm:$0xf]
    %v1250 = vld [vmem:[%s10] sm:$0x1]
    %v1252 = vlaneseq
    %v1253 = vshrl.u32 %v1252, 7
    %v1254 = vsub.s32 0, %v1253
    %v1255 = vrot.slane %v1250, %v1254
    %v1261 = vunpack.c.l.b16 %v1246
    %v1262 = vunpack.c.l.b16 %v1247
    %v1263 = vunpack.c.l.b16 %v1248
    %v1264 = vunpack.c.l.b16 %v1249
    %v1265 = vpack.c.b16 %v1262, %v1261
    %v1266 = vpack.c.b16 %v1264, %v1263
    %v1270 = vsel %vm83, %v1245, 0
    %1272 = vmatprep.subr.bf16.mxu0 0
    %1273 = vmatpush1.bf16.msra.mxu0 0
    %1274 = vmatprep.subr.bf16.mxu0 0
    %1275 = vmatpush1.bf16.msra.mxu0 0
    %1276 = vmatprep.subr.bf16.mxu0 0
    %1277 = vmatpush1.bf16.msra.mxu0 0
    %1278 = vmatprep.subr.bf16.mxu0 0
    %1279 = vmatpush1.bf16.msra.mxu0 0
    %1280 = vmatprep.subr.bf16.mxu0 0
    %1281 = vmatpush1.bf16.msra.mxu0 0
    %1282 = vmatprep.subr.bf16.mxu0 0
    %1283 = vmatpush1.bf16.msra.mxu0 0
    %1284 = vmatprep.subr.bf16.mxu0 0
    %1285 = vmatpush1.bf16.msra.mxu0 %v1266
    %1286 = vmatprep.subr.bf16.mxu0 0
    %1287 = vmatpush1.bf16.msra.mxu0 %v1265
    %1288 = vmatprep.subr.bf16.mxu0 0
    %1289 = vmatpush2.bf16.msra.mxu0 0
    %1290 = vmatprep.subr.bf16.mxu0 0
    %1291 = vmatpush2.bf16.msra.mxu0 0
    %1292 = vmatprep.subr.bf16.mxu0 0
    %1293 = vmatpush2.bf16.msra.mxu0 0
    %1294 = vmatprep.subr.bf16.mxu0 0
    %1295 = vmatpush2.bf16.msra.mxu0 0
    %1296 = vmatprep.subr.bf16.mxu0 0
    %1297 = vmatpush2.bf16.msra.mxu0 0
    %1298 = vmatprep.subr.bf16.mxu0 0
    %1299 = vmatpush2.bf16.msra.mxu0 0
    %1300 = vmatprep.subr.bf16.mxu0 0
    %1301 = vmatpush2.bf16.msra.mxu0 0
    %1302 = vmatprep.subr.bf16.mxu0 0
    %1303 = vmatpush2.bf16.msra.mxu0 0
    %1304 = vmatprep.mubr.bf16.mxu0 0
    %1305 = vmatmul.mubr.bf16.gmra.mxu0 %v1270
    %v1306 = vpop.f32.mrf.mxu0
    %v1307 = vadd.f32 %v1255, %v1306
    %v1308 = vpop.f32.mrf.mxu0
    %v1309 = vpop.f32.mrf.mxu0
    %v1310 = vadd.f32 %v1255, %v1309
    %v1311 = vpop.f32.mrf.mxu0
    %1312 = vdwg.mxu0
    %v1313 = vadd.f32 %v1307, %v125
    %v1314 = vadd.f32 %v1310, %v126
    %v1315 = vld [vmem:[%s11] sm:$0x1]
    %v1316 = vld [vmem:[%s12] sm:$0x1]
    %v1317 = vsel %vm83, %v1313, 0.0
    %1318 = vadd.xlane.f32.xlu0 %v1317
    %v1319 = vpop.xlane.xlu0 %1318
    %v1320 = vsel %vm83, %v1314, 0.0
    %1321 = vadd.xlane.f32.xlu0 %v1320
    %v1322 = vpop.xlane.xlu0 %1321
    %v1323 = vmul.f32 %v1319, %v90
    %v1324 = vmul.f32 %v1322, %v90
    %v1325 = vsub.f32 %v1313, %v1323
    %v1326 = vsub.f32 %v1314, %v1324
    %v1327 = vmul.f32 %v1325, %v1325
    %v1328 = vmul.f32 %v1326, %v1326
    %v1329 = vsel %vm83, %v1327, 0.0
    %1330 = vadd.xlane.f32.xlu0 %v1329
    %v1331 = vpop.xlane.xlu0 %1330
    %v1332 = vsel %vm83, %v1328, 0.0
    %1333 = vadd.xlane.f32.xlu0 %v1332
    %v1334 = vpop.xlane.xlu0 %1333
    %v1335 = vmul.f32 %v1331, %v90
    %v1336 = vmul.f32 %v1334, %v90
    %v1337 = vadd.f32 %v1335, 1e-12
    %v1338 = vadd.f32 %v1336, 1e-12
    %v1339 = vrsqrt.pop %v1337
    %v1340 = vrsqrt.pop %v1338
    %v1341 = vmul.f32 %v1325, %v1339
    %v1342 = vmul.f32 %v1326, %v1340
    %v1344 = vlaneseq
    %v1345 = vshrl.u32 %v1344, 7
    %v1346 = vsub.s32 0, %v1345
    %v1347 = vrot.slane %v1315, %v1346
    %v1349 = vmul.f32 %v1341, %v1347
    %v1350 = vmul.f32 %v1342, %v1347
    %v1352 = vlaneseq
    %v1353 = vshrl.u32 %v1352, 7
    %v1354 = vsub.s32 0, %v1353
    %v1355 = vrot.slane %v1316, %v1354
    %v1357 = vadd.f32 %v1349, %v1355
    %v1358 = vadd.f32 %v1350, %v1355
    %v1359 = vpack.c.bf16 %v1358, %v1357
    %v1360 = vld [vmem:[%s13] sm:$0xf]
    %v1361 = vld [vmem:[%s13 + $0x4] sm:$0xf]
    %v1362 = vld [vmem:[%s13 + $0x8] sm:$0xf]
    %v1363 = vld [vmem:[%s13 + $0xc] sm:$0xf]
    %v1364 = vld [vmem:[%s14] sm:$0x1]
    %v1366 = vlaneseq
    %v1367 = vshrl.u32 %v1366, 7
    %v1368 = vsub.s32 0, %v1367
    %v1369 = vrot.slane %v1364, %v1368
    %v1375 = vunpack.c.l.b16 %v1360
    %v1376 = vunpack.c.l.b16 %v1361
    %v1377 = vunpack.c.l.b16 %v1362
    %v1378 = vunpack.c.l.b16 %v1363
    %v1379 = vpack.c.b16 %v1376, %v1375
    %v1380 = vpack.c.b16 %v1378, %v1377
    %v1384 = vsel %vm83, %v1359, 0
    %1386 = vmatprep.subr.bf16.mxu0 0
    %1387 = vmatpush1.bf16.msra.mxu0 0
    %1388 = vmatprep.subr.bf16.mxu0 0
    %1389 = vmatpush1.bf16.msra.mxu0 0
    %1390 = vmatprep.subr.bf16.mxu0 0
    %1391 = vmatpush1.bf16.msra.mxu0 0
    %1392 = vmatprep.subr.bf16.mxu0 0
    %1393 = vmatpush1.bf16.msra.mxu0 0
    %1394 = vmatprep.subr.bf16.mxu0 0
    %1395 = vmatpush1.bf16.msra.mxu0 0
    %1396 = vmatprep.subr.bf16.mxu0 0
    %1397 = vmatpush1.bf16.msra.mxu0 0
    %1398 = vmatprep.subr.bf16.mxu0 0
    %1399 = vmatpush1.bf16.msra.mxu0 %v1380
    %1400 = vmatprep.subr.bf16.mxu0 0
    %1401 = vmatpush1.bf16.msra.mxu0 %v1379
    %1402 = vmatprep.subr.bf16.mxu0 0
    %1403 = vmatpush2.bf16.msra.mxu0 0
    %1404 = vmatprep.subr.bf16.mxu0 0
    %1405 = vmatpush2.bf16.msra.mxu0 0
    %1406 = vmatprep.subr.bf16.mxu0 0
    %1407 = vmatpush2.bf16.msra.mxu0 0
    %1408 = vmatprep.subr.bf16.mxu0 0
    %1409 = vmatpush2.bf16.msra.mxu0 0
    %1410 = vmatprep.subr.bf16.mxu0 0
    %1411 = vmatpush2.bf16.msra.mxu0 0
    %1412 = vmatprep.subr.bf16.mxu0 0
    %1413 = vmatpush2.bf16.msra.mxu0 0
    %1414 = vmatprep.subr.bf16.mxu0 0
    %1415 = vmatpush2.bf16.msra.mxu0 0
    %1416 = vmatprep.subr.bf16.mxu0 0
    %1417 = vmatpush2.bf16.msra.mxu0 0
    %1418 = vmatprep.mubr.bf16.mxu0 0
    %1419 = vmatmul.mubr.bf16.gmra.mxu0 %v1384
    %v1420 = vpop.f32.mrf.mxu0
    %v1421 = vadd.f32 %v1369, %v1420
    %v1422 = vpop.f32.mrf.mxu0
    %v1423 = vpop.f32.mrf.mxu0
    %v1424 = vadd.f32 %v1369, %v1423
    %v1425 = vpop.f32.mrf.mxu0
    %1426 = vdwg.mxu0
    %v1427 = vmul.f32 %v1421, 0.5
    %v1428 = vmul.f32 %v1424, 0.5
    %v1429 = vmul.f32 %v1421, 0.044715
    %v1430 = vmul.f32 %v1424, 0.044715
    %v1431 = vmul.f32 %v1429, %v1421
    %v1432 = vmul.f32 %v1430, %v1424
    %v1433 = vmul.f32 %v1431, %v1421
    %v1434 = vmul.f32 %v1432, %v1424
    %v1435 = vadd.f32 %v1421, %v1433
    %v1436 = vadd.f32 %v1424, %v1434
    %v1437 = vmul.f32 %v1435, 0.7978846
    %v1438 = vmul.f32 %v1436, 0.7978846
    %v1439 = vtanh.pop %v1437
    %v1440 = vtanh.pop %v1438
    %v1441 = vadd.f32 %v1439, 1.0
    %v1442 = vadd.f32 %v1440, 1.0
    %v1443 = vmul.f32 %v1427, %v1441
    %v1444 = vmul.f32 %v1428, %v1442
    %v1445 = vpack.c.bf16 %v1444, %v1443
    %v1446 = vld [vmem:[%s15] sm:$0xf]
    %v1447 = vld [vmem:[%s15 + $0x4] sm:$0xf]
    %v1448 = vld [vmem:[%s15 + $0x8] sm:$0xf]
    %v1449 = vld [vmem:[%s15 + $0xc] sm:$0xf]
    %v1450 = vld [vmem:[%s15 + $0x10] sm:$0xf]
    %v1451 = vld [vmem:[%s15 + $0x14] sm:$0xf]
    %v1452 = vld [vmem:[%s15 + $0x18] sm:$0xf]
    %v1453 = vld [vmem:[%s15 + $0x1c] sm:$0xf]
    %v1454 = vld [vmem:[%s16] sm:$0x1]
    %v1456 = vlaneseq
    %v1457 = vshrl.u32 %v1456, 7
    %v1458 = vsub.s32 0, %v1457
    %v1459 = vrot.slane %v1454, %v1458
    %v1469 = vunpack.c.l.b16 %v1446
    %v1470 = vunpack.c.l.b16 %v1447
    %v1471 = vunpack.c.l.b16 %v1448
    %v1472 = vunpack.c.l.b16 %v1449
    %v1473 = vunpack.c.l.b16 %v1450
    %v1474 = vunpack.c.l.b16 %v1451
    %v1475 = vunpack.c.l.b16 %v1452
    %v1476 = vunpack.c.l.b16 %v1453
    %v1477 = vpack.c.b16 %v1470, %v1469
    %v1478 = vpack.c.b16 %v1472, %v1471
    %v1479 = vpack.c.b16 %v1474, %v1473
    %v1480 = vpack.c.b16 %v1476, %v1475
    %vm1485 = vcmask 523264
    %v1487 = vsel %vm1485, %v1445, 0
    %1489 = vmatprep.subr.bf16.mxu0 0
    %1490 = vmatpush1.bf16.msra.mxu0 0
    %1491 = vmatprep.subr.bf16.mxu0 0
    %1492 = vmatpush1.bf16.msra.mxu0 0
    %1493 = vmatprep.subr.bf16.mxu0 0
    %1494 = vmatpush1.bf16.msra.mxu0 0
    %1495 = vmatprep.subr.bf16.mxu0 0
    %1496 = vmatpush1.bf16.msra.mxu0 0
    %1497 = vmatprep.subr.bf16.mxu0 0
    %1498 = vmatpush1.bf16.msra.mxu0 %v1480
    %1499 = vmatprep.subr.bf16.mxu0 0
    %1500 = vmatpush1.bf16.msra.mxu0 %v1479
    %1501 = vmatprep.subr.bf16.mxu0 0
    %1502 = vmatpush1.bf16.msra.mxu0 %v1478
    %1503 = vmatprep.subr.bf16.mxu0 0
    %1504 = vmatpush1.bf16.msra.mxu0 %v1477
    %1505 = vmatprep.subr.bf16.mxu0 0
    %1506 = vmatpush2.bf16.msra.mxu0 0
    %1507 = vmatprep.subr.bf16.mxu0 0
    %1508 = vmatpush2.bf16.msra.mxu0 0
    %1509 = vmatprep.subr.bf16.mxu0 0
    %1510 = vmatpush2.bf16.msra.mxu0 0
    %1511 = vmatprep.subr.bf16.mxu0 0
    %1512 = vmatpush2.bf16.msra.mxu0 0
    %1513 = vmatprep.subr.bf16.mxu0 0
    %1514 = vmatpush2.bf16.msra.mxu0 0
    %1515 = vmatprep.subr.bf16.mxu0 0
    %1516 = vmatpush2.bf16.msra.mxu0 0
    %1517 = vmatprep.subr.bf16.mxu0 0
    %1518 = vmatpush2.bf16.msra.mxu0 0
    %1519 = vmatprep.subr.bf16.mxu0 0
    %1520 = vmatpush2.bf16.msra.mxu0 0
    %1521 = vmatprep.mubr.bf16.mxu0 0
    %1522 = vmatmul.mubr.bf16.gmra.mxu0 %v1487
    %v1523 = vpop.f32.mrf.mxu0
    %v1524 = vadd.f32 %v1459, %v1523
    %v1525 = vpop.f32.mrf.mxu0
    %v1526 = vpop.f32.mrf.mxu0
    %v1527 = vadd.f32 %v1459, %v1526
    %v1528 = vpop.f32.mrf.mxu0
    %1529 = vdwg.mxu0
    %v1530 = vadd.f32 %v1524, %v1357
    %v1531 = vadd.f32 %v1527, %v1358
    %v1532 = vld [vmem:[%s17] sm:$0x1]
    %v1533 = vld [vmem:[%s18] sm:$0x1]
    %v1534 = vsel %vm83, %v1530, 0.0
    %1535 = vadd.xlane.f32.xlu0 %v1534
    %v1536 = vpop.xlane.xlu0 %1535
    %v1537 = vsel %vm83, %v1531, 0.0
    %1538 = vadd.xlane.f32.xlu0 %v1537
    %v1539 = vpop.xlane.xlu0 %1538
    %v1540 = vmul.f32 %v1536, %v90
    %v1541 = vmul.f32 %v1539, %v90
    %v1542 = vsub.f32 %v1530, %v1540
    %v1543 = vsub.f32 %v1531, %v1541
    %v1544 = vmul.f32 %v1542, %v1542
    %v1545 = vmul.f32 %v1543, %v1543
    %v1546 = vsel %vm83, %v1544, 0.0
    %1547 = vadd.xlane.f32.xlu0 %v1546
    %v1548 = vpop.xlane.xlu0 %1547
    %v1549 = vsel %vm83, %v1545, 0.0
    %1550 = vadd.xlane.f32.xlu0 %v1549
    %v1551 = vpop.xlane.xlu0 %1550
    %v1552 = vmul.f32 %v1548, %v90
    %v1553 = vmul.f32 %v1551, %v90
    %v1554 = vadd.f32 %v1552, 1e-12
    %v1555 = vadd.f32 %v1553, 1e-12
    %v1556 = vrsqrt.pop %v1554
    %v1557 = vrsqrt.pop %v1555
    %v1558 = vmul.f32 %v1542, %v1556
    %v1559 = vmul.f32 %v1543, %v1557
    %v1561 = vlaneseq
    %v1562 = vshrl.u32 %v1561, 7
    %v1563 = vsub.s32 0, %v1562
    %v1564 = vrot.slane %v1532, %v1563
    %v1566 = vmul.f32 %v1558, %v1564
    %v1567 = vmul.f32 %v1559, %v1564
    %v1569 = vlaneseq
    %v1570 = vshrl.u32 %v1569, 7
    %v1571 = vsub.s32 0, %v1570
    %v1572 = vrot.slane %v1533, %v1571
    %v1574 = vadd.f32 %v1566, %v1572
    %v1575 = vadd.f32 %v1567, %v1572
    %v1576 = vpack.c.bf16 %v1575, %v1574
    %s1577 = scalar_lea.vmem %s3, 16
    %v1578 = vld [vmem:[%s1577] sm:$0xf]
    %v1579 = vld [vmem:[%s1577 + $0x4] sm:$0xf]
    %v1580 = vld [vmem:[%s1577 + $0x8] sm:$0xf]
    %v1581 = vld [vmem:[%s1577 + $0xc] sm:$0xf]
    %s1582 = scalar_lea.vmem %s4, 1
    %v1583 = vld [vmem:[%s1582] sm:$0x1]
    %v1585 = vlaneseq
    %v1586 = vshrl.u32 %v1585, 7
    %v1587 = vsub.s32 0, %v1586
    %v1588 = vrot.slane %v1583, %v1587
    %v1594 = vunpack.c.l.b16 %v1578
    %v1595 = vunpack.c.l.b16 %v1579
    %v1596 = vunpack.c.l.b16 %v1580
    %v1597 = vunpack.c.l.b16 %v1581
    %v1598 = vpack.c.b16 %v1595, %v1594
    %v1599 = vpack.c.b16 %v1597, %v1596
    %v1603 = vsel %vm83, %v1576, 0
    %1605 = vmatprep.subr.bf16.mxu0 0
    %1606 = vmatpush1.bf16.msra.mxu0 0
    %1607 = vmatprep.subr.bf16.mxu0 0
    %1608 = vmatpush1.bf16.msra.mxu0 0
    %1609 = vmatprep.subr.bf16.mxu0 0
    %1610 = vmatpush1.bf16.msra.mxu0 0
    %1611 = vmatprep.subr.bf16.mxu0 0
    %1612 = vmatpush1.bf16.msra.mxu0 0
    %1613 = vmatprep.subr.bf16.mxu0 0
    %1614 = vmatpush1.bf16.msra.mxu0 0
    %1615 = vmatprep.subr.bf16.mxu0 0
    %1616 = vmatpush1.bf16.msra.mxu0 0
    %1617 = vmatprep.subr.bf16.mxu0 0
    %1618 = vmatpush1.bf16.msra.mxu0 %v1599
    %1619 = vmatprep.subr.bf16.mxu0 0
    %1620 = vmatpush1.bf16.msra.mxu0 %v1598
    %1621 = vmatprep.subr.bf16.mxu0 0
    %1622 = vmatpush2.bf16.msra.mxu0 0
    %1623 = vmatprep.subr.bf16.mxu0 0
    %1624 = vmatpush2.bf16.msra.mxu0 0
    %1625 = vmatprep.subr.bf16.mxu0 0
    %1626 = vmatpush2.bf16.msra.mxu0 0
    %1627 = vmatprep.subr.bf16.mxu0 0
    %1628 = vmatpush2.bf16.msra.mxu0 0
    %1629 = vmatprep.subr.bf16.mxu0 0
    %1630 = vmatpush2.bf16.msra.mxu0 0
    %1631 = vmatprep.subr.bf16.mxu0 0
    %1632 = vmatpush2.bf16.msra.mxu0 0
    %1633 = vmatprep.subr.bf16.mxu0 0
    %1634 = vmatpush2.bf16.msra.mxu0 0
    %1635 = vmatprep.subr.bf16.mxu0 0
    %1636 = vmatpush2.bf16.msra.mxu0 0
    %1637 = vmatprep.mubr.bf16.mxu0 0
    %1638 = vmatmul.mubr.bf16.gmra.mxu0 %v1603
    %v1639 = vpop.f32.mrf.mxu0
    %v1640 = vadd.f32 %v1588, %v1639
    %v1641 = vpop.f32.mrf.mxu0
    %v1642 = vpop.f32.mrf.mxu0
    %v1643 = vadd.f32 %v1588, %v1642
    %v1644 = vpop.f32.mrf.mxu0
    %1645 = vdwg.mxu0
    %s1646 = scalar_lea.vmem %s5, 16
    %v1647 = vld [vmem:[%s1646] sm:$0xf]
    %v1648 = vld [vmem:[%s1646 + $0x4] sm:$0xf]
    %v1649 = vld [vmem:[%s1646 + $0x8] sm:$0xf]
    %v1650 = vld [vmem:[%s1646 + $0xc] sm:$0xf]
    %s1651 = scalar_lea.vmem %s6, 1
    %v1652 = vld [vmem:[%s1651] sm:$0x1]
    %v1654 = vlaneseq
    %v1655 = vshrl.u32 %v1654, 7
    %v1656 = vsub.s32 0, %v1655
    %v1657 = vrot.slane %v1652, %v1656
    %v1663 = vunpack.c.l.b16 %v1647
    %v1664 = vunpack.c.l.b16 %v1648
    %v1665 = vunpack.c.l.b16 %v1649
    %v1666 = vunpack.c.l.b16 %v1650
    %v1667 = vpack.c.b16 %v1664, %v1663
    %v1668 = vpack.c.b16 %v1666, %v1665
    %1671 = vmatprep.subr.bf16.mxu0 0
    %1672 = vmatpush1.bf16.msra.mxu0 0
    %1673 = vmatprep.subr.bf16.mxu0 0
    %1674 = vmatpush1.bf16.msra.mxu0 0
    %1675 = vmatprep.subr.bf16.mxu0 0
    %1676 = vmatpush1.bf16.msra.mxu0 0
    %1677 = vmatprep.subr.bf16.mxu0 0
    %1678 = vmatpush1.bf16.msra.mxu0 0
    %1679 = vmatprep.subr.bf16.mxu0 0
    %1680 = vmatpush1.bf16.msra.mxu0 0
    %1681 = vmatprep.subr.bf16.mxu0 0
    %1682 = vmatpush1.bf16.msra.mxu0 0
    %1683 = vmatprep.subr.bf16.mxu0 0
    %1684 = vmatpush1.bf16.msra.mxu0 %v1668
    %1685 = vmatprep.subr.bf16.mxu0 0
    %1686 = vmatpush1.bf16.msra.mxu0 %v1667
    %1687 = vmatprep.subr.bf16.mxu0 0
    %1688 = vmatpush2.bf16.msra.mxu0 0
    %1689 = vmatprep.subr.bf16.mxu0 0
    %1690 = vmatpush2.bf16.msra.mxu0 0
    %1691 = vmatprep.subr.bf16.mxu0 0
    %1692 = vmatpush2.bf16.msra.mxu0 0
    %1693 = vmatprep.subr.bf16.mxu0 0
    %1694 = vmatpush2.bf16.msra.mxu0 0
    %1695 = vmatprep.subr.bf16.mxu0 0
    %1696 = vmatpush2.bf16.msra.mxu0 0
    %1697 = vmatprep.subr.bf16.mxu0 0
    %1698 = vmatpush2.bf16.msra.mxu0 0
    %1699 = vmatprep.subr.bf16.mxu0 0
    %1700 = vmatpush2.bf16.msra.mxu0 0
    %1701 = vmatprep.subr.bf16.mxu0 0
    %1702 = vmatpush2.bf16.msra.mxu0 0
    %1703 = vmatprep.mubr.bf16.mxu0 0
    %1704 = vmatmul.mubr.bf16.gmra.mxu0 %v1603
    %v1705 = vpop.f32.mrf.mxu0
    %v1706 = vadd.f32 %v1657, %v1705
    %v1707 = vpop.f32.mrf.mxu0
    %v1708 = vpop.f32.mrf.mxu0
    %v1709 = vadd.f32 %v1657, %v1708
    %v1710 = vpop.f32.mrf.mxu0
    %1711 = vdwg.mxu0
    %s1712 = scalar_lea.vmem %s7, 16
    %v1713 = vld [vmem:[%s1712] sm:$0xf]
    %v1714 = vld [vmem:[%s1712 + $0x4] sm:$0xf]
    %v1715 = vld [vmem:[%s1712 + $0x8] sm:$0xf]
    %v1716 = vld [vmem:[%s1712 + $0xc] sm:$0xf]
    %s1717 = scalar_lea.vmem %s8, 1
    %v1718 = vld [vmem:[%s1717] sm:$0x1]
    %v1720 = vlaneseq
    %v1721 = vshrl.u32 %v1720, 7
    %v1722 = vsub.s32 0, %v1721
    %v1723 = vrot.slane %v1718, %v1722
    %v1729 = vunpack.c.l.b16 %v1713
    %v1730 = vunpack.c.l.b16 %v1714
    %v1731 = vunpack.c.l.b16 %v1715
    %v1732 = vunpack.c.l.b16 %v1716
    %v1733 = vpack.c.b16 %v1730, %v1729
    %v1734 = vpack.c.b16 %v1732, %v1731
    %1737 = vmatprep.subr.bf16.mxu0 0
    %1738 = vmatpush1.bf16.msra.mxu0 0
    %1739 = vmatprep.subr.bf16.mxu0 0
    %1740 = vmatpush1.bf16.msra.mxu0 0
    %1741 = vmatprep.subr.bf16.mxu0 0
    %1742 = vmatpush1.bf16.msra.mxu0 0
    %1743 = vmatprep.subr.bf16.mxu0 0
    %1744 = vmatpush1.bf16.msra.mxu0 0
    %1745 = vmatprep.subr.bf16.mxu0 0
    %1746 = vmatpush1.bf16.msra.mxu0 0
    %1747 = vmatprep.subr.bf16.mxu0 0
    %1748 = vmatpush1.bf16.msra.mxu0 0
    %1749 = vmatprep.subr.bf16.mxu0 0
    %1750 = vmatpush1.bf16.msra.mxu0 %v1734
    %1751 = vmatprep.subr.bf16.mxu0 0
    %1752 = vmatpush1.bf16.msra.mxu0 %v1733
    %1753 = vmatprep.subr.bf16.mxu0 0
    %1754 = vmatpush2.bf16.msra.mxu0 0
    %1755 = vmatprep.subr.bf16.mxu0 0
    %1756 = vmatpush2.bf16.msra.mxu0 0
    %1757 = vmatprep.subr.bf16.mxu0 0
    %1758 = vmatpush2.bf16.msra.mxu0 0
    %1759 = vmatprep.subr.bf16.mxu0 0
    %1760 = vmatpush2.bf16.msra.mxu0 0
    %1761 = vmatprep.subr.bf16.mxu0 0
    %1762 = vmatpush2.bf16.msra.mxu0 0
    %1763 = vmatprep.subr.bf16.mxu0 0
    %1764 = vmatpush2.bf16.msra.mxu0 0
    %1765 = vmatprep.subr.bf16.mxu0 0
    %1766 = vmatpush2.bf16.msra.mxu0 0
    %1767 = vmatprep.subr.bf16.mxu0 0
    %1768 = vmatpush2.bf16.msra.mxu0 0
    %1769 = vmatprep.mubr.bf16.mxu0 0
    %1770 = vmatmul.mubr.bf16.gmra.mxu0 %v1603
    %v1771 = vpop.f32.mrf.mxu0
    %v1772 = vadd.f32 %v1723, %v1771
    %v1773 = vpop.f32.mrf.mxu0
    %v1774 = vpop.f32.mrf.mxu0
    %v1775 = vadd.f32 %v1723, %v1774
    %v1776 = vpop.f32.mrf.mxu0
    %1777 = vdwg.mxu0
    %v1778 = vpack.c.bf16 %v1640, %v1640
    %v1779 = vpack.c.bf16 %v1643, %v1643
    %v1780 = vpack.c.bf16 %v1706, %v1706
    %v1781 = vpack.c.bf16 %v1709, %v1709
    %v1782 = vpack.c.bf16 %v1772, %v1772
    %v1783 = vpack.c.bf16 %v1775, %v1775
    %v1785 = vsel %vm329, %v1778, 0
    %v1788 = vsel %vm329, %v1780, 0
    %1790 = vmatprep.subr.bf16.mxu0 0
    %1791 = vmatpush1.bf16.xpose.msra.mxu0 0
    %1792 = vmatprep.subr.bf16.mxu0 0
    %1793 = vmatpush1.bf16.xpose.msra.mxu0 0
    %1794 = vmatprep.subr.bf16.mxu0 0
    %1795 = vmatpush1.bf16.xpose.msra.mxu0 0
    %1796 = vmatprep.subr.bf16.mxu0 0
    %1797 = vmatpush1.bf16.xpose.msra.mxu0 0
    %1798 = vmatprep.subr.bf16.mxu0 0
    %1799 = vmatpush1.bf16.xpose.msra.mxu0 0
    %1800 = vmatprep.subr.bf16.mxu0 0
    %1801 = vmatpush1.bf16.xpose.msra.mxu0 0
    %1802 = vmatprep.subr.bf16.mxu0 0
    %1803 = vmatpush1.bf16.xpose.msra.mxu0 0
    %1804 = vmatprep.subr.bf16.mxu0 0
    %1805 = vmatpush1.bf16.xpose.msra.mxu0 %v1788
    %1806 = vmatprep.subr.bf16.mxu0 0
    %1807 = vmatpush2.bf16.xpose.msra.mxu0 0
    %1808 = vmatprep.subr.bf16.mxu0 0
    %1809 = vmatpush2.bf16.xpose.msra.mxu0 0
    %1810 = vmatprep.subr.bf16.mxu0 0
    %1811 = vmatpush2.bf16.xpose.msra.mxu0 0
    %1812 = vmatprep.subr.bf16.mxu0 0
    %1813 = vmatpush2.bf16.xpose.msra.mxu0 0
    %1814 = vmatprep.subr.bf16.mxu0 0
    %1815 = vmatpush2.bf16.xpose.msra.mxu0 0
    %1816 = vmatprep.subr.bf16.mxu0 0
    %1817 = vmatpush2.bf16.xpose.msra.mxu0 0
    %1818 = vmatprep.subr.bf16.mxu0 0
    %1819 = vmatpush2.bf16.xpose.msra.mxu0 0
    %1820 = vmatprep.subr.bf16.mxu0 0
    %1821 = vmatpush2.bf16.xpose.msra.mxu0 0
    %1822 = vmatprep.mubr.bf16.mxu0 0
    %1823 = vmatmul.mubr.bf16.gmra.mxu0 %v1785
    %v1824 = vpop.f32.mrf.mxu0
    %v1825 = vadd.f32 0.0, %v1824
    %v1826 = vpop.f32.mrf.mxu0
    %v1827 = vpop.f32.mrf.mxu0
    %v1828 = vpop.f32.mrf.mxu0
    %1829 = vdwg.mxu0
    %v1831 = vsel %vm329, %v1779, 0
    %v1834 = vsel %vm329, %v1781, 0
    %1836 = vmatprep.subr.bf16.mxu0 0
    %1837 = vmatpush1.bf16.xpose.msra.mxu0 0
    %1838 = vmatprep.subr.bf16.mxu0 0
    %1839 = vmatpush1.bf16.xpose.msra.mxu0 0
    %1840 = vmatprep.subr.bf16.mxu0 0
    %1841 = vmatpush1.bf16.xpose.msra.mxu0 0
    %1842 = vmatprep.subr.bf16.mxu0 0
    %1843 = vmatpush1.bf16.xpose.msra.mxu0 0
    %1844 = vmatprep.subr.bf16.mxu0 0
    %1845 = vmatpush1.bf16.xpose.msra.mxu0 0
    %1846 = vmatprep.subr.bf16.mxu0 0
    %1847 = vmatpush1.bf16.xpose.msra.mxu0 0
    %1848 = vmatprep.subr.bf16.mxu0 0
    %1849 = vmatpush1.bf16.xpose.msra.mxu0 0
    %1850 = vmatprep.subr.bf16.mxu0 0
    %1851 = vmatpush1.bf16.xpose.msra.mxu0 %v1834
    %1852 = vmatprep.subr.bf16.mxu0 0
    %1853 = vmatpush2.bf16.xpose.msra.mxu0 0
    %1854 = vmatprep.subr.bf16.mxu0 0
    %1855 = vmatpush2.bf16.xpose.msra.mxu0 0
    %1856 = vmatprep.subr.bf16.mxu0 0
    %1857 = vmatpush2.bf16.xpose.msra.mxu0 0
    %1858 = vmatprep.subr.bf16.mxu0 0
    %1859 = vmatpush2.bf16.xpose.msra.mxu0 0
    %1860 = vmatprep.subr.bf16.mxu0 0
    %1861 = vmatpush2.bf16.xpose.msra.mxu0 0
    %1862 = vmatprep.subr.bf16.mxu0 0
    %1863 = vmatpush2.bf16.xpose.msra.mxu0 0
    %1864 = vmatprep.subr.bf16.mxu0 0
    %1865 = vmatpush2.bf16.xpose.msra.mxu0 0
    %1866 = vmatprep.subr.bf16.mxu0 0
    %1867 = vmatpush2.bf16.xpose.msra.mxu0 0
    %1868 = vmatprep.mubr.bf16.mxu0 0
    %1869 = vmatmul.mubr.bf16.gmra.mxu0 %v1831
    %v1870 = vpop.f32.mrf.mxu0
    %v1871 = vadd.f32 0.0, %v1870
    %v1872 = vpop.f32.mrf.mxu0
    %v1873 = vpop.f32.mrf.mxu0
    %v1874 = vpop.f32.mrf.mxu0
    %1875 = vdwg.mxu0
    %v1876 = vmul.f32 %v1825, 0.35355338
    %v1877 = vmul.f32 %v1871, 0.35355338
    %v1878 = vsel %vm329, %v1876, -inf
    %1879 = vmax.xlane.f32.xlu0 %v1878
    %v1880 = vpop.xlane.xlu0 %1879
    %v1881 = vsel %vm329, %v1877, -inf
    %1882 = vmax.xlane.f32.xlu0 %v1881
    %v1883 = vpop.xlane.xlu0 %1882
    %v1884 = vsub.f32 %v1876, %v1880
    %v1885 = vsub.f32 %v1877, %v1883
    %v1886 = vmul.f32 %v1884, 1.442695
    %v1887 = vpow.pop %v1886
    %v1888 = vmul.f32 %v1885, 1.442695
    %v1889 = vpow.pop %v1888
    %v1890 = vsel %vm329, %v1887, 0.0
    %1891 = vadd.xlane.f32.xlu0 %v1890
    %v1892 = vpop.xlane.xlu0 %1891
    %v1893 = vsel %vm329, %v1889, 0.0
    %1894 = vadd.xlane.f32.xlu0 %v1893
    %v1895 = vpop.xlane.xlu0 %1894
    %v1896 = vrcp.pop %v1892
    %v1897 = vrcp.pop %v1895
    %v1898 = vmul.f32 %v1887, %v1896
    %v1899 = vmul.f32 %v1889, %v1897
    %v1900 = vpack.c.bf16 %v1898, %v1898
    %v1901 = vpack.c.bf16 %v1899, %v1899
    %v1903 = vsel %vm329, %v1900, 0
    %v1906 = vsel %vm451, %v1782, 0
    %1908 = vmatprep.subr.bf16.mxu0 0
    %1909 = vmatpush1.bf16.msra.mxu0 0
    %1910 = vmatprep.subr.bf16.mxu0 0
    %1911 = vmatpush1.bf16.msra.mxu0 0
    %1912 = vmatprep.subr.bf16.mxu0 0
    %1913 = vmatpush1.bf16.msra.mxu0 0
    %1914 = vmatprep.subr.bf16.mxu0 0
    %1915 = vmatpush1.bf16.msra.mxu0 0
    %1916 = vmatprep.subr.bf16.mxu0 0
    %1917 = vmatpush1.bf16.msra.mxu0 0
    %1918 = vmatprep.subr.bf16.mxu0 0
    %1919 = vmatpush1.bf16.msra.mxu0 0
    %1920 = vmatprep.subr.bf16.mxu0 0
    %1921 = vmatpush1.bf16.msra.mxu0 0
    %1922 = vmatprep.subr.bf16.mxu0 0
    %1923 = vmatpush1.bf16.msra.mxu0 %v1906
    %1924 = vmatprep.subr.bf16.mxu0 0
    %1925 = vmatpush2.bf16.msra.mxu0 0
    %1926 = vmatprep.subr.bf16.mxu0 0
    %1927 = vmatpush2.bf16.msra.mxu0 0
    %1928 = vmatprep.subr.bf16.mxu0 0
    %1929 = vmatpush2.bf16.msra.mxu0 0
    %1930 = vmatprep.subr.bf16.mxu0 0
    %1931 = vmatpush2.bf16.msra.mxu0 0
    %1932 = vmatprep.subr.bf16.mxu0 0
    %1933 = vmatpush2.bf16.msra.mxu0 0
    %1934 = vmatprep.subr.bf16.mxu0 0
    %1935 = vmatpush2.bf16.msra.mxu0 0
    %1936 = vmatprep.subr.bf16.mxu0 0
    %1937 = vmatpush2.bf16.msra.mxu0 0
    %1938 = vmatprep.subr.bf16.mxu0 0
    %1939 = vmatpush2.bf16.msra.mxu0 0
    %1940 = vmatprep.mubr.bf16.mxu0 0
    %1941 = vmatmul.mubr.bf16.gmra.mxu0 %v1903
    %v1942 = vpop.f32.mrf.mxu0
    %v1943 = vadd.f32 0.0, %v1942
    %v1944 = vpop.f32.mrf.mxu0
    %v1945 = vpop.f32.mrf.mxu0
    %v1946 = vpop.f32.mrf.mxu0
    %1947 = vdwg.mxu0
    %v1949 = vsel %vm329, %v1901, 0
    %v1952 = vsel %vm451, %v1783, 0
    %1954 = vmatprep.subr.bf16.mxu0 0
    %1955 = vmatpush1.bf16.msra.mxu0 0
    %1956 = vmatprep.subr.bf16.mxu0 0
    %1957 = vmatpush1.bf16.msra.mxu0 0
    %1958 = vmatprep.subr.bf16.mxu0 0
    %1959 = vmatpush1.bf16.msra.mxu0 0
    %1960 = vmatprep.subr.bf16.mxu0 0
    %1961 = vmatpush1.bf16.msra.mxu0 0
    %1962 = vmatprep.subr.bf16.mxu0 0
    %1963 = vmatpush1.bf16.msra.mxu0 0
    %1964 = vmatprep.subr.bf16.mxu0 0
    %1965 = vmatpush1.bf16.msra.mxu0 0
    %1966 = vmatprep.subr.bf16.mxu0 0
    %1967 = vmatpush1.bf16.msra.mxu0 0
    %1968 = vmatprep.subr.bf16.mxu0 0
    %1969 = vmatpush1.bf16.msra.mxu0 %v1952
    %1970 = vmatprep.subr.bf16.mxu0 0
    %1971 = vmatpush2.bf16.msra.mxu0 0
    %1972 = vmatprep.subr.bf16.mxu0 0
    %1973 = vmatpush2.bf16.msra.mxu0 0
    %1974 = vmatprep.subr.bf16.mxu0 0
    %1975 = vmatpush2.bf16.msra.mxu0 0
    %1976 = vmatprep.subr.bf16.mxu0 0
    %1977 = vmatpush2.bf16.msra.mxu0 0
    %1978 = vmatprep.subr.bf16.mxu0 0
    %1979 = vmatpush2.bf16.msra.mxu0 0
    %1980 = vmatprep.subr.bf16.mxu0 0
    %1981 = vmatpush2.bf16.msra.mxu0 0
    %1982 = vmatprep.subr.bf16.mxu0 0
    %1983 = vmatpush2.bf16.msra.mxu0 0
    %1984 = vmatprep.subr.bf16.mxu0 0
    %1985 = vmatpush2.bf16.msra.mxu0 0
    %1986 = vmatprep.mubr.bf16.mxu0 0
    %1987 = vmatmul.mubr.bf16.gmra.mxu0 %v1949
    %v1988 = vpop.f32.mrf.mxu0
    %v1989 = vadd.f32 0.0, %v1988
    %v1990 = vpop.f32.mrf.mxu0
    %v1991 = vpop.f32.mrf.mxu0
    %v1992 = vpop.f32.mrf.mxu0
    %1993 = vdwg.mxu0
    %1995 = vrot.lane.b32.xlu0 %v1778, 120
    %v1996 = vpop.permute.xlu0 %1995
    %1998 = vrot.lane.b32.xlu0 %v1780, 120
    %v1999 = vpop.permute.xlu0 %1998
    %v2001 = vsel %vm329, %v1996, 0
    %v2004 = vsel %vm329, %v1999, 0
    %2006 = vmatprep.subr.bf16.mxu0 0
    %2007 = vmatpush1.bf16.xpose.msra.mxu0 0
    %2008 = vmatprep.subr.bf16.mxu0 0
    %2009 = vmatpush1.bf16.xpose.msra.mxu0 0
    %2010 = vmatprep.subr.bf16.mxu0 0
    %2011 = vmatpush1.bf16.xpose.msra.mxu0 0
    %2012 = vmatprep.subr.bf16.mxu0 0
    %2013 = vmatpush1.bf16.xpose.msra.mxu0 0
    %2014 = vmatprep.subr.bf16.mxu0 0
    %2015 = vmatpush1.bf16.xpose.msra.mxu0 0
    %2016 = vmatprep.subr.bf16.mxu0 0
    %2017 = vmatpush1.bf16.xpose.msra.mxu0 0
    %2018 = vmatprep.subr.bf16.mxu0 0
    %2019 = vmatpush1.bf16.xpose.msra.mxu0 0
    %2020 = vmatprep.subr.bf16.mxu0 0
    %2021 = vmatpush1.bf16.xpose.msra.mxu0 %v2004
    %2022 = vmatprep.subr.bf16.mxu0 0
    %2023 = vmatpush2.bf16.xpose.msra.mxu0 0
    %2024 = vmatprep.subr.bf16.mxu0 0
    %2025 = vmatpush2.bf16.xpose.msra.mxu0 0
    %2026 = vmatprep.subr.bf16.mxu0 0
    %2027 = vmatpush2.bf16.xpose.msra.mxu0 0
    %2028 = vmatprep.subr.bf16.mxu0 0
    %2029 = vmatpush2.bf16.xpose.msra.mxu0 0
    %2030 = vmatprep.subr.bf16.mxu0 0
    %2031 = vmatpush2.bf16.xpose.msra.mxu0 0
    %2032 = vmatprep.subr.bf16.mxu0 0
    %2033 = vmatpush2.bf16.xpose.msra.mxu0 0
    %2034 = vmatprep.subr.bf16.mxu0 0
    %2035 = vmatpush2.bf16.xpose.msra.mxu0 0
    %2036 = vmatprep.subr.bf16.mxu0 0
    %2037 = vmatpush2.bf16.xpose.msra.mxu0 0
    %2038 = vmatprep.mubr.bf16.mxu0 0
    %2039 = vmatmul.mubr.bf16.gmra.mxu0 %v2001
    %v2040 = vpop.f32.mrf.mxu0
    %v2041 = vadd.f32 0.0, %v2040
    %v2042 = vpop.f32.mrf.mxu0
    %v2043 = vpop.f32.mrf.mxu0
    %v2044 = vpop.f32.mrf.mxu0
    %2045 = vdwg.mxu0
    %2047 = vrot.lane.b32.xlu0 %v1779, 120
    %v2048 = vpop.permute.xlu0 %2047
    %2050 = vrot.lane.b32.xlu0 %v1781, 120
    %v2051 = vpop.permute.xlu0 %2050
    %v2053 = vsel %vm329, %v2048, 0
    %v2056 = vsel %vm329, %v2051, 0
    %2058 = vmatprep.subr.bf16.mxu0 0
    %2059 = vmatpush1.bf16.xpose.msra.mxu0 0
    %2060 = vmatprep.subr.bf16.mxu0 0
    %2061 = vmatpush1.bf16.xpose.msra.mxu0 0
    %2062 = vmatprep.subr.bf16.mxu0 0
    %2063 = vmatpush1.bf16.xpose.msra.mxu0 0
    %2064 = vmatprep.subr.bf16.mxu0 0
    %2065 = vmatpush1.bf16.xpose.msra.mxu0 0
    %2066 = vmatprep.subr.bf16.mxu0 0
    %2067 = vmatpush1.bf16.xpose.msra.mxu0 0
    %2068 = vmatprep.subr.bf16.mxu0 0
    %2069 = vmatpush1.bf16.xpose.msra.mxu0 0
    %2070 = vmatprep.subr.bf16.mxu0 0
    %2071 = vmatpush1.bf16.xpose.msra.mxu0 0
    %2072 = vmatprep.subr.bf16.mxu0 0
    %2073 = vmatpush1.bf16.xpose.msra.mxu0 %v2056
    %2074 = vmatprep.subr.bf16.mxu0 0
    %2075 = vmatpush2.bf16.xpose.msra.mxu0 0
    %2076 = vmatprep.subr.bf16.mxu0 0
    %2077 = vmatpush2.bf16.xpose.msra.mxu0 0
    %2078 = vmatprep.subr.bf16.mxu0 0
    %2079 = vmatpush2.bf16.xpose.msra.mxu0 0
    %2080 = vmatprep.subr.bf16.mxu0 0
    %2081 = vmatpush2.bf16.xpose.msra.mxu0 0
    %2082 = vmatprep.subr.bf16.mxu0 0
    %2083 = vmatpush2.bf16.xpose.msra.mxu0 0
    %2084 = vmatprep.subr.bf16.mxu0 0
    %2085 = vmatpush2.bf16.xpose.msra.mxu0 0
    %2086 = vmatprep.subr.bf16.mxu0 0
    %2087 = vmatpush2.bf16.xpose.msra.mxu0 0
    %2088 = vmatprep.subr.bf16.mxu0 0
    %2089 = vmatpush2.bf16.xpose.msra.mxu0 0
    %2090 = vmatprep.mubr.bf16.mxu0 0
    %2091 = vmatmul.mubr.bf16.gmra.mxu0 %v2053
    %v2092 = vpop.f32.mrf.mxu0
    %v2093 = vadd.f32 0.0, %v2092
    %v2094 = vpop.f32.mrf.mxu0
    %v2095 = vpop.f32.mrf.mxu0
    %v2096 = vpop.f32.mrf.mxu0
    %2097 = vdwg.mxu0
    %v2098 = vmul.f32 %v2041, 0.35355338
    %v2099 = vmul.f32 %v2093, 0.35355338
    %v2100 = vsel %vm329, %v2098, -inf
    %2101 = vmax.xlane.f32.xlu0 %v2100
    %v2102 = vpop.xlane.xlu0 %2101
    %v2103 = vsel %vm329, %v2099, -inf
    %2104 = vmax.xlane.f32.xlu0 %v2103
    %v2105 = vpop.xlane.xlu0 %2104
    %v2106 = vsub.f32 %v2098, %v2102
    %v2107 = vsub.f32 %v2099, %v2105
    %v2108 = vmul.f32 %v2106, 1.442695
    %v2109 = vpow.pop %v2108
    %v2110 = vmul.f32 %v2107, 1.442695
    %v2111 = vpow.pop %v2110
    %v2112 = vsel %vm329, %v2109, 0.0
    %2113 = vadd.xlane.f32.xlu0 %v2112
    %v2114 = vpop.xlane.xlu0 %2113
    %v2115 = vsel %vm329, %v2111, 0.0
    %2116 = vadd.xlane.f32.xlu0 %v2115
    %v2117 = vpop.xlane.xlu0 %2116
    %v2118 = vrcp.pop %v2114
    %v2119 = vrcp.pop %v2117
    %v2120 = vmul.f32 %v2109, %v2118
    %v2121 = vmul.f32 %v2111, %v2119
    %v2122 = vpack.c.bf16 %v2120, %v2120
    %v2123 = vpack.c.bf16 %v2121, %v2121
    %2125 = vrot.lane.b32.xlu0 %v1782, 120
    %v2126 = vpop.permute.xlu0 %2125
    %v2128 = vsel %vm329, %v2122, 0
    %v2131 = vsel %vm451, %v2126, 0
    %2133 = vmatprep.subr.bf16.mxu0 0
    %2134 = vmatpush1.bf16.msra.mxu0 0
    %2135 = vmatprep.subr.bf16.mxu0 0
    %2136 = vmatpush1.bf16.msra.mxu0 0
    %2137 = vmatprep.subr.bf16.mxu0 0
    %2138 = vmatpush1.bf16.msra.mxu0 0
    %2139 = vmatprep.subr.bf16.mxu0 0
    %2140 = vmatpush1.bf16.msra.mxu0 0
    %2141 = vmatprep.subr.bf16.mxu0 0
    %2142 = vmatpush1.bf16.msra.mxu0 0
    %2143 = vmatprep.subr.bf16.mxu0 0
    %2144 = vmatpush1.bf16.msra.mxu0 0
    %2145 = vmatprep.subr.bf16.mxu0 0
    %2146 = vmatpush1.bf16.msra.mxu0 0
    %2147 = vmatprep.subr.bf16.mxu0 0
    %2148 = vmatpush1.bf16.msra.mxu0 %v2131
    %2149 = vmatprep.subr.bf16.mxu0 0
    %2150 = vmatpush2.bf16.msra.mxu0 0
    %2151 = vmatprep.subr.bf16.mxu0 0
    %2152 = vmatpush2.bf16.msra.mxu0 0
    %2153 = vmatprep.subr.bf16.mxu0 0
    %2154 = vmatpush2.bf16.msra.mxu0 0
    %2155 = vmatprep.subr.bf16.mxu0 0
    %2156 = vmatpush2.bf16.msra.mxu0 0
    %2157 = vmatprep.subr.bf16.mxu0 0
    %2158 = vmatpush2.bf16.msra.mxu0 0
    %2159 = vmatprep.subr.bf16.mxu0 0
    %2160 = vmatpush2.bf16.msra.mxu0 0
    %2161 = vmatprep.subr.bf16.mxu0 0
    %2162 = vmatpush2.bf16.msra.mxu0 0
    %2163 = vmatprep.subr.bf16.mxu0 0
    %2164 = vmatpush2.bf16.msra.mxu0 0
    %2165 = vmatprep.mubr.bf16.mxu0 0
    %2166 = vmatmul.mubr.bf16.gmra.mxu0 %v2128
    %v2167 = vpop.f32.mrf.mxu0
    %v2168 = vadd.f32 0.0, %v2167
    %v2169 = vpop.f32.mrf.mxu0
    %v2170 = vpop.f32.mrf.mxu0
    %v2171 = vpop.f32.mrf.mxu0
    %2172 = vdwg.mxu0
    %2174 = vrot.lane.b32.xlu0 %v1783, 120
    %v2175 = vpop.permute.xlu0 %2174
    %v2177 = vsel %vm329, %v2123, 0
    %v2180 = vsel %vm451, %v2175, 0
    %2182 = vmatprep.subr.bf16.mxu0 0
    %2183 = vmatpush1.bf16.msra.mxu0 0
    %2184 = vmatprep.subr.bf16.mxu0 0
    %2185 = vmatpush1.bf16.msra.mxu0 0
    %2186 = vmatprep.subr.bf16.mxu0 0
    %2187 = vmatpush1.bf16.msra.mxu0 0
    %2188 = vmatprep.subr.bf16.mxu0 0
    %2189 = vmatpush1.bf16.msra.mxu0 0
    %2190 = vmatprep.subr.bf16.mxu0 0
    %2191 = vmatpush1.bf16.msra.mxu0 0
    %2192 = vmatprep.subr.bf16.mxu0 0
    %2193 = vmatpush1.bf16.msra.mxu0 0
    %2194 = vmatprep.subr.bf16.mxu0 0
    %2195 = vmatpush1.bf16.msra.mxu0 0
    %2196 = vmatprep.subr.bf16.mxu0 0
    %2197 = vmatpush1.bf16.msra.mxu0 %v2180
    %2198 = vmatprep.subr.bf16.mxu0 0
    %2199 = vmatpush2.bf16.msra.mxu0 0
    %2200 = vmatprep.subr.bf16.mxu0 0
    %2201 = vmatpush2.bf16.msra.mxu0 0
    %2202 = vmatprep.subr.bf16.mxu0 0
    %2203 = vmatpush2.bf16.msra.mxu0 0
    %2204 = vmatprep.subr.bf16.mxu0 0
    %2205 = vmatpush2.bf16.msra.mxu0 0
    %2206 = vmatprep.subr.bf16.mxu0 0
    %2207 = vmatpush2.bf16.msra.mxu0 0
    %2208 = vmatprep.subr.bf16.mxu0 0
    %2209 = vmatpush2.bf16.msra.mxu0 0
    %2210 = vmatprep.subr.bf16.mxu0 0
    %2211 = vmatpush2.bf16.msra.mxu0 0
    %2212 = vmatprep.subr.bf16.mxu0 0
    %2213 = vmatpush2.bf16.msra.mxu0 0
    %2214 = vmatprep.mubr.bf16.mxu0 0
    %2215 = vmatmul.mubr.bf16.gmra.mxu0 %v2177
    %v2216 = vpop.f32.mrf.mxu0
    %v2217 = vadd.f32 0.0, %v2216
    %v2218 = vpop.f32.mrf.mxu0
    %v2219 = vpop.f32.mrf.mxu0
    %v2220 = vpop.f32.mrf.mxu0
    %2221 = vdwg.mxu0
    %2222 = vrot.lane.b32.xlu0 %v1778, 112
    %v2223 = vpop.permute.xlu0 %2222
    %2224 = vrot.lane.b32.xlu0 %v1780, 112
    %v2225 = vpop.permute.xlu0 %2224
    %v2227 = vsel %vm329, %v2223, 0
    %v2230 = vsel %vm329, %v2225, 0
    %2232 = vmatprep.subr.bf16.mxu0 0
    %2233 = vmatpush1.bf16.xpose.msra.mxu0 0
    %2234 = vmatprep.subr.bf16.mxu0 0
    %2235 = vmatpush1.bf16.xpose.msra.mxu0 0
    %2236 = vmatprep.subr.bf16.mxu0 0
    %2237 = vmatpush1.bf16.xpose.msra.mxu0 0
    %2238 = vmatprep.subr.bf16.mxu0 0
    %2239 = vmatpush1.bf16.xpose.msra.mxu0 0
    %2240 = vmatprep.subr.bf16.mxu0 0
    %2241 = vmatpush1.bf16.xpose.msra.mxu0 0
    %2242 = vmatprep.subr.bf16.mxu0 0
    %2243 = vmatpush1.bf16.xpose.msra.mxu0 0
    %2244 = vmatprep.subr.bf16.mxu0 0
    %2245 = vmatpush1.bf16.xpose.msra.mxu0 0
    %2246 = vmatprep.subr.bf16.mxu0 0
    %2247 = vmatpush1.bf16.xpose.msra.mxu0 %v2230
    %2248 = vmatprep.subr.bf16.mxu0 0
    %2249 = vmatpush2.bf16.xpose.msra.mxu0 0
    %2250 = vmatprep.subr.bf16.mxu0 0
    %2251 = vmatpush2.bf16.xpose.msra.mxu0 0
    %2252 = vmatprep.subr.bf16.mxu0 0
    %2253 = vmatpush2.bf16.xpose.msra.mxu0 0
    %2254 = vmatprep.subr.bf16.mxu0 0
    %2255 = vmatpush2.bf16.xpose.msra.mxu0 0
    %2256 = vmatprep.subr.bf16.mxu0 0
    %2257 = vmatpush2.bf16.xpose.msra.mxu0 0
    %2258 = vmatprep.subr.bf16.mxu0 0
    %2259 = vmatpush2.bf16.xpose.msra.mxu0 0
    %2260 = vmatprep.subr.bf16.mxu0 0
    %2261 = vmatpush2.bf16.xpose.msra.mxu0 0
    %2262 = vmatprep.subr.bf16.mxu0 0
    %2263 = vmatpush2.bf16.xpose.msra.mxu0 0
    %2264 = vmatprep.mubr.bf16.mxu0 0
    %2265 = vmatmul.mubr.bf16.gmra.mxu0 %v2227
    %v2266 = vpop.f32.mrf.mxu0
    %v2267 = vadd.f32 0.0, %v2266
    %v2268 = vpop.f32.mrf.mxu0
    %v2269 = vpop.f32.mrf.mxu0
    %v2270 = vpop.f32.mrf.mxu0
    %2271 = vdwg.mxu0
    %2272 = vrot.lane.b32.xlu0 %v1779, 112
    %v2273 = vpop.permute.xlu0 %2272
    %2274 = vrot.lane.b32.xlu0 %v1781, 112
    %v2275 = vpop.permute.xlu0 %2274
    %v2277 = vsel %vm329, %v2273, 0
    %v2280 = vsel %vm329, %v2275, 0
    %2282 = vmatprep.subr.bf16.mxu0 0
    %2283 = vmatpush1.bf16.xpose.msra.mxu0 0
    %2284 = vmatprep.subr.bf16.mxu0 0
    %2285 = vmatpush1.bf16.xpose.msra.mxu0 0
    %2286 = vmatprep.subr.bf16.mxu0 0
    %2287 = vmatpush1.bf16.xpose.msra.mxu0 0
    %2288 = vmatprep.subr.bf16.mxu0 0
    %2289 = vmatpush1.bf16.xpose.msra.mxu0 0
    %2290 = vmatprep.subr.bf16.mxu0 0
    %2291 = vmatpush1.bf16.xpose.msra.mxu0 0
    %2292 = vmatprep.subr.bf16.mxu0 0
    %2293 = vmatpush1.bf16.xpose.msra.mxu0 0
    %2294 = vmatprep.subr.bf16.mxu0 0
    %2295 = vmatpush1.bf16.xpose.msra.mxu0 0
    %2296 = vmatprep.subr.bf16.mxu0 0
    %2297 = vmatpush1.bf16.xpose.msra.mxu0 %v2280
    %2298 = vmatprep.subr.bf16.mxu0 0
    %2299 = vmatpush2.bf16.xpose.msra.mxu0 0
    %2300 = vmatprep.subr.bf16.mxu0 0
    %2301 = vmatpush2.bf16.xpose.msra.mxu0 0
    %2302 = vmatprep.subr.bf16.mxu0 0
    %2303 = vmatpush2.bf16.xpose.msra.mxu0 0
    %2304 = vmatprep.subr.bf16.mxu0 0
    %2305 = vmatpush2.bf16.xpose.msra.mxu0 0
    %2306 = vmatprep.subr.bf16.mxu0 0
    %2307 = vmatpush2.bf16.xpose.msra.mxu0 0
    %2308 = vmatprep.subr.bf16.mxu0 0
    %2309 = vmatpush2.bf16.xpose.msra.mxu0 0
    %2310 = vmatprep.subr.bf16.mxu0 0
    %2311 = vmatpush2.bf16.xpose.msra.mxu0 0
    %2312 = vmatprep.subr.bf16.mxu0 0
    %2313 = vmatpush2.bf16.xpose.msra.mxu0 0
    %2314 = vmatprep.mubr.bf16.mxu0 0
    %2315 = vmatmul.mubr.bf16.gmra.mxu0 %v2277
    %v2316 = vpop.f32.mrf.mxu0
    %v2317 = vadd.f32 0.0, %v2316
    %v2318 = vpop.f32.mrf.mxu0
    %v2319 = vpop.f32.mrf.mxu0
    %v2320 = vpop.f32.mrf.mxu0
    %2321 = vdwg.mxu0
    %v2322 = vmul.f32 %v2267, 0.35355338
    %v2323 = vmul.f32 %v2317, 0.35355338
    %v2324 = vsel %vm329, %v2322, -inf
    %2325 = vmax.xlane.f32.xlu0 %v2324
    %v2326 = vpop.xlane.xlu0 %2325
    %v2327 = vsel %vm329, %v2323, -inf
    %2328 = vmax.xlane.f32.xlu0 %v2327
    %v2329 = vpop.xlane.xlu0 %2328
    %v2330 = vsub.f32 %v2322, %v2326
    %v2331 = vsub.f32 %v2323, %v2329
    %v2332 = vmul.f32 %v2330, 1.442695
    %v2333 = vpow.pop %v2332
    %v2334 = vmul.f32 %v2331, 1.442695
    %v2335 = vpow.pop %v2334
    %v2336 = vsel %vm329, %v2333, 0.0
    %2337 = vadd.xlane.f32.xlu0 %v2336
    %v2338 = vpop.xlane.xlu0 %2337
    %v2339 = vsel %vm329, %v2335, 0.0
    %2340 = vadd.xlane.f32.xlu0 %v2339
    %v2341 = vpop.xlane.xlu0 %2340
    %v2342 = vrcp.pop %v2338
    %v2343 = vrcp.pop %v2341
    %v2344 = vmul.f32 %v2333, %v2342
    %v2345 = vmul.f32 %v2335, %v2343
    %v2346 = vpack.c.bf16 %v2344, %v2344
    %v2347 = vpack.c.bf16 %v2345, %v2345
    %2348 = vrot.lane.b32.xlu0 %v1782, 112
    %v2349 = vpop.permute.xlu0 %2348
    %v2351 = vsel %vm329, %v2346, 0
    %v2354 = vsel %vm451, %v2349, 0
    %2356 = vmatprep.subr.bf16.mxu0 0
    %2357 = vmatpush1.bf16.msra.mxu0 0
    %2358 = vmatprep.subr.bf16.mxu0 0
    %2359 = vmatpush1.bf16.msra.mxu0 0
    %2360 = vmatprep.subr.bf16.mxu0 0
    %2361 = vmatpush1.bf16.msra.mxu0 0
    %2362 = vmatprep.subr.bf16.mxu0 0
    %2363 = vmatpush1.bf16.msra.mxu0 0
    %2364 = vmatprep.subr.bf16.mxu0 0
    %2365 = vmatpush1.bf16.msra.mxu0 0
    %2366 = vmatprep.subr.bf16.mxu0 0
    %2367 = vmatpush1.bf16.msra.mxu0 0
    %2368 = vmatprep.subr.bf16.mxu0 0
    %2369 = vmatpush1.bf16.msra.mxu0 0
    %2370 = vmatprep.subr.bf16.mxu0 0
    %2371 = vmatpush1.bf16.msra.mxu0 %v2354
    %2372 = vmatprep.subr.bf16.mxu0 0
    %2373 = vmatpush2.bf16.msra.mxu0 0
    %2374 = vmatprep.subr.bf16.mxu0 0
    %2375 = vmatpush2.bf16.msra.mxu0 0
    %2376 = vmatprep.subr.bf16.mxu0 0
    %2377 = vmatpush2.bf16.msra.mxu0 0
    %2378 = vmatprep.subr.bf16.mxu0 0
    %2379 = vmatpush2.bf16.msra.mxu0 0
    %2380 = vmatprep.subr.bf16.mxu0 0
    %2381 = vmatpush2.bf16.msra.mxu0 0
    %2382 = vmatprep.subr.bf16.mxu0 0
    %2383 = vmatpush2.bf16.msra.mxu0 0
    %2384 = vmatprep.subr.bf16.mxu0 0
    %2385 = vmatpush2.bf16.msra.mxu0 0
    %2386 = vmatprep.subr.bf16.mxu0 0
    %2387 = vmatpush2.bf16.msra.mxu0 0
    %2388 = vmatprep.mubr.bf16.mxu0 0
    %2389 = vmatmul.mubr.bf16.gmra.mxu0 %v2351
    %v2390 = vpop.f32.mrf.mxu0
    %v2391 = vadd.f32 0.0, %v2390
    %v2392 = vpop.f32.mrf.mxu0
    %v2393 = vpop.f32.mrf.mxu0
    %v2394 = vpop.f32.mrf.mxu0
    %2395 = vdwg.mxu0
    %2396 = vrot.lane.b32.xlu0 %v1783, 112
    %v2397 = vpop.permute.xlu0 %2396
    %v2399 = vsel %vm329, %v2347, 0
    %v2402 = vsel %vm451, %v2397, 0
    %2404 = vmatprep.subr.bf16.mxu0 0
    %2405 = vmatpush1.bf16.msra.mxu0 0
    %2406 = vmatprep.subr.bf16.mxu0 0
    %2407 = vmatpush1.bf16.msra.mxu0 0
    %2408 = vmatprep.subr.bf16.mxu0 0
    %2409 = vmatpush1.bf16.msra.mxu0 0
    %2410 = vmatprep.subr.bf16.mxu0 0
    %2411 = vmatpush1.bf16.msra.mxu0 0
    %2412 = vmatprep.subr.bf16.mxu0 0
    %2413 = vmatpush1.bf16.msra.mxu0 0
    %2414 = vmatprep.subr.bf16.mxu0 0
    %2415 = vmatpush1.bf16.msra.mxu0 0
    %2416 = vmatprep.subr.bf16.mxu0 0
    %2417 = vmatpush1.bf16.msra.mxu0 0
    %2418 = vmatprep.subr.bf16.mxu0 0
    %2419 = vmatpush1.bf16.msra.mxu0 %v2402
    %2420 = vmatprep.subr.bf16.mxu0 0
    %2421 = vmatpush2.bf16.msra.mxu0 0
    %2422 = vmatprep.subr.bf16.mxu0 0
    %2423 = vmatpush2.bf16.msra.mxu0 0
    %2424 = vmatprep.subr.bf16.mxu0 0
    %2425 = vmatpush2.bf16.msra.mxu0 0
    %2426 = vmatprep.subr.bf16.mxu0 0
    %2427 = vmatpush2.bf16.msra.mxu0 0
    %2428 = vmatprep.subr.bf16.mxu0 0
    %2429 = vmatpush2.bf16.msra.mxu0 0
    %2430 = vmatprep.subr.bf16.mxu0 0
    %2431 = vmatpush2.bf16.msra.mxu0 0
    %2432 = vmatprep.subr.bf16.mxu0 0
    %2433 = vmatpush2.bf16.msra.mxu0 0
    %2434 = vmatprep.subr.bf16.mxu0 0
    %2435 = vmatpush2.bf16.msra.mxu0 0
    %2436 = vmatprep.mubr.bf16.mxu0 0
    %2437 = vmatmul.mubr.bf16.gmra.mxu0 %v2399
    %v2438 = vpop.f32.mrf.mxu0
    %v2439 = vadd.f32 0.0, %v2438
    %v2440 = vpop.f32.mrf.mxu0
    %v2441 = vpop.f32.mrf.mxu0
    %v2442 = vpop.f32.mrf.mxu0
    %2443 = vdwg.mxu0
    %2444 = vrot.lane.b32.xlu0 %v1778, 104
    %v2445 = vpop.permute.xlu0 %2444
    %2446 = vrot.lane.b32.xlu0 %v1780, 104
    %v2447 = vpop.permute.xlu0 %2446
    %v2449 = vsel %vm329, %v2445, 0
    %v2452 = vsel %vm329, %v2447, 0
    %2454 = vmatprep.subr.bf16.mxu0 0
    %2455 = vmatpush1.bf16.xpose.msra.mxu0 0
    %2456 = vmatprep.subr.bf16.mxu0 0
    %2457 = vmatpush1.bf16.xpose.msra.mxu0 0
    %2458 = vmatprep.subr.bf16.mxu0 0
    %2459 = vmatpush1.bf16.xpose.msra.mxu0 0
    %2460 = vmatprep.subr.bf16.mxu0 0
    %2461 = vmatpush1.bf16.xpose.msra.mxu0 0
    %2462 = vmatprep.subr.bf16.mxu0 0
    %2463 = vmatpush1.bf16.xpose.msra.mxu0 0
    %2464 = vmatprep.subr.bf16.mxu0 0
    %2465 = vmatpush1.bf16.xpose.msra.mxu0 0
    %2466 = vmatprep.subr.bf16.mxu0 0
    %2467 = vmatpush1.bf16.xpose.msra.mxu0 0
    %2468 = vmatprep.subr.bf16.mxu0 0
    %2469 = vmatpush1.bf16.xpose.msra.mxu0 %v2452
    %2470 = vmatprep.subr.bf16.mxu0 0
    %2471 = vmatpush2.bf16.xpose.msra.mxu0 0
    %2472 = vmatprep.subr.bf16.mxu0 0
    %2473 = vmatpush2.bf16.xpose.msra.mxu0 0
    %2474 = vmatprep.subr.bf16.mxu0 0
    %2475 = vmatpush2.bf16.xpose.msra.mxu0 0
    %2476 = vmatprep.subr.bf16.mxu0 0
    %2477 = vmatpush2.bf16.xpose.msra.mxu0 0
    %2478 = vmatprep.subr.bf16.mxu0 0
    %2479 = vmatpush2.bf16.xpose.msra.mxu0 0
    %2480 = vmatprep.subr.bf16.mxu0 0
    %2481 = vmatpush2.bf16.xpose.msra.mxu0 0
    %2482 = vmatprep.subr.bf16.mxu0 0
    %2483 = vmatpush2.bf16.xpose.msra.mxu0 0
    %2484 = vmatprep.subr.bf16.mxu0 0
    %2485 = vmatpush2.bf16.xpose.msra.mxu0 0
    %2486 = vmatprep.mubr.bf16.mxu0 0
    %2487 = vmatmul.mubr.bf16.gmra.mxu0 %v2449
    %v2488 = vpop.f32.mrf.mxu0
    %v2489 = vadd.f32 0.0, %v2488
    %v2490 = vpop.f32.mrf.mxu0
    %v2491 = vpop.f32.mrf.mxu0
    %v2492 = vpop.f32.mrf.mxu0
    %2493 = vdwg.mxu0
    %2494 = vrot.lane.b32.xlu0 %v1779, 104
    %v2495 = vpop.permute.xlu0 %2494
    %2496 = vrot.lane.b32.xlu0 %v1781, 104
    %v2497 = vpop.permute.xlu0 %2496
    %v2499 = vsel %vm329, %v2495, 0
    %v2502 = vsel %vm329, %v2497, 0
    %2504 = vmatprep.subr.bf16.mxu0 0
    %2505 = vmatpush1.bf16.xpose.msra.mxu0 0
    %2506 = vmatprep.subr.bf16.mxu0 0
    %2507 = vmatpush1.bf16.xpose.msra.mxu0 0
    %2508 = vmatprep.subr.bf16.mxu0 0
    %2509 = vmatpush1.bf16.xpose.msra.mxu0 0
    %2510 = vmatprep.subr.bf16.mxu0 0
    %2511 = vmatpush1.bf16.xpose.msra.mxu0 0
    %2512 = vmatprep.subr.bf16.mxu0 0
    %2513 = vmatpush1.bf16.xpose.msra.mxu0 0
    %2514 = vmatprep.subr.bf16.mxu0 0
    %2515 = vmatpush1.bf16.xpose.msra.mxu0 0
    %2516 = vmatprep.subr.bf16.mxu0 0
    %2517 = vmatpush1.bf16.xpose.msra.mxu0 0
    %2518 = vmatprep.subr.bf16.mxu0 0
    %2519 = vmatpush1.bf16.xpose.msra.mxu0 %v2502
    %2520 = vmatprep.subr.bf16.mxu0 0
    %2521 = vmatpush2.bf16.xpose.msra.mxu0 0
    %2522 = vmatprep.subr.bf16.mxu0 0
    %2523 = vmatpush2.bf16.xpose.msra.mxu0 0
    %2524 = vmatprep.subr.bf16.mxu0 0
    %2525 = vmatpush2.bf16.xpose.msra.mxu0 0
    %2526 = vmatprep.subr.bf16.mxu0 0
    %2527 = vmatpush2.bf16.xpose.msra.mxu0 0
    %2528 = vmatprep.subr.bf16.mxu0 0
    %2529 = vmatpush2.bf16.xpose.msra.mxu0 0
    %2530 = vmatprep.subr.bf16.mxu0 0
    %2531 = vmatpush2.bf16.xpose.msra.mxu0 0
    %2532 = vmatprep.subr.bf16.mxu0 0
    %2533 = vmatpush2.bf16.xpose.msra.mxu0 0
    %2534 = vmatprep.subr.bf16.mxu0 0
    %2535 = vmatpush2.bf16.xpose.msra.mxu0 0
    %2536 = vmatprep.mubr.bf16.mxu0 0
    %2537 = vmatmul.mubr.bf16.gmra.mxu0 %v2499
    %v2538 = vpop.f32.mrf.mxu0
    %v2539 = vadd.f32 0.0, %v2538
    %v2540 = vpop.f32.mrf.mxu0
    %v2541 = vpop.f32.mrf.mxu0
    %v2542 = vpop.f32.mrf.mxu0
    %2543 = vdwg.mxu0
    %v2544 = vmul.f32 %v2489, 0.35355338
    %v2545 = vmul.f32 %v2539, 0.35355338
    %v2546 = vsel %vm329, %v2544, -inf
    %2547 = vmax.xlane.f32.xlu0 %v2546
    %v2548 = vpop.xlane.xlu0 %2547
    %v2549 = vsel %vm329, %v2545, -inf
    %2550 = vmax.xlane.f32.xlu0 %v2549
    %v2551 = vpop.xlane.xlu0 %2550
    %v2552 = vsub.f32 %v2544, %v2548
    %v2553 = vsub.f32 %v2545, %v2551
    %v2554 = vmul.f32 %v2552, 1.442695
    %v2555 = vpow.pop %v2554
    %v2556 = vmul.f32 %v2553, 1.442695
    %v2557 = vpow.pop %v2556
    %v2558 = vsel %vm329, %v2555, 0.0
    %2559 = vadd.xlane.f32.xlu0 %v2558
    %v2560 = vpop.xlane.xlu0 %2559
    %v2561 = vsel %vm329, %v2557, 0.0
    %2562 = vadd.xlane.f32.xlu0 %v2561
    %v2563 = vpop.xlane.xlu0 %2562
    %v2564 = vrcp.pop %v2560
    %v2565 = vrcp.pop %v2563
    %v2566 = vmul.f32 %v2555, %v2564
    %v2567 = vmul.f32 %v2557, %v2565
    %v2568 = vpack.c.bf16 %v2566, %v2566
    %v2569 = vpack.c.bf16 %v2567, %v2567
    %2570 = vrot.lane.b32.xlu0 %v1782, 104
    %v2571 = vpop.permute.xlu0 %2570
    %v2573 = vsel %vm329, %v2568, 0
    %v2576 = vsel %vm451, %v2571, 0
    %2578 = vmatprep.subr.bf16.mxu0 0
    %2579 = vmatpush1.bf16.msra.mxu0 0
    %2580 = vmatprep.subr.bf16.mxu0 0
    %2581 = vmatpush1.bf16.msra.mxu0 0
    %2582 = vmatprep.subr.bf16.mxu0 0
    %2583 = vmatpush1.bf16.msra.mxu0 0
    %2584 = vmatprep.subr.bf16.mxu0 0
    %2585 = vmatpush1.bf16.msra.mxu0 0
    %2586 = vmatprep.subr.bf16.mxu0 0
    %2587 = vmatpush1.bf16.msra.mxu0 0
    %2588 = vmatprep.subr.bf16.mxu0 0
    %2589 = vmatpush1.bf16.msra.mxu0 0
    %2590 = vmatprep.subr.bf16.mxu0 0
    %2591 = vmatpush1.bf16.msra.mxu0 0
    %2592 = vmatprep.subr.bf16.mxu0 0
    %2593 = vmatpush1.bf16.msra.mxu0 %v2576
    %2594 = vmatprep.subr.bf16.mxu0 0
    %2595 = vmatpush2.bf16.msra.mxu0 0
    %2596 = vmatprep.subr.bf16.mxu0 0
    %2597 = vmatpush2.bf16.msra.mxu0 0
    %2598 = vmatprep.subr.bf16.mxu0 0
    %2599 = vmatpush2.bf16.msra.mxu0 0
    %2600 = vmatprep.subr.bf16.mxu0 0
    %2601 = vmatpush2.bf16.msra.mxu0 0
    %2602 = vmatprep.subr.bf16.mxu0 0
    %2603 = vmatpush2.bf16.msra.mxu0 0
    %2604 = vmatprep.subr.bf16.mxu0 0
    %2605 = vmatpush2.bf16.msra.mxu0 0
    %2606 = vmatprep.subr.bf16.mxu0 0
    %2607 = vmatpush2.bf16.msra.mxu0 0
    %2608 = vmatprep.subr.bf16.mxu0 0
    %2609 = vmatpush2.bf16.msra.mxu0 0
    %2610 = vmatprep.mubr.bf16.mxu0 0
    %2611 = vmatmul.mubr.bf16.gmra.mxu0 %v2573
    %v2612 = vpop.f32.mrf.mxu0
    %v2613 = vadd.f32 0.0, %v2612
    %v2614 = vpop.f32.mrf.mxu0
    %v2615 = vpop.f32.mrf.mxu0
    %v2616 = vpop.f32.mrf.mxu0
    %2617 = vdwg.mxu0
    %2618 = vrot.lane.b32.xlu0 %v1783, 104
    %v2619 = vpop.permute.xlu0 %2618
    %v2621 = vsel %vm329, %v2569, 0
    %v2624 = vsel %vm451, %v2619, 0
    %2626 = vmatprep.subr.bf16.mxu0 0
    %2627 = vmatpush1.bf16.msra.mxu0 0
    %2628 = vmatprep.subr.bf16.mxu0 0
    %2629 = vmatpush1.bf16.msra.mxu0 0
    %2630 = vmatprep.subr.bf16.mxu0 0
    %2631 = vmatpush1.bf16.msra.mxu0 0
    %2632 = vmatprep.subr.bf16.mxu0 0
    %2633 = vmatpush1.bf16.msra.mxu0 0
    %2634 = vmatprep.subr.bf16.mxu0 0
    %2635 = vmatpush1.bf16.msra.mxu0 0
    %2636 = vmatprep.subr.bf16.mxu0 0
    %2637 = vmatpush1.bf16.msra.mxu0 0
    %2638 = vmatprep.subr.bf16.mxu0 0
    %2639 = vmatpush1.bf16.msra.mxu0 0
    %2640 = vmatprep.subr.bf16.mxu0 0
    %2641 = vmatpush1.bf16.msra.mxu0 %v2624
    %2642 = vmatprep.subr.bf16.mxu0 0
    %2643 = vmatpush2.bf16.msra.mxu0 0
    %2644 = vmatprep.subr.bf16.mxu0 0
    %2645 = vmatpush2.bf16.msra.mxu0 0
    %2646 = vmatprep.subr.bf16.mxu0 0
    %2647 = vmatpush2.bf16.msra.mxu0 0
    %2648 = vmatprep.subr.bf16.mxu0 0
    %2649 = vmatpush2.bf16.msra.mxu0 0
    %2650 = vmatprep.subr.bf16.mxu0 0
    %2651 = vmatpush2.bf16.msra.mxu0 0
    %2652 = vmatprep.subr.bf16.mxu0 0
    %2653 = vmatpush2.bf16.msra.mxu0 0
    %2654 = vmatprep.subr.bf16.mxu0 0
    %2655 = vmatpush2.bf16.msra.mxu0 0
    %2656 = vmatprep.subr.bf16.mxu0 0
    %2657 = vmatpush2.bf16.msra.mxu0 0
    %2658 = vmatprep.mubr.bf16.mxu0 0
    %2659 = vmatmul.mubr.bf16.gmra.mxu0 %v2621
    %v2660 = vpop.f32.mrf.mxu0
    %v2661 = vadd.f32 0.0, %v2660
    %v2662 = vpop.f32.mrf.mxu0
    %v2663 = vpop.f32.mrf.mxu0
    %v2664 = vpop.f32.mrf.mxu0
    %2665 = vdwg.mxu0
    %2668 = vrot.lane.b32.xlu0 %v2168, 8
    %v2669 = vpop.permute.xlu0 %2668
    %2670 = vrot.lane.b32.xlu0 %v2217, 8
    %v2671 = vpop.permute.xlu0 %2670
    %2676 = vrot.lane.b32.xlu0 %v2391, 16
    %v2677 = vpop.permute.xlu0 %2676
    %2678 = vrot.lane.b32.xlu0 %v2439, 16
    %v2679 = vpop.permute.xlu0 %2678
    %2684 = vrot.lane.b32.xlu0 %v2613, 24
    %v2685 = vpop.permute.xlu0 %2684
    %2686 = vrot.lane.b32.xlu0 %v2661, 24
    %v2687 = vpop.permute.xlu0 %2686
    %v2690 = vsel %vm329, %v1943, %v2669
    %v2691 = vsel %vm329, %v1989, %v2671
    %v2692 = vsel %vm1239, %v2690, %v2677
    %v2693 = vsel %vm1239, %v2691, %v2679
    %v2694 = vsel %vm1242, %v2692, %v2685
    %v2695 = vsel %vm1242, %v2693, %v2687
    %v2696 = vpack.c.bf16 %v2695, %v2694
    %s2697 = scalar_lea.vmem %s9, 16
    %v2698 = vld [vmem:[%s2697] sm:$0xf]
    %v2699 = vld [vmem:[%s2697 + $0x4] sm:$0xf]
    %v2700 = vld [vmem:[%s2697 + $0x8] sm:$0xf]
    %v2701 = vld [vmem:[%s2697 + $0xc] sm:$0xf]
    %s2702 = scalar_lea.vmem %s10, 1
    %v2703 = vld [vmem:[%s2702] sm:$0x1]
    %v2705 = vlaneseq
    %v2706 = vshrl.u32 %v2705, 7
    %v2707 = vsub.s32 0, %v2706
    %v2708 = vrot.slane %v2703, %v2707
    %v2714 = vunpack.c.l.b16 %v2698
    %v2715 = vunpack.c.l.b16 %v2699
    %v2716 = vunpack.c.l.b16 %v2700
    %v2717 = vunpack.c.l.b16 %v2701
    %v2718 = vpack.c.b16 %v2715, %v2714
    %v2719 = vpack.c.b16 %v2717, %v2716
    %v2723 = vsel %vm83, %v2696, 0
    %2725 = vmatprep.subr.bf16.mxu0 0
    %2726 = vmatpush1.bf16.msra.mxu0 0
    %2727 = vmatprep.subr.bf16.mxu0 0
    %2728 = vmatpush1.bf16.msra.mxu0 0
    %2729 = vmatprep.subr.bf16.mxu0 0
    %2730 = vmatpush1.bf16.msra.mxu0 0
    %2731 = vmatprep.subr.bf16.mxu0 0
    %2732 = vmatpush1.bf16.msra.mxu0 0
    %2733 = vmatprep.subr.bf16.mxu0 0
    %2734 = vmatpush1.bf16.msra.mxu0 0
    %2735 = vmatprep.subr.bf16.mxu0 0
    %2736 = vmatpush1.bf16.msra.mxu0 0
    %2737 = vmatprep.subr.bf16.mxu0 0
    %2738 = vmatpush1.bf16.msra.mxu0 %v2719
    %2739 = vmatprep.subr.bf16.mxu0 0
    %2740 = vmatpush1.bf16.msra.mxu0 %v2718
    %2741 = vmatprep.subr.bf16.mxu0 0
    %2742 = vmatpush2.bf16.msra.mxu0 0
    %2743 = vmatprep.subr.bf16.mxu0 0
    %2744 = vmatpush2.bf16.msra.mxu0 0
    %2745 = vmatprep.subr.bf16.mxu0 0
    %2746 = vmatpush2.bf16.msra.mxu0 0
    %2747 = vmatprep.subr.bf16.mxu0 0
    %2748 = vmatpush2.bf16.msra.mxu0 0
    %2749 = vmatprep.subr.bf16.mxu0 0
    %2750 = vmatpush2.bf16.msra.mxu0 0
    %2751 = vmatprep.subr.bf16.mxu0 0
    %2752 = vmatpush2.bf16.msra.mxu0 0
    %2753 = vmatprep.subr.bf16.mxu0 0
    %2754 = vmatpush2.bf16.msra.mxu0 0
    %2755 = vmatprep.subr.bf16.mxu0 0
    %2756 = vmatpush2.bf16.msra.mxu0 0
    %2757 = vmatprep.mubr.bf16.mxu0 0
    %2758 = vmatmul.mubr.bf16.gmra.mxu0 %v2723
    %v2759 = vpop.f32.mrf.mxu0
    %v2760 = vadd.f32 %v2708, %v2759
    %v2761 = vpop.f32.mrf.mxu0
    %v2762 = vpop.f32.mrf.mxu0
    %v2763 = vadd.f32 %v2708, %v2762
    %v2764 = vpop.f32.mrf.mxu0
    %2765 = vdwg.mxu0
    %v2766 = vadd.f32 %v2760, %v1574
    %v2767 = vadd.f32 %v2763, %v1575
    %s2768 = scalar_lea.vmem %s11, 1
    %v2769 = vld [vmem:[%s2768] sm:$0x1]
    %s2770 = scalar_lea.vmem %s12, 1
    %v2771 = vld [vmem:[%s2770] sm:$0x1]
    %v2772 = vsel %vm83, %v2766, 0.0
    %2773 = vadd.xlane.f32.xlu0 %v2772
    %v2774 = vpop.xlane.xlu0 %2773
    %v2775 = vsel %vm83, %v2767, 0.0
    %2776 = vadd.xlane.f32.xlu0 %v2775
    %v2777 = vpop.xlane.xlu0 %2776
    %v2778 = vmul.f32 %v2774, %v90
    %v2779 = vmul.f32 %v2777, %v90
    %v2780 = vsub.f32 %v2766, %v2778
    %v2781 = vsub.f32 %v2767, %v2779
    %v2782 = vmul.f32 %v2780, %v2780
    %v2783 = vmul.f32 %v2781, %v2781
    %v2784 = vsel %vm83, %v2782, 0.0
    %2785 = vadd.xlane.f32.xlu0 %v2784
    %v2786 = vpop.xlane.xlu0 %2785
    %v2787 = vsel %vm83, %v2783, 0.0
    %2788 = vadd.xlane.f32.xlu0 %v2787
    %v2789 = vpop.xlane.xlu0 %2788
    %v2790 = vmul.f32 %v2786, %v90
    %v2791 = vmul.f32 %v2789, %v90
    %v2792 = vadd.f32 %v2790, 1e-12
    %v2793 = vadd.f32 %v2791, 1e-12
    %v2794 = vrsqrt.pop %v2792
    %v2795 = vrsqrt.pop %v2793
    %v2796 = vmul.f32 %v2780, %v2794
    %v2797 = vmul.f32 %v2781, %v2795
    %v2799 = vlaneseq
    %v2800 = vshrl.u32 %v2799, 7
    %v2801 = vsub.s32 0, %v2800
    %v2802 = vrot.slane %v2769, %v2801
    %v2804 = vmul.f32 %v2796, %v2802
    %v2805 = vmul.f32 %v2797, %v2802
    %v2807 = vlaneseq
    %v2808 = vshrl.u32 %v2807, 7
    %v2809 = vsub.s32 0, %v2808
    %v2810 = vrot.slane %v2771, %v2809
    %v2812 = vadd.f32 %v2804, %v2810
    %v2813 = vadd.f32 %v2805, %v2810
    %v2814 = vpack.c.bf16 %v2813, %v2812
    %s2815 = scalar_lea.vmem %s13, 16
    %v2816 = vld [vmem:[%s2815] sm:$0xf]
    %v2817 = vld [vmem:[%s2815 + $0x4] sm:$0xf]
    %v2818 = vld [vmem:[%s2815 + $0x8] sm:$0xf]
    %v2819 = vld [vmem:[%s2815 + $0xc] sm:$0xf]
    %s2820 = scalar_lea.vmem %s14, 1
    %v2821 = vld [vmem:[%s2820] sm:$0x1]
    %v2823 = vlaneseq
    %v2824 = vshrl.u32 %v2823, 7
    %v2825 = vsub.s32 0, %v2824
    %v2826 = vrot.slane %v2821, %v2825
    %v2832 = vunpack.c.l.b16 %v2816
    %v2833 = vunpack.c.l.b16 %v2817
    %v2834 = vunpack.c.l.b16 %v2818
    %v2835 = vunpack.c.l.b16 %v2819
    %v2836 = vpack.c.b16 %v2833, %v2832
    %v2837 = vpack.c.b16 %v2835, %v2834
    %v2841 = vsel %vm83, %v2814, 0
    %2843 = vmatprep.subr.bf16.mxu0 0
    %2844 = vmatpush1.bf16.msra.mxu0 0
    %2845 = vmatprep.subr.bf16.mxu0 0
    %2846 = vmatpush1.bf16.msra.mxu0 0
    %2847 = vmatprep.subr.bf16.mxu0 0
    %2848 = vmatpush1.bf16.msra.mxu0 0
    %2849 = vmatprep.subr.bf16.mxu0 0
    %2850 = vmatpush1.bf16.msra.mxu0 0
    %2851 = vmatprep.subr.bf16.mxu0 0
    %2852 = vmatpush1.bf16.msra.mxu0 0
    %2853 = vmatprep.subr.bf16.mxu0 0
    %2854 = vmatpush1.bf16.msra.mxu0 0
    %2855 = vmatprep.subr.bf16.mxu0 0
    %2856 = vmatpush1.bf16.msra.mxu0 %v2837
    %2857 = vmatprep.subr.bf16.mxu0 0
    %2858 = vmatpush1.bf16.msra.mxu0 %v2836
    %2859 = vmatprep.subr.bf16.mxu0 0
    %2860 = vmatpush2.bf16.msra.mxu0 0
    %2861 = vmatprep.subr.bf16.mxu0 0
    %2862 = vmatpush2.bf16.msra.mxu0 0
    %2863 = vmatprep.subr.bf16.mxu0 0
    %2864 = vmatpush2.bf16.msra.mxu0 0
    %2865 = vmatprep.subr.bf16.mxu0 0
    %2866 = vmatpush2.bf16.msra.mxu0 0
    %2867 = vmatprep.subr.bf16.mxu0 0
    %2868 = vmatpush2.bf16.msra.mxu0 0
    %2869 = vmatprep.subr.bf16.mxu0 0
    %2870 = vmatpush2.bf16.msra.mxu0 0
    %2871 = vmatprep.subr.bf16.mxu0 0
    %2872 = vmatpush2.bf16.msra.mxu0 0
    %2873 = vmatprep.subr.bf16.mxu0 0
    %2874 = vmatpush2.bf16.msra.mxu0 0
    %2875 = vmatprep.mubr.bf16.mxu0 0
    %2876 = vmatmul.mubr.bf16.gmra.mxu0 %v2841
    %v2877 = vpop.f32.mrf.mxu0
    %v2878 = vadd.f32 %v2826, %v2877
    %v2879 = vpop.f32.mrf.mxu0
    %v2880 = vpop.f32.mrf.mxu0
    %v2881 = vadd.f32 %v2826, %v2880
    %v2882 = vpop.f32.mrf.mxu0
    %2883 = vdwg.mxu0
    %v2884 = vmul.f32 %v2878, 0.5
    %v2885 = vmul.f32 %v2881, 0.5
    %v2886 = vmul.f32 %v2878, 0.044715
    %v2887 = vmul.f32 %v2881, 0.044715
    %v2888 = vmul.f32 %v2886, %v2878
    %v2889 = vmul.f32 %v2887, %v2881
    %v2890 = vmul.f32 %v2888, %v2878
    %v2891 = vmul.f32 %v2889, %v2881
    %v2892 = vadd.f32 %v2878, %v2890
    %v2893 = vadd.f32 %v2881, %v2891
    %v2894 = vmul.f32 %v2892, 0.7978846
    %v2895 = vmul.f32 %v2893, 0.7978846
    %v2896 = vtanh.pop %v2894
    %v2897 = vtanh.pop %v2895
    %v2898 = vadd.f32 %v2896, 1.0
    %v2899 = vadd.f32 %v2897, 1.0
    %v2900 = vmul.f32 %v2884, %v2898
    %v2901 = vmul.f32 %v2885, %v2899
    %v2902 = vpack.c.bf16 %v2901, %v2900
    %s2903 = scalar_lea.vmem %s15, 32
    %v2904 = vld [vmem:[%s2903] sm:$0xf]
    %v2905 = vld [vmem:[%s2903 + $0x4] sm:$0xf]
    %v2906 = vld [vmem:[%s2903 + $0x8] sm:$0xf]
    %v2907 = vld [vmem:[%s2903 + $0xc] sm:$0xf]
    %v2908 = vld [vmem:[%s2903 + $0x10] sm:$0xf]
    %v2909 = vld [vmem:[%s2903 + $0x14] sm:$0xf]
    %v2910 = vld [vmem:[%s2903 + $0x18] sm:$0xf]
    %v2911 = vld [vmem:[%s2903 + $0x1c] sm:$0xf]
    %s2912 = scalar_lea.vmem %s16, 1
    %v2913 = vld [vmem:[%s2912] sm:$0x1]
    %v2915 = vlaneseq
    %v2916 = vshrl.u32 %v2915, 7
    %v2917 = vsub.s32 0, %v2916
    %v2918 = vrot.slane %v2913, %v2917
    %v2928 = vunpack.c.l.b16 %v2904
    %v2929 = vunpack.c.l.b16 %v2905
    %v2930 = vunpack.c.l.b16 %v2906
    %v2931 = vunpack.c.l.b16 %v2907
    %v2932 = vunpack.c.l.b16 %v2908
    %v2933 = vunpack.c.l.b16 %v2909
    %v2934 = vunpack.c.l.b16 %v2910
    %v2935 = vunpack.c.l.b16 %v2911
    %v2936 = vpack.c.b16 %v2929, %v2928
    %v2937 = vpack.c.b16 %v2931, %v2930
    %v2938 = vpack.c.b16 %v2933, %v2932
    %v2939 = vpack.c.b16 %v2935, %v2934
    %v2945 = vsel %vm1485, %v2902, 0
    %2947 = vmatprep.subr.bf16.mxu0 0
    %2948 = vmatpush1.bf16.msra.mxu0 0
    %2949 = vmatprep.subr.bf16.mxu0 0
    %2950 = vmatpush1.bf16.msra.mxu0 0
    %2951 = vmatprep.subr.bf16.mxu0 0
    %2952 = vmatpush1.bf16.msra.mxu0 0
    %2953 = vmatprep.subr.bf16.mxu0 0
    %2954 = vmatpush1.bf16.msra.mxu0 0
    %2955 = vmatprep.subr.bf16.mxu0 0
    %2956 = vmatpush1.bf16.msra.mxu0 %v2939
    %2957 = vmatprep.subr.bf16.mxu0 0
    %2958 = vmatpush1.bf16.msra.mxu0 %v2938
    %2959 = vmatprep.subr.bf16.mxu0 0
    %2960 = vmatpush1.bf16.msra.mxu0 %v2937
    %2961 = vmatprep.subr.bf16.mxu0 0
    %2962 = vmatpush1.bf16.msra.mxu0 %v2936
    %2963 = vmatprep.subr.bf16.mxu0 0
    %2964 = vmatpush2.bf16.msra.mxu0 0
    %2965 = vmatprep.subr.bf16.mxu0 0
    %2966 = vmatpush2.bf16.msra.mxu0 0
    %2967 = vmatprep.subr.bf16.mxu0 0
    %2968 = vmatpush2.bf16.msra.mxu0 0
    %2969 = vmatprep.subr.bf16.mxu0 0
    %2970 = vmatpush2.bf16.msra.mxu0 0
    %2971 = vmatprep.subr.bf16.mxu0 0
    %2972 = vmatpush2.bf16.msra.mxu0 0
    %2973 = vmatprep.subr.bf16.mxu0 0
    %2974 = vmatpush2.bf16.msra.mxu0 0
    %2975 = vmatprep.subr.bf16.mxu0 0
    %2976 = vmatpush2.bf16.msra.mxu0 0
    %2977 = vmatprep.subr.bf16.mxu0 0
    %2978 = vmatpush2.bf16.msra.mxu0 0
    %2979 = vmatprep.mubr.bf16.mxu0 0
    %2980 = vmatmul.mubr.bf16.gmra.mxu0 %v2945
    %v2981 = vpop.f32.mrf.mxu0
    %v2982 = vadd.f32 %v2918, %v2981
    %v2983 = vpop.f32.mrf.mxu0
    %v2984 = vpop.f32.mrf.mxu0
    %v2985 = vadd.f32 %v2918, %v2984
    %v2986 = vpop.f32.mrf.mxu0
    %2987 = vdwg.mxu0
    %v2988 = vadd.f32 %v2982, %v2812
    %v2989 = vadd.f32 %v2985, %v2813
    %s2990 = scalar_lea.vmem %s17, 1
    %v2991 = vld [vmem:[%s2990] sm:$0x1]
    %s2992 = scalar_lea.vmem %s18, 1
    %v2993 = vld [vmem:[%s2992] sm:$0x1]
    %v2994 = vsel %vm83, %v2988, 0.0
    %2995 = vadd.xlane.f32.xlu0 %v2994
    %v2996 = vpop.xlane.xlu0 %2995
    %v2997 = vsel %vm83, %v2989, 0.0
    %2998 = vadd.xlane.f32.xlu0 %v2997
    %v2999 = vpop.xlane.xlu0 %2998
    %v3000 = vmul.f32 %v2996, %v90
    %v3001 = vmul.f32 %v2999, %v90
    %v3002 = vsub.f32 %v2988, %v3000
    %v3003 = vsub.f32 %v2989, %v3001
    %v3004 = vmul.f32 %v3002, %v3002
    %v3005 = vmul.f32 %v3003, %v3003
    %v3006 = vsel %vm83, %v3004, 0.0
    %3007 = vadd.xlane.f32.xlu0 %v3006
    %v3008 = vpop.xlane.xlu0 %3007
    %v3009 = vsel %vm83, %v3005, 0.0
    %3010 = vadd.xlane.f32.xlu0 %v3009
    %v3011 = vpop.xlane.xlu0 %3010
    %v3012 = vmul.f32 %v3008, %v90
    %v3013 = vmul.f32 %v3011, %v90
    %v3014 = vadd.f32 %v3012, 1e-12
    %v3015 = vadd.f32 %v3013, 1e-12
    %v3016 = vrsqrt.pop %v3014
    %v3017 = vrsqrt.pop %v3015
    %v3018 = vmul.f32 %v3002, %v3016
    %v3019 = vmul.f32 %v3003, %v3017
    %v3021 = vlaneseq
    %v3022 = vshrl.u32 %v3021, 7
    %v3023 = vsub.s32 0, %v3022
    %v3024 = vrot.slane %v2991, %v3023
    %v3026 = vmul.f32 %v3018, %v3024
    %v3027 = vmul.f32 %v3019, %v3024
    %v3029 = vlaneseq
    %v3030 = vshrl.u32 %v3029, 7
    %v3031 = vsub.s32 0, %v3030
    %v3032 = vrot.slane %v2993, %v3031
    %v3034 = vadd.f32 %v3026, %v3032
    %v3035 = vadd.f32 %v3027, %v3032
    %v3036 = vpack.c.bf16 %v3034, %v3034
    %v3037 = vpack.c.bf16 %v3035, %v3035
    %v3038 = vld [vmem:[%s19] sm:$0xf]
    %v3039 = vld [vmem:[%s19 + $0x4] sm:$0xf]
    %v3040 = vld [vmem:[%s19 + $0x8] sm:$0xf]
    %v3041 = vld [vmem:[%s19 + $0xc] sm:$0xf]
    %v3042 = vld [vmem:[%s20] sm:$0x1]
    %v3044 = vlaneseq
    %v3045 = vshrl.u32 %v3044, 7
    %v3046 = vsub.s32 0, %v3045
    %v3047 = vrot.slane %v3042, %v3046
    %v3051 = vunpack.c.l.b16 %v3036
    %v3052 = vunpack.c.l.b16 %v3037
    %v3053 = vrot.slane %v3052, 7
    %vm3054 = vcmask 1041409
    %v3055 = vsel %vm3054, %v3053, %v3051
    %v3056 = vpack.c.b16 %v3055, %v3055
    %v3061 = vunpack.c.l.b16 %v3038
    %v3062 = vunpack.c.l.b16 %v3039
    %v3063 = vunpack.c.l.b16 %v3040
    %v3064 = vunpack.c.l.b16 %v3041
    %v3065 = vpack.c.b16 %v3062, %v3061
    %v3066 = vpack.c.b16 %v3064, %v3063
    %v3070 = vsel %vm83, %v3056, 0
    %3072 = vmatprep.subr.bf16.mxu0 0
    %3073 = vmatpush1.bf16.msra.mxu0 0
    %3074 = vmatprep.subr.bf16.mxu0 0
    %3075 = vmatpush1.bf16.msra.mxu0 0
    %3076 = vmatprep.subr.bf16.mxu0 0
    %3077 = vmatpush1.bf16.msra.mxu0 0
    %3078 = vmatprep.subr.bf16.mxu0 0
    %3079 = vmatpush1.bf16.msra.mxu0 0
    %3080 = vmatprep.subr.bf16.mxu0 0
    %3081 = vmatpush1.bf16.msra.mxu0 0
    %3082 = vmatprep.subr.bf16.mxu0 0
    %3083 = vmatpush1.bf16.msra.mxu0 0
    %3084 = vmatprep.subr.bf16.mxu0 0
    %3085 = vmatpush1.bf16.msra.mxu0 %v3066
    %3086 = vmatprep.subr.bf16.mxu0 0
    %3087 = vmatpush1.bf16.msra.mxu0 %v3065
    %3088 = vmatprep.subr.bf16.mxu0 0
    %3089 = vmatpush2.bf16.msra.mxu0 0
    %3090 = vmatprep.subr.bf16.mxu0 0
    %3091 = vmatpush2.bf16.msra.mxu0 0
    %3092 = vmatprep.subr.bf16.mxu0 0
    %3093 = vmatpush2.bf16.msra.mxu0 0
    %3094 = vmatprep.subr.bf16.mxu0 0
    %3095 = vmatpush2.bf16.msra.mxu0 0
    %3096 = vmatprep.subr.bf16.mxu0 0
    %3097 = vmatpush2.bf16.msra.mxu0 0
    %3098 = vmatprep.subr.bf16.mxu0 0
    %3099 = vmatpush2.bf16.msra.mxu0 0
    %3100 = vmatprep.subr.bf16.mxu0 0
    %3101 = vmatpush2.bf16.msra.mxu0 0
    %3102 = vmatprep.subr.bf16.mxu0 0
    %3103 = vmatpush2.bf16.msra.mxu0 0
    %3104 = vmatprep.mubr.bf16.mxu0 0
    %3105 = vmatmul.mubr.bf16.gmra.mxu0 %v3070
    %v3106 = vpop.f32.mrf.mxu0
    %v3107 = vadd.f32 %v3047, %v3106
    %v3108 = vpop.f32.mrf.mxu0
    %v3109 = vpop.f32.mrf.mxu0
    %v3110 = vpop.f32.mrf.mxu0
    %3111 = vdwg.mxu0
    %v3112 = vtanh.pop %v3107
    %v3113 = vpack.c.bf16 %v3112, %v3112
    %v3114 = vld [vmem:[%s21] sm:$0xf]
    %v3115 = vld [vmem:[%s21 + $0x4] sm:$0xf]
    %v3116 = vld [vmem:[%s21 + $0x8] sm:$0xf]
    %v3117 = vld [vmem:[%s21 + $0xc] sm:$0xf]
    %v3118 = vld [vmem:[%s22] sm:$0x1]
    %v3120 = vlaneseq
    %v3121 = vshrl.u32 %v3120, 7
    %v3122 = vsub.s32 0, %v3121
    %v3123 = vrot.slane %v3118, %v3122
    %v3129 = vunpack.c.l.b16 %v3114
    %v3130 = vunpack.c.l.b16 %v3115
    %v3131 = vunpack.c.l.b16 %v3116
    %v3132 = vunpack.c.l.b16 %v3117
    %v3133 = vpack.c.b16 %v3130, %v3129
    %v3134 = vpack.c.b16 %v3132, %v3131
    %v3138 = vsel %vm83, %v3113, 0
    %3140 = vmatprep.subr.bf16.mxu0 0
    %3141 = vmatpush1.bf16.msra.mxu0 0
    %3142 = vmatprep.subr.bf16.mxu0 0
    %3143 = vmatpush1.bf16.msra.mxu0 0
    %3144 = vmatprep.subr.bf16.mxu0 0
    %3145 = vmatpush1.bf16.msra.mxu0 0
    %3146 = vmatprep.subr.bf16.mxu0 0
    %3147 = vmatpush1.bf16.msra.mxu0 0
    %3148 = vmatprep.subr.bf16.mxu0 0
    %3149 = vmatpush1.bf16.msra.mxu0 0
    %3150 = vmatprep.subr.bf16.mxu0 0
    %3151 = vmatpush1.bf16.msra.mxu0 0
    %3152 = vmatprep.subr.bf16.mxu0 0
    %3153 = vmatpush1.bf16.msra.mxu0 %v3134
    %3154 = vmatprep.subr.bf16.mxu0 0
    %3155 = vmatpush1.bf16.msra.mxu0 %v3133
    %3156 = vmatprep.subr.bf16.mxu0 0
    %3157 = vmatpush2.bf16.msra.mxu0 0
    %3158 = vmatprep.subr.bf16.mxu0 0
    %3159 = vmatpush2.bf16.msra.mxu0 0
    %3160 = vmatprep.subr.bf16.mxu0 0
    %3161 = vmatpush2.bf16.msra.mxu0 0
    %3162 = vmatprep.subr.bf16.mxu0 0
    %3163 = vmatpush2.bf16.msra.mxu0 0
    %3164 = vmatprep.subr.bf16.mxu0 0
    %3165 = vmatpush2.bf16.msra.mxu0 0
    %3166 = vmatprep.subr.bf16.mxu0 0
    %3167 = vmatpush2.bf16.msra.mxu0 0
    %3168 = vmatprep.subr.bf16.mxu0 0
    %3169 = vmatpush2.bf16.msra.mxu0 0
    %3170 = vmatprep.subr.bf16.mxu0 0
    %3171 = vmatpush2.bf16.msra.mxu0 0
    %3172 = vmatprep.mubr.bf16.mxu0 0
    %3173 = vmatmul.mubr.bf16.gmra.mxu0 %v3138
    %v3174 = vpop.f32.mrf.mxu0
    %v3175 = vadd.f32 %v3123, %v3174
    %v3176 = vpop.f32.mrf.mxu0
    %v3177 = vpop.f32.mrf.mxu0
    %v3178 = vpop.f32.mrf.mxu0
    %3179 = vdwg.mxu0
    %vm3180 = vcmask 9216
    %v3181 = vsel %vm3180, %v3175, -inf
    %3182 = vmax.xlane.f32.xlu0 %v3181
    %v3183 = vpop.xlane.xlu0 %3182
    %v3184 = vsub.f32 %v3175, %v3183
    %v3185 = vmul.f32 %v3184, 1.442695
    %v3186 = vpow.pop %v3185
    %v3187 = vsel %vm3180, %v3186, 0.0
    %3188 = vadd.xlane.f32.xlu0 %v3187
    %v3189 = vpop.xlane.xlu0 %3188
    %v3190 = vlog2.pop %v3189
    %v3191 = vmul.f32 %v3190, 0.6931472
    %v3192 = vadd.f32 %v3191, %v3183
    %v3193 = vld [vmem:[%s23] sm:$0x3]
    %v3194 = vmul.f32 %v3193, %v3175
    %v3195 = vsel %vm3180, %v3194, 0.0
    %3196 = vadd.xlane.f32.xlu0 %v3195
    %v3197 = vpop.xlane.xlu0 %3196
    %v3198 = vsub.f32 %v3192, %v3197
    %vm3199 = vcmask 1041408
    %v3200 = vsel %vm3199, %v3198, 0.0
    %v3201 = vrot.slane %v3200, 4
    %v3202 = vadd.f32 %v3200, %v3201
    %v3203 = vrot.slane %v3202, 2
    %v3204 = vadd.f32 %v3202, %v3203
    %v3205 = vrot.slane %v3204, 1
    %v3206 = vadd.f32 %v3204, %v3205
    %v3207 = vmul.f32 %v3206, 0.5
    %vm3208 = vcmask 0
    %3209 = vst.msk [vmem:[#allocation2] sm:$0x1] %vm3208, %v3207
    // Predicated region
    $region98: #{bert_forward.1} parent=1 // pred_check
      _
    $region99: #{bert_forward.1} parent=1 // pred_check_branch
      %3211 = sbr.rel (0) target = $region101
    $region100: #{bert_forward.1} parent=1 // pred_region
      %s3213 = ssub.s32 16, 16
      %3214 = vsyncadd [#allocation3], %s3213
      %s3216 = sshll.u32 [#allocation2], 4
      %s3217 = int_to_ptr.vmem [resolvable:$true] %s3216
      %3219 = dma.vmem_to_hbm [thread:$0]  %s3217, 16, %s24, [#allocation3]
    $region101: #{bert_forward.1} parent=1 // pred_fallthru
      _
    // Predicated region
    $region102: #{bert_forward.1} parent=1 // pred_check
      _
    $region103: #{bert_forward.1} parent=1 // pred_check_branch
      %3221 = sbr.rel (0) target = $region105
    $region104: #{bert_forward.1} parent=1 // pred_region
      %3222 = dma.done [#allocation3], 16
    $region105: #{bert_forward.1} parent=1 // pred_fallthru
      _
    %3223 = vsyncpa [#allocation3], 1

</llo_original>
